<compile_context>
chip_gen: v6e
topology: v6e:2x2x1
jax: 0.10.0
libtpu: 0.0.40
codegen_flags: <defaults>
</compile_context>

<pallas_src>
import jax
import jax.numpy as jnp
from jax import lax
from jax.experimental import pallas as pl
from jax.experimental.pallas import tpu as pltpu

FEATURE_DIM = 512
NUM_CLASSES = 2
QKV_DIM = 3 * FEATURE_DIM          # 1536 = [wq | wk | wv]
Z_DIM = 6 * FEATURE_DIM            # 3072 = [txt | img | fused(2F) | attn_ti | attn_it]
NUM_HEAD_COLS = 8                  # txt_out(2) | img_out(2) | meta(2) | pad(2)


def adapter_kernel(txt_ref, img_ref, fused_ref,
                   w_qkv_ref, b_qkv_ref,
                   w_heads_ref, b_heads_ref,
                   out_ref):
    F = FEATURE_DIM
    B = txt_ref.shape[0]

    # Cast each segment to bf16 BEFORE concatenation (halves concat bytes).
    txt_bf = txt_ref[...].astype(jnp.bfloat16)
    img_bf = img_ref[...].astype(jnp.bfloat16)
    fused_bf = fused_ref[...].astype(jnp.bfloat16)

    # --- fused q/k/v projection for both attention directions ---------------
    x2 = jnp.concatenate([txt_bf, img_bf], axis=0)                       # [2B, F] bf16
    qkv = jnp.dot(x2, w_qkv_ref[...],
                  preferred_element_type=jnp.float32) + b_qkv_ref[...]   # [2B, 3F] f32

    q_txt, q_img = qkv[:B, 0:F],           qkv[B:, 0:F]
    k_txt, k_img = qkv[:B, F:2 * F],       qkv[B:, F:2 * F]
    v_txt, v_img = qkv[:B, 2 * F:3 * F],   qkv[B:, 2 * F:3 * F]

    def attention(q, k, v):
        # scores = q @ k^T, softmax over keys.  bf16 MXU operands, f32 acc;
        # softmax math stays f32 (v5e has no bf16 VPU/EUP path).
        s = lax.dot_general(q.astype(jnp.bfloat16), k.astype(jnp.bfloat16),
                            (((1,), (1,)), ((), ())),
                            preferred_element_type=jnp.float32)          # [B, B]
        s = s - jnp.max(s, axis=-1, keepdims=True)
        e = jnp.exp(s)
        p = e * pl.reciprocal(jnp.sum(e, axis=-1, keepdims=True), approx=True)
        return jnp.dot(p.astype(jnp.bfloat16), v.astype(jnp.bfloat16),
                       preferred_element_type=jnp.float32)               # [B, F] f32

    attn_ti = attention(q_txt, k_img, v_img)   # CrossAttention(txt, img)
    attn_it = attention(q_img, k_txt, v_txt)   # CrossAttention(img, txt)

    # --- single output-head matmul: txt_out | img_out | meta_out ------------
    z = jnp.concatenate([txt_bf, img_bf, fused_bf,
                         attn_ti.astype(jnp.bfloat16),
                         attn_it.astype(jnp.bfloat16)], axis=1)          # [B, 6F] bf16
    heads = lax.dot_general(z, w_heads_ref[...], (((1,), (1,)), ((), ())),
                            preferred_element_type=jnp.float32)          # [B, 8]
    out_ref[...] = heads + b_heads_ref[...]


def init_linear(key, in_f, out_f):
    """PyTorch-style uniform(-1/sqrt(in), 1/sqrt(in)); W stored as [in, out]."""
    kw, kb = jax.random.split(key)
    bound = 1.0 / (in_f ** 0.5)
    w = jax.random.uniform(kw, (in_f, out_f), jnp.float32, -bound, bound)
    b = jax.random.uniform(kb, (1, out_f), jnp.float32, -bound, bound)
    return w, b


def make_params(key):
    keys = jax.random.split(key, 8)
    p = {}
    p["w_fc"],    p["b_fc"]    = init_linear(keys[0], 2 * FEATURE_DIM, NUM_CLASSES)
    p["w_txt"],   p["b_txt"]   = init_linear(keys[1], FEATURE_DIM, NUM_CLASSES)
    p["w_img"],   p["b_img"]   = init_linear(keys[2], FEATURE_DIM, NUM_CLASSES)
    p["wq"],      p["bq"]      = init_linear(keys[3], FEATURE_DIM, FEATURE_DIM)
    p["wk"],      p["bk"]      = init_linear(keys[4], FEATURE_DIM, FEATURE_DIM)
    p["wv"],      p["bv"]      = init_linear(keys[5], FEATURE_DIM, FEATURE_DIM)
    p["w_cross"], p["b_cross"] = init_linear(keys[6], FEATURE_DIM, NUM_CLASSES)
    p["w_meta"],  p["b_meta"]  = init_linear(keys[7], 5 * NUM_CLASSES, NUM_CLASSES)
    return p


def pack_params(p):
    """One-time packing of Adapter_V1 weights into the kernel's bf16 slabs."""
    F = FEATURE_DIM

    # Fused q/k/v slab.
    w_qkv = jnp.concatenate([p["wq"], p["wk"], p["wv"]], axis=1).astype(jnp.bfloat16)
    b_qkv = jnp.concatenate([p["bq"], p["bk"], p["bv"]], axis=1)             # [1,1536] f32

    # fc_meta row-blocks in the torch concat order:
    # (txt_out, img_out, fused_out, it_attn_out, ti_attn_out).
    wm = p["w_meta"]                                                         # [10, 2]
    wm_txt, wm_img, wm_fc, wm_it, wm_ti = (wm[2 * i:2 * i + 2] for i in range(5))

    # Output-head columns over Z = [txt | img | fused | attn_ti | attn_it].
    def zeros(n):
        return jnp.zeros((n, NUM_CLASSES), jnp.float32)

    col_txt = jnp.concatenate([p["w_txt"], zeros(Z_DIM - F)], axis=0)
    col_img = jnp.concatenate([zeros(F), p["w_img"], zeros(Z_DIM - 2 * F)], axis=0)
    col_meta = jnp.concatenate([p["w_txt"] @ wm_txt,
                                p["w_img"] @ wm_img,
                                p["w_fc"] @ wm_fc,
                                p["w_cross"] @ wm_ti,     # applied to attn_ti
                                p["w_cross"] @ wm_it],    # applied to attn_it
                               axis=0)
    col_pad = zeros(Z_DIM)
    w_heads = jnp.concatenate([col_txt, col_img, col_meta, col_pad], axis=1)  # [3072, 8]
    # Stored transposed [8, 3072]: lane-dense bf16 HBM slab (~48 KB) instead of a
    # lane-padded [3072, 128] slab.  Do NOT revert (perf-review guard).
    w_heads_t = w_heads.T.astype(jnp.bfloat16)

    b_meta = (p["b_meta"] + p["b_txt"] @ wm_txt + p["b_img"] @ wm_img
              + p["b_fc"] @ wm_fc + p["b_cross"] @ (wm_it + wm_ti))
    b_heads = jnp.concatenate(
        [p["b_txt"], p["b_img"], b_meta, jnp.zeros((1, NUM_CLASSES), jnp.float32)],
        axis=1)                                                               # [1, 8]

    return {"w_qkv": w_qkv, "b_qkv": b_qkv,
            "w_heads_t": w_heads_t, "b_heads": b_heads}


def _cost_estimate(B):
    """Advisory hint: tiny, memory-bound call -> let XLA overlap it."""
    F = FEATURE_DIM
    flops = (2 * (2 * B) * F * QKV_DIM            # fused qkv matmul
             + 2 * (2 * B * B * F)                # q@k^T, both directions
             + 2 * (2 * B * B * F)                # p@v,   both directions
             + 2 * B * Z_DIM * NUM_HEAD_COLS)     # folded head matmul
    bytes_accessed = (F * QKV_DIM * 2             # w_qkv bf16
                      + NUM_HEAD_COLS * Z_DIM * 2  # w_heads_t bf16
                      + (QKV_DIM + NUM_HEAD_COLS) * 4     # biases f32
                      + (2 * B * F + B * 2 * F) * 4       # txt/img/fused f32
                      + B * NUM_HEAD_COLS * 4)            # output f32
    transcendentals = 2 * B * B                   # exp in the two softmaxes
    return pl.CostEstimate(flops=flops,
                           transcendentals=transcendentals,
                           bytes_accessed=bytes_accessed)


@jax.jit
def adapter_v1_forward(packed, txt, img, fused):
    B = txt.shape[0]
    vmem = pl.BlockSpec(memory_space=pltpu.MemorySpace.VMEM)
    out = pl.pallas_call(
        adapter_kernel,
        out_shape=jax.ShapeDtypeStruct((B, NUM_HEAD_COLS), jnp.float32),
        in_specs=[vmem] * 7,
        out_specs=vmem,
        cost_estimate=_cost_estimate(B),
        compiler_params=pltpu.CompilerParams(vmem_limit_bytes=6 * 1024 * 1024),
    )(txt, img, fused,
      packed["w_qkv"], packed["b_qkv"],
      packed["w_heads_t"], packed["b_heads"])
    # Packed lane-dense head -> (txt_out, img_out, meta_out), sliced outside.
    return out[:, 0:2], out[:, 2:4], out[:, 4:6]


def adapter_v1_reference(p, txt, img, fused):
    """Pure-JAX reference mirroring the PyTorch forward exactly."""
    def lin(x, w, b):
        return x @ w + b

    txt_out = lin(txt, p["w_txt"], p["b_txt"])
    img_out = lin(img, p["w_img"], p["b_img"])
    fused_out = lin(fused, p["w_fc"], p["b_fc"])

    def cross(a, b):
        q = lin(a, p["wq"], p["bq"])
        k = lin(b, p["wk"], p["bk"])
        v = lin(b, p["wv"], p["bv"])
        s = jax.nn.softmax(q @ k.T, axis=-1)
        return lin(s @ v, p["w_cross"], p["b_cross"])

    ti = cross(txt, img)
    it = cross(img, txt)
    combined = jnp.concatenate((txt_out, img_out, fused_out, it, ti), axis=1)
    meta_out = lin(combined, p["w_meta"], p["b_meta"])
    return txt_out, img_out, meta_out


if __name__ == "__main__":
    key = jax.random.PRNGKey(0)
    kp, k1, k2, k3 = jax.random.split(key, 4)

    B = 8
    params = make_params(kp)
    txt = jax.random.normal(k1, (B, FEATURE_DIM), jnp.float32)
    img = jax.random.normal(k2, (B, FEATURE_DIM), jnp.float32)
    fused = jax.random.normal(k3, (B, 2 * FEATURE_DIM), jnp.float32)

    packed = pack_params(params)
    outs = adapter_v1_forward(packed, txt, img, fused)
    outs = jax.block_until_ready(outs)

    # Reference uses the same bf16-rounded weights the kernel stores, so the
    # comparison isolates kernel wiring; tolerance is loosened for the
    # remaining bf16 activation casts / approx reciprocal.
    params_bf16 = dict(params)
    for name in ("wq", "wk", "wv", "w_txt", "w_img", "w_fc", "w_cross"):
        params_bf16[name] = params[name].astype(jnp.bfloat16).astype(jnp.float32)
    refs = adapter_v1_reference(params_bf16, txt, img, fused)

    for o, r in zip(outs, refs):
        assert o.shape == r.shape and o.dtype == r.dtype
        assert jnp.allclose(o, r, atol=5e-2, rtol=5e-2), "mismatch vs reference"

    print("KERNEL_OK")
</pallas_src>

<mosaic_0001>
module attributes {stable_mosaic.version = 11 : i64} {
  func.func @adapter_kernel(%arg0: memref<8x512xf32, #tpu.memory_space<vmem>>, %arg1: memref<8x512xf32, #tpu.memory_space<vmem>>, %arg2: memref<8x1024xf32, #tpu.memory_space<vmem>>, %arg3: memref<512x1536xbf16, #tpu.memory_space<vmem>>, %arg4: memref<1x1536xf32, #tpu.memory_space<vmem>>, %arg5: memref<8x3072xbf16, #tpu.memory_space<vmem>>, %arg6: memref<1x8xf32, #tpu.memory_space<vmem>>, %arg7: memref<8x8xf32, #tpu.memory_space<vmem>>) attributes {dimension_semantics = [], scalar_prefetch = 0 : i64, scratch_operands = 0 : i64, tpu.core_type = #tpu.core_type<tc>} {
    %c0 = arith.constant 0 : index
    %c0_0 = arith.constant 0 : index
    %0 = vector.load %arg0[%c0, %c0_0] : memref<8x512xf32, #tpu.memory_space<vmem>>, vector<8x512xf32>
    %1 = arith.truncf %0 : vector<8x512xf32> to vector<8x512xbf16>
    %c0_1 = arith.constant 0 : index
    %c0_2 = arith.constant 0 : index
    %2 = vector.load %arg1[%c0_1, %c0_2] : memref<8x512xf32, #tpu.memory_space<vmem>>, vector<8x512xf32>
    %3 = arith.truncf %2 : vector<8x512xf32> to vector<8x512xbf16>
    %c0_3 = arith.constant 0 : index
    %c0_4 = arith.constant 0 : index
    %4 = vector.load %arg2[%c0_3, %c0_4] : memref<8x1024xf32, #tpu.memory_space<vmem>>, vector<8x1024xf32>
    %5 = arith.truncf %4 : vector<8x1024xf32> to vector<8x1024xbf16>
    %6 = tpu.concatenate %1, %3 in 0 : vector<8x512xbf16>, vector<8x512xbf16> -> vector<16x512xbf16>
    %c0_5 = arith.constant 0 : index
    %c0_6 = arith.constant 0 : index
    %7 = vector.load %arg3[%c0_5, %c0_6] : memref<512x1536xbf16, #tpu.memory_space<vmem>>, vector<512x1536xbf16>
    %cst = arith.constant dense<0.000000e+00> : vector<16x1536xf32>
    %8 = tpu.matmul %6, %7, %cst {dimension_numbers = #tpu.dot_dimension_numbers<[1], [0], [0], [1], [0, 0, 1, 1], [], []>} : vector<16x512xbf16>, vector<512x1536xbf16>, vector<16x1536xf32> -> vector<16x1536xf32>
    %c0_7 = arith.constant 0 : index
    %c0_8 = arith.constant 0 : index
    %9 = vector.load %arg4[%c0_7, %c0_8] : memref<1x1536xf32, #tpu.memory_space<vmem>>, vector<1x1536xf32>
    %10 = vector.broadcast %9 : vector<1x1536xf32> to vector<16x1536xf32>
    %11 = arith.addf %8, %10 : vector<16x1536xf32>
    %12 = vector.extract_strided_slice %11 {offsets = [0, 0], sizes = [8, 512], strides = [1, 1]} : vector<16x1536xf32> to vector<8x512xf32>
    %13 = vector.extract_strided_slice %11 {offsets = [8, 0], sizes = [8, 512], strides = [1, 1]} : vector<16x1536xf32> to vector<8x512xf32>
    %14 = vector.extract_strided_slice %11 {offsets = [0, 512], sizes = [8, 512], strides = [1, 1]} : vector<16x1536xf32> to vector<8x512xf32>
    %15 = vector.extract_strided_slice %11 {offsets = [8, 512], sizes = [8, 512], strides = [1, 1]} : vector<16x1536xf32> to vector<8x512xf32>
    %16 = vector.extract_strided_slice %11 {offsets = [0, 1024], sizes = [8, 512], strides = [1, 1]} : vector<16x1536xf32> to vector<8x512xf32>
    %17 = vector.extract_strided_slice %11 {offsets = [8, 1024], sizes = [8, 512], strides = [1, 1]} : vector<16x1536xf32> to vector<8x512xf32>
    %18 = arith.truncf %12 : vector<8x512xf32> to vector<8x512xbf16>
    %19 = arith.truncf %15 : vector<8x512xf32> to vector<8x512xbf16>
    %cst_9 = arith.constant dense<0.000000e+00> : vector<8x8xf32>
    %20 = tpu.matmul %18, %19, %cst_9 {dimension_numbers = #tpu.dot_dimension_numbers<[1], [1], [0], [0], [0, 0, 1, 0], [], []>} : vector<8x512xbf16>, vector<8x512xbf16>, vector<8x8xf32> -> vector<8x8xf32>
    %cst_10 = arith.constant dense<0xFF800000> : vector<8xf32>
    %21 = vector.multi_reduction <maximumf>, %20, %cst_10 [1] : vector<8x8xf32> to vector<8xf32>
    %22 = vector.shape_cast %21 : vector<8xf32> to vector<8x1xf32>
    %23 = vector.broadcast %22 : vector<8x1xf32> to vector<8x8xf32>
    %24 = arith.subf %20, %23 : vector<8x8xf32>
    %25 = math.exp %24 : vector<8x8xf32>
    %cst_11 = arith.constant dense<0.000000e+00> : vector<8xf32>
    %26 = vector.multi_reduction <add>, %25, %cst_11 [1] : vector<8x8xf32> to vector<8xf32>
    %27 = vector.shape_cast %26 : vector<8xf32> to vector<8x1xf32>
    %28 = tpu.reciprocal %27 {approx = true} : vector<8x1xf32> -> vector<8x1xf32>
    %29 = vector.broadcast %28 : vector<8x1xf32> to vector<8x8xf32>
    %30 = arith.mulf %25, %29 : vector<8x8xf32>
    %31 = arith.truncf %30 : vector<8x8xf32> to vector<8x8xbf16>
    %32 = arith.truncf %17 : vector<8x512xf32> to vector<8x512xbf16>
    %cst_12 = arith.constant dense<0.000000e+00> : vector<8x512xf32>
    %33 = tpu.matmul %31, %32, %cst_12 {dimension_numbers = #tpu.dot_dimension_numbers<[1], [0], [0], [1], [0, 0, 1, 1], [], []>} : vector<8x8xbf16>, vector<8x512xbf16>, vector<8x512xf32> -> vector<8x512xf32>
    %34 = arith.truncf %13 : vector<8x512xf32> to vector<8x512xbf16>
    %35 = arith.truncf %14 : vector<8x512xf32> to vector<8x512xbf16>
    %cst_13 = arith.constant dense<0.000000e+00> : vector<8x8xf32>
    %36 = tpu.matmul %34, %35, %cst_13 {dimension_numbers = #tpu.dot_dimension_numbers<[1], [1], [0], [0], [0, 0, 1, 0], [], []>} : vector<8x512xbf16>, vector<8x512xbf16>, vector<8x8xf32> -> vector<8x8xf32>
    %cst_14 = arith.constant dense<0xFF800000> : vector<8xf32>
    %37 = vector.multi_reduction <maximumf>, %36, %cst_14 [1] : vector<8x8xf32> to vector<8xf32>
    %38 = vector.shape_cast %37 : vector<8xf32> to vector<8x1xf32>
    %39 = vector.broadcast %38 : vector<8x1xf32> to vector<8x8xf32>
    %40 = arith.subf %36, %39 : vector<8x8xf32>
    %41 = math.exp %40 : vector<8x8xf32>
    %cst_15 = arith.constant dense<0.000000e+00> : vector<8xf32>
    %42 = vector.multi_reduction <add>, %41, %cst_15 [1] : vector<8x8xf32> to vector<8xf32>
    %43 = vector.shape_cast %42 : vector<8xf32> to vector<8x1xf32>
    %44 = tpu.reciprocal %43 {approx = true} : vector<8x1xf32> -> vector<8x1xf32>
    %45 = vector.broadcast %44 : vector<8x1xf32> to vector<8x8xf32>
    %46 = arith.mulf %41, %45 : vector<8x8xf32>
    %47 = arith.truncf %46 : vector<8x8xf32> to vector<8x8xbf16>
    %48 = arith.truncf %16 : vector<8x512xf32> to vector<8x512xbf16>
    %cst_16 = arith.constant dense<0.000000e+00> : vector<8x512xf32>
    %49 = tpu.matmul %47, %48, %cst_16 {dimension_numbers = #tpu.dot_dimension_numbers<[1], [0], [0], [1], [0, 0, 1, 1], [], []>} : vector<8x8xbf16>, vector<8x512xbf16>, vector<8x512xf32> -> vector<8x512xf32>
    %50 = arith.truncf %33 : vector<8x512xf32> to vector<8x512xbf16>
    %51 = arith.truncf %49 : vector<8x512xf32> to vector<8x512xbf16>
    %52 = tpu.concatenate %1, %3, %5, %50, %51 in 1 : vector<8x512xbf16>, vector<8x512xbf16>, vector<8x1024xbf16>, vector<8x512xbf16>, vector<8x512xbf16> -> vector<8x3072xbf16>
    %c0_17 = arith.constant 0 : index
    %c0_18 = arith.constant 0 : index
    %53 = vector.load %arg5[%c0_17, %c0_18] : memref<8x3072xbf16, #tpu.memory_space<vmem>>, vector<8x3072xbf16>
    %cst_19 = arith.constant dense<0.000000e+00> : vector<8x8xf32>
    %54 = tpu.matmul %52, %53, %cst_19 {dimension_numbers = #tpu.dot_dimension_numbers<[1], [1], [0], [0], [0, 0, 1, 0], [], []>} : vector<8x3072xbf16>, vector<8x3072xbf16>, vector<8x8xf32> -> vector<8x8xf32>
    %c0_20 = arith.constant 0 : index
    %c0_21 = arith.constant 0 : index
    %55 = vector.load %arg6[%c0_20, %c0_21] : memref<1x8xf32, #tpu.memory_space<vmem>>, vector<1x8xf32>
    %56 = vector.broadcast %55 : vector<1x8xf32> to vector<8x8xf32>
    %57 = arith.addf %54, %56 : vector<8x8xf32>
    %c0_22 = arith.constant 0 : index
    %c0_23 = arith.constant 0 : index
    %58 = vector.load %arg7[%c0_22, %c0_23] : memref<8x8xf32, #tpu.memory_space<vmem>>, vector<8x8xf32>
    tpu.vector_store %arg7[%c0_22, %c0_23], %57 {strides = array<i32>} : memref<8x8xf32, #tpu.memory_space<vmem>>, vector<8x8xf32>,
    return
  }
}

</mosaic_0001>

<llo_original>
// kernel: adapter_v1_forward.1
$region0: #{adapter_v1_forward.1}
  #allocation0 [shape = 'u32[]', space=smem, size = 0x4, offset = 0x4, fixed_abs, tag = 'smem constant byte address 0x4 - core index']
  #allocation1 [shape = 'u32[144,128]{1,0:T(1,128)}', space=vmem, size = 0x12000, scoped, tag = 'internal scratch']
  %s0 = inlined_call_operand.hbm [shape: f32[8,512], index: 0, kind: input, shape index: {}]
  %s1 = inlined_call_operand.hbm [shape: f32[8,512], index: 1, kind: input, shape index: {}]
  %s2 = inlined_call_operand.hbm [shape: f32[8,1024], index: 2, kind: input, shape index: {}]
  %s3 = inlined_call_operand.hbm [shape: bf16[512,1536], index: 3, kind: input, shape index: {}]
  %s4 = inlined_call_operand.hbm [shape: f32[1,1536], index: 4, kind: input, shape index: {}]
  %s5 = inlined_call_operand.hbm [shape: bf16[8,3072], index: 5, kind: input, shape index: {}]
  %s6 = inlined_call_operand.hbm [shape: f32[1,8], index: 6, kind: input, shape index: {}]
  %s7 = inlined_call_operand.vmem [shape: f32[8,8], index: 7, kind: output, shape index: {}]
  %s8 = sld [smem:[#allocation0]]
  $region66: #{adapter_v1_forward.1} parent=0
    _
  %s10 = ssub.s32 1, %s8
  %s11 = scalar_select 0, %s10, %s8
  $region1: #{adapter_v1_forward.1} parent=0
    #allocation2 [shape = 'u8[16384]{0}', space=vmem, size = 0x4000, scoped, tag = 'input window, operand 0, single buffered']
    #allocation3 [shape = 's32[1]{0}', space=sflag, size = 0x4, scoped, tag = 'scoped memory for adapter_v1_forward.1']
    #allocation4 [shape = 'u8[16384]{0}', space=vmem, size = 0x4000, scoped, tag = 'input window, operand 1, single buffered']
    #allocation5 [shape = 's32[1]{0}', space=sflag, size = 0x4, scoped, tag = 'scoped memory for adapter_v1_forward.1']
    #allocation6 [shape = 'u8[32768]{0}', space=vmem, size = 0x8000, scoped, tag = 'input window, operand 2, single buffered']
    #allocation7 [shape = 'u8[1572864]{0}', space=vmem, size = 0x180000, scoped, tag = 'input window, operand 3, single buffered']
    #allocation8 [shape = 's32[1]{0}', space=sflag, size = 0x4, scoped, tag = 'scoped memory for adapter_v1_forward.1']
    #allocation9 [shape = 'u8[6144]{0}', space=vmem, size = 0x1800, scoped, tag = 'input window, operand 4, single buffered']
    #allocation10 [shape = 'u8[49152]{0}', space=vmem, size = 0xc000, scoped, tag = 'input window, operand 5, single buffered']
    #allocation11 [shape = 's32[1]{0}', space=sflag, size = 0x4, scoped, tag = 'scoped memory for adapter_v1_forward.1']
    #allocation12 [shape = 'u8[512]{0}', space=vmem, size = 0x400, scoped, tag = 'input window, operand 6, single buffered']
    %12 = vsyncpa [#allocation3], 0
    %13 = vsyncpa [#allocation5], 0
    %14 = vsyncpa [#allocation8], 0
    %15 = vsyncpa [#allocation11], 0
    // Predicated region
    $region2: #{adapter_v1_forward.1} parent=1 // pred_check
      _
    $region3: #{adapter_v1_forward.1} parent=1 // pred_check_branch
      %17 = sbr.rel (0) target = $region5
    $region4: #{adapter_v1_forward.1} parent=1 // pred_region
      %s19 = ssub.s32 512, 512
      %20 = vsyncadd [#allocation3], %s19
      %s22 = sshll.u32 [#allocation2], 4
      %s23 = int_to_ptr.vmem [resolvable:$true] %s22
      %25 = dma.hbm_to_vmem [thread:$0]  %s0, 512, %s23, [#allocation3]
    $region5: #{adapter_v1_forward.1} parent=1 // pred_fallthru
      _
    // Predicated region
    $region6: #{adapter_v1_forward.1} parent=1 // pred_check
      _
    $region7: #{adapter_v1_forward.1} parent=1 // pred_check_branch
      %27 = sbr.rel (0) target = $region9
    $region8: #{adapter_v1_forward.1} parent=1 // pred_region
      %s29 = ssub.s32 512, 512
      %30 = vsyncadd [#allocation5], %s29
      %s32 = sshll.u32 [#allocation4], 4
      %s33 = int_to_ptr.vmem [resolvable:$true] %s32
      %35 = dma.hbm_to_vmem [thread:$0]  %s1, 512, %s33, [#allocation5]
    $region9: #{adapter_v1_forward.1} parent=1 // pred_fallthru
      _
    // Predicated region
    $region10: #{adapter_v1_forward.1} parent=1 // pred_check
      _
    $region11: #{adapter_v1_forward.1} parent=1 // pred_check_branch
      %37 = sbr.rel (0) target = $region13
    $region12: #{adapter_v1_forward.1} parent=1 // pred_region
      %s39 = ssub.s32 1024, 1024
      %40 = vsyncadd [#allocation5], %s39
      %s42 = sshll.u32 [#allocation6], 4
      %s43 = int_to_ptr.vmem [resolvable:$true] %s42
      %45 = dma.hbm_to_vmem [thread:$0]  %s2, 1024, %s43, [#allocation5]
    $region13: #{adapter_v1_forward.1} parent=1 // pred_fallthru
      _
    // Predicated region
    $region14: #{adapter_v1_forward.1} parent=1 // pred_check
      _
    $region15: #{adapter_v1_forward.1} parent=1 // pred_check_branch
      %47 = sbr.rel (0) target = $region17
    $region16: #{adapter_v1_forward.1} parent=1 // pred_region
      %s49 = ssub.s32 49152, 49152
      %50 = vsyncadd [#allocation8], %s49
      %s51 = sshll.u32 [#allocation7], 4
      %s52 = int_to_ptr.vmem [resolvable:$true] %s51
      %57 = dma.hbm_to_vmem [thread:$0]  %s3, 49152, %s52, [#allocation8], 768, 768, 48
    $region17: #{adapter_v1_forward.1} parent=1 // pred_fallthru
      _
    // Predicated region
    $region18: #{adapter_v1_forward.1} parent=1 // pred_check
      _
    $region19: #{adapter_v1_forward.1} parent=1 // pred_check_branch
      %59 = sbr.rel (0) target = $region21
    $region20: #{adapter_v1_forward.1} parent=1 // pred_region
      %s61 = ssub.s32 192, 192
      %62 = vsyncadd [#allocation8], %s61
      %s64 = sshll.u32 [#allocation9], 4
      %s65 = int_to_ptr.vmem [resolvable:$true] %s64
      %67 = dma.hbm_to_vmem [thread:$0]  %s4, 192, %s65, [#allocation8]
    $region21: #{adapter_v1_forward.1} parent=1 // pred_fallthru
      _
    // Predicated region
    $region22: #{adapter_v1_forward.1} parent=1 // pred_check
      _
    $region23: #{adapter_v1_forward.1} parent=1 // pred_check_branch
      %69 = sbr.rel (0) target = $region25
    $region24: #{adapter_v1_forward.1} parent=1 // pred_region
      %s71 = ssub.s32 1536, 1536
      %72 = vsyncadd [#allocation11], %s71
      %s74 = sshll.u32 [#allocation10], 4
      %s75 = int_to_ptr.vmem [resolvable:$true] %s74
      %77 = dma.hbm_to_vmem [thread:$0]  %s5, 1536, %s75, [#allocation11]
    $region25: #{adapter_v1_forward.1} parent=1 // pred_fallthru
      _
    // Predicated region
    $region26: #{adapter_v1_forward.1} parent=1 // pred_check
      _
    $region27: #{adapter_v1_forward.1} parent=1 // pred_check_branch
      %79 = sbr.rel (0) target = $region29
    $region28: #{adapter_v1_forward.1} parent=1 // pred_region
      %s81 = ssub.s32 16, 16
      %82 = vsyncadd [#allocation11], %s81
      %s84 = sshll.u32 [#allocation12], 4
      %s85 = int_to_ptr.vmem [resolvable:$true] %s84
      %87 = dma.hbm_to_vmem [thread:$0]  %s6, 16, %s85, [#allocation11]
    $region29: #{adapter_v1_forward.1} parent=1 // pred_fallthru
      _
    // Predicated region
    $region30: #{adapter_v1_forward.1} parent=1 // pred_check
      _
    $region31: #{adapter_v1_forward.1} parent=1 // pred_check_branch
      %89 = sbr.rel (0) target = $region33
    $region32: #{adapter_v1_forward.1} parent=1 // pred_region
      %90 = dma.done [#allocation3], 512
    $region33: #{adapter_v1_forward.1} parent=1 // pred_fallthru
      _
    // Predicated region
    $region34: #{adapter_v1_forward.1} parent=1 // pred_check
      _
    $region35: #{adapter_v1_forward.1} parent=1 // pred_check_branch
      %92 = sbr.rel (0) target = $region37
    $region36: #{adapter_v1_forward.1} parent=1 // pred_region
      %93 = dma.done [#allocation5], 512
    $region37: #{adapter_v1_forward.1} parent=1 // pred_fallthru
      _
    // Predicated region
    $region38: #{adapter_v1_forward.1} parent=1 // pred_check
      _
    $region39: #{adapter_v1_forward.1} parent=1 // pred_check_branch
      %95 = sbr.rel (0) target = $region41
    $region40: #{adapter_v1_forward.1} parent=1 // pred_region
      %96 = dma.done [#allocation5], 1024
    $region41: #{adapter_v1_forward.1} parent=1 // pred_fallthru
      _
    // Predicated region
    $region42: #{adapter_v1_forward.1} parent=1 // pred_check
      _
    $region43: #{adapter_v1_forward.1} parent=1 // pred_check_branch
      %98 = sbr.rel (0) target = $region45
    $region44: #{adapter_v1_forward.1} parent=1 // pred_region
      %99 = dma.done [#allocation8], 49152
    $region45: #{adapter_v1_forward.1} parent=1 // pred_fallthru
      _
    // Predicated region
    $region46: #{adapter_v1_forward.1} parent=1 // pred_check
      _
    $region47: #{adapter_v1_forward.1} parent=1 // pred_check_branch
      %101 = sbr.rel (0) target = $region49
    $region48: #{adapter_v1_forward.1} parent=1 // pred_region
      %102 = dma.done [#allocation8], 192
    $region49: #{adapter_v1_forward.1} parent=1 // pred_fallthru
      _
    // Predicated region
    $region50: #{adapter_v1_forward.1} parent=1 // pred_check
      _
    $region51: #{adapter_v1_forward.1} parent=1 // pred_check_branch
      %104 = sbr.rel (0) target = $region53
    $region52: #{adapter_v1_forward.1} parent=1 // pred_region
      %105 = dma.done [#allocation11], 1536
    $region53: #{adapter_v1_forward.1} parent=1 // pred_fallthru
      _
    // Predicated region
    $region54: #{adapter_v1_forward.1} parent=1 // pred_check
      _
    $region55: #{adapter_v1_forward.1} parent=1 // pred_check_branch
      %107 = sbr.rel (0) target = $region57
    $region56: #{adapter_v1_forward.1} parent=1 // pred_region
      %108 = dma.done [#allocation11], 16
    $region57: #{adapter_v1_forward.1} parent=1 // pred_fallthru
      _
    %v110 = vld [vmem:[#allocation2] sm:$0xff]
    %v111 = vld [vmem:[#allocation2 + $0x8] sm:$0xff]
    %v112 = vld [vmem:[#allocation2 + $0x10] sm:$0xff]
    %v113 = vld [vmem:[#allocation2 + $0x18] sm:$0xff]
    %v114 = vpack.c.bf16 %v110, %v110
    %v115 = vpack.c.bf16 %v111, %v111
    %v116 = vpack.c.bf16 %v112, %v112
    %v117 = vpack.c.bf16 %v113, %v113
    %v118 = vld [vmem:[#allocation4] sm:$0xff]
    %v119 = vld [vmem:[#allocation4 + $0x8] sm:$0xff]
    %v120 = vld [vmem:[#allocation4 + $0x10] sm:$0xff]
    %v121 = vld [vmem:[#allocation4 + $0x18] sm:$0xff]
    %v122 = vpack.c.bf16 %v118, %v118
    %v123 = vpack.c.bf16 %v119, %v119
    %v124 = vpack.c.bf16 %v120, %v120
    %v125 = vpack.c.bf16 %v121, %v121
    %v126 = vld [vmem:[#allocation6] sm:$0xff]
    %v127 = vld [vmem:[#allocation6 + $0x8] sm:$0xff]
    %v128 = vld [vmem:[#allocation6 + $0x10] sm:$0xff]
    %v129 = vld [vmem:[#allocation6 + $0x18] sm:$0xff]
    %v130 = vld [vmem:[#allocation6 + $0x20] sm:$0xff]
    %v131 = vld [vmem:[#allocation6 + $0x28] sm:$0xff]
    %v132 = vld [vmem:[#allocation6 + $0x30] sm:$0xff]
    %v133 = vld [vmem:[#allocation6 + $0x38] sm:$0xff]
    %v134 = vpack.c.bf16 %v126, %v126
    %v135 = vpack.c.bf16 %v127, %v127
    %v136 = vpack.c.bf16 %v128, %v128
    %v137 = vpack.c.bf16 %v129, %v129
    %v138 = vpack.c.bf16 %v130, %v130
    %v139 = vpack.c.bf16 %v131, %v131
    %v140 = vpack.c.bf16 %v132, %v132
    %v141 = vpack.c.bf16 %v133, %v133
    %v146 = vrot.slane %v122, 4
    %v147 = vrot.slane %v123, 4
    %v148 = vrot.slane %v124, 4
    %v149 = vrot.slane %v125, 4
    %vm150 = vcmask 1043456
    %v153 = vsel %vm150, %v114, %v146
    %v157 = vsel %vm150, %v115, %v147
    %v161 = vsel %vm150, %v116, %v148
    %v165 = vsel %vm150, %v117, %v149
    %v167 = vld [vmem:[#allocation7] sm:$0xff]
    %v168 = vld [vmem:[#allocation7 + $0x8] sm:$0xff]
    %v169 = vld [vmem:[#allocation7 + $0x10] sm:$0xff]
    %v170 = vld [vmem:[#allocation7 + $0x18] sm:$0xff]
    %v171 = vld [vmem:[#allocation7 + $0x20] sm:$0xff]
    %v172 = vld [vmem:[#allocation7 + $0x28] sm:$0xff]
    %v173 = vld [vmem:[#allocation7 + $0x30] sm:$0xff]
    %v174 = vld [vmem:[#allocation7 + $0x38] sm:$0xff]
    %v175 = vld [vmem:[#allocation7 + $0x40] sm:$0xff]
    %v176 = vld [vmem:[#allocation7 + $0x48] sm:$0xff]
    %v177 = vld [vmem:[#allocation7 + $0x50] sm:$0xff]
    %v178 = vld [vmem:[#allocation7 + $0x58] sm:$0xff]
    %v179 = vld [vmem:[#allocation7 + $0x60] sm:$0xff]
    %v180 = vld [vmem:[#allocation7 + $0x68] sm:$0xff]
    %v181 = vld [vmem:[#allocation7 + $0x70] sm:$0xff]
    %v182 = vld [vmem:[#allocation7 + $0x78] sm:$0xff]
    %v183 = vld [vmem:[#allocation7 + $0x80] sm:$0xff]
    %v184 = vld [vmem:[#allocation7 + $0x88] sm:$0xff]
    %v185 = vld [vmem:[#allocation7 + $0x90] sm:$0xff]
    %v186 = vld [vmem:[#allocation7 + $0x98] sm:$0xff]
    %v187 = vld [vmem:[#allocation7 + $0xa0] sm:$0xff]
    %v188 = vld [vmem:[#allocation7 + $0xa8] sm:$0xff]
    %v189 = vld [vmem:[#allocation7 + $0xb0] sm:$0xff]
    %v190 = vld [vmem:[#allocation7 + $0xb8] sm:$0xff]
    %v191 = vld [vmem:[#allocation7 + $0xc0] sm:$0xff]
    %v192 = vld [vmem:[#allocation7 + $0xc8] sm:$0xff]
    %v193 = vld [vmem:[#allocation7 + $0xd0] sm:$0xff]
    %v194 = vld [vmem:[#allocation7 + $0xd8] sm:$0xff]
    %v195 = vld [vmem:[#allocation7 + $0xe0] sm:$0xff]
    %v196 = vld [vmem:[#allocation7 + $0xe8] sm:$0xff]
    %v197 = vld [vmem:[#allocation7 + $0xf0] sm:$0xff]
    %v198 = vld [vmem:[#allocation7 + $0xf8] sm:$0xff]
    %v199 = vld [vmem:[#allocation7 + $0x100] sm:$0xff]
    %v200 = vld [vmem:[#allocation7 + $0x108] sm:$0xff]
    %v201 = vld [vmem:[#allocation7 + $0x110] sm:$0xff]
    %v202 = vld [vmem:[#allocation7 + $0x118] sm:$0xff]
    %v203 = vld [vmem:[#allocation7 + $0x120] sm:$0xff]
    %v204 = vld [vmem:[#allocation7 + $0x128] sm:$0xff]
    %v205 = vld [vmem:[#allocation7 + $0x130] sm:$0xff]
    %v206 = vld [vmem:[#allocation7 + $0x138] sm:$0xff]
    %v207 = vld [vmem:[#allocation7 + $0x140] sm:$0xff]
    %v208 = vld [vmem:[#allocation7 + $0x148] sm:$0xff]
    %v209 = vld [vmem:[#allocation7 + $0x150] sm:$0xff]
    %v210 = vld [vmem:[#allocation7 + $0x158] sm:$0xff]
    %v211 = vld [vmem:[#allocation7 + $0x160] sm:$0xff]
    %v212 = vld [vmem:[#allocation7 + $0x168] sm:$0xff]
    %v213 = vld [vmem:[#allocation7 + $0x170] sm:$0xff]
    %v214 = vld [vmem:[#allocation7 + $0x178] sm:$0xff]
    %v215 = vld [vmem:[#allocation7 + $0x180] sm:$0xff]
    %v216 = vld [vmem:[#allocation7 + $0x188] sm:$0xff]
    %v217 = vld [vmem:[#allocation7 + $0x190] sm:$0xff]
    %v218 = vld [vmem:[#allocation7 + $0x198] sm:$0xff]
    %v219 = vld [vmem:[#allocation7 + $0x1a0] sm:$0xff]
    %v220 = vld [vmem:[#allocation7 + $0x1a8] sm:$0xff]
    %v221 = vld [vmem:[#allocation7 + $0x1b0] sm:$0xff]
    %v222 = vld [vmem:[#allocation7 + $0x1b8] sm:$0xff]
    %v223 = vld [vmem:[#allocation7 + $0x1c0] sm:$0xff]
    %v224 = vld [vmem:[#allocation7 + $0x1c8] sm:$0xff]
    %v225 = vld [vmem:[#allocation7 + $0x1d0] sm:$0xff]
    %v226 = vld [vmem:[#allocation7 + $0x1d8] sm:$0xff]
    %v227 = vld [vmem:[#allocation7 + $0x1e0] sm:$0xff]
    %v228 = vld [vmem:[#allocation7 + $0x1e8] sm:$0xff]
    %v229 = vld [vmem:[#allocation7 + $0x1f0] sm:$0xff]
    %v230 = vld [vmem:[#allocation7 + $0x1f8] sm:$0xff]
    %v231 = vld [vmem:[#allocation7 + $0x200] sm:$0xff]
    %v232 = vld [vmem:[#allocation7 + $0x208] sm:$0xff]
    %v233 = vld [vmem:[#allocation7 + $0x210] sm:$0xff]
    %v234 = vld [vmem:[#allocation7 + $0x218] sm:$0xff]
    %v235 = vld [vmem:[#allocation7 + $0x220] sm:$0xff]
    %v236 = vld [vmem:[#allocation7 + $0x228] sm:$0xff]
    %v237 = vld [vmem:[#allocation7 + $0x230] sm:$0xff]
    %v238 = vld [vmem:[#allocation7 + $0x238] sm:$0xff]
    %v239 = vld [vmem:[#allocation7 + $0x240] sm:$0xff]
    %v240 = vld [vmem:[#allocation7 + $0x248] sm:$0xff]
    %v241 = vld [vmem:[#allocation7 + $0x250] sm:$0xff]
    %v242 = vld [vmem:[#allocation7 + $0x258] sm:$0xff]
    %v243 = vld [vmem:[#allocation7 + $0x260] sm:$0xff]
    %v244 = vld [vmem:[#allocation7 + $0x268] sm:$0xff]
    %v245 = vld [vmem:[#allocation7 + $0x270] sm:$0xff]
    %v246 = vld [vmem:[#allocation7 + $0x278] sm:$0xff]
    %v247 = vld [vmem:[#allocation7 + $0x280] sm:$0xff]
    %v248 = vld [vmem:[#allocation7 + $0x288] sm:$0xff]
    %v249 = vld [vmem:[#allocation7 + $0x290] sm:$0xff]
    %v250 = vld [vmem:[#allocation7 + $0x298] sm:$0xff]
    %v251 = vld [vmem:[#allocation7 + $0x2a0] sm:$0xff]
    %v252 = vld [vmem:[#allocation7 + $0x2a8] sm:$0xff]
    %v253 = vld [vmem:[#allocation7 + $0x2b0] sm:$0xff]
    %v254 = vld [vmem:[#allocation7 + $0x2b8] sm:$0xff]
    %v255 = vld [vmem:[#allocation7 + $0x2c0] sm:$0xff]
    %v256 = vld [vmem:[#allocation7 + $0x2c8] sm:$0xff]
    %v257 = vld [vmem:[#allocation7 + $0x2d0] sm:$0xff]
    %v258 = vld [vmem:[#allocation7 + $0x2d8] sm:$0xff]
    %v259 = vld [vmem:[#allocation7 + $0x2e0] sm:$0xff]
    %v260 = vld [vmem:[#allocation7 + $0x2e8] sm:$0xff]
    %v261 = vld [vmem:[#allocation7 + $0x2f0] sm:$0xff]
    %v262 = vld [vmem:[#allocation7 + $0x2f8] sm:$0xff]
    %v263 = vld [vmem:[#allocation7 + $0x300] sm:$0xff]
    %v264 = vld [vmem:[#allocation7 + $0x308] sm:$0xff]
    %v265 = vld [vmem:[#allocation7 + $0x310] sm:$0xff]
    %v266 = vld [vmem:[#allocation7 + $0x318] sm:$0xff]
    %v267 = vld [vmem:[#allocation7 + $0x320] sm:$0xff]
    %v268 = vld [vmem:[#allocation7 + $0x328] sm:$0xff]
    %v269 = vld [vmem:[#allocation7 + $0x330] sm:$0xff]
    %v270 = vld [vmem:[#allocation7 + $0x338] sm:$0xff]
    %v271 = vld [vmem:[#allocation7 + $0x340] sm:$0xff]
    %v272 = vld [vmem:[#allocation7 + $0x348] sm:$0xff]
    %v273 = vld [vmem:[#allocation7 + $0x350] sm:$0xff]
    %v274 = vld [vmem:[#allocation7 + $0x358] sm:$0xff]
    %v275 = vld [vmem:[#allocation7 + $0x360] sm:$0xff]
    %v276 = vld [vmem:[#allocation7 + $0x368] sm:$0xff]
    %v277 = vld [vmem:[#allocation7 + $0x370] sm:$0xff]
    %v278 = vld [vmem:[#allocation7 + $0x378] sm:$0xff]
    %v279 = vld [vmem:[#allocation7 + $0x380] sm:$0xff]
    %v280 = vld [vmem:[#allocation7 + $0x388] sm:$0xff]
    %v281 = vld [vmem:[#allocation7 + $0x390] sm:$0xff]
    %v282 = vld [vmem:[#allocation7 + $0x398] sm:$0xff]
    %v283 = vld [vmem:[#allocation7 + $0x3a0] sm:$0xff]
    %v284 = vld [vmem:[#allocation7 + $0x3a8] sm:$0xff]
    %v285 = vld [vmem:[#allocation7 + $0x3b0] sm:$0xff]
    %v286 = vld [vmem:[#allocation7 + $0x3b8] sm:$0xff]
    %v287 = vld [vmem:[#allocation7 + $0x3c0] sm:$0xff]
    %v288 = vld [vmem:[#allocation7 + $0x3c8] sm:$0xff]
    %v289 = vld [vmem:[#allocation7 + $0x3d0] sm:$0xff]
    %v290 = vld [vmem:[#allocation7 + $0x3d8] sm:$0xff]
    %v291 = vld [vmem:[#allocation7 + $0x3e0] sm:$0xff]
    %v292 = vld [vmem:[#allocation7 + $0x3e8] sm:$0xff]
    %v293 = vld [vmem:[#allocation7 + $0x3f0] sm:$0xff]
    %v294 = vld [vmem:[#allocation7 + $0x3f8] sm:$0xff]
    %v295 = vld [vmem:[#allocation7 + $0x400] sm:$0xff]
    %v296 = vld [vmem:[#allocation7 + $0x408] sm:$0xff]
    %v297 = vld [vmem:[#allocation7 + $0x410] sm:$0xff]
    %v298 = vld [vmem:[#allocation7 + $0x418] sm:$0xff]
    %v299 = vld [vmem:[#allocation7 + $0x420] sm:$0xff]
    %v300 = vld [vmem:[#allocation7 + $0x428] sm:$0xff]
    %v301 = vld [vmem:[#allocation7 + $0x430] sm:$0xff]
    %v302 = vld [vmem:[#allocation7 + $0x438] sm:$0xff]
    %v303 = vld [vmem:[#allocation7 + $0x440] sm:$0xff]
    %v304 = vld [vmem:[#allocation7 + $0x448] sm:$0xff]
    %v305 = vld [vmem:[#allocation7 + $0x450] sm:$0xff]
    %v306 = vld [vmem:[#allocation7 + $0x458] sm:$0xff]
    %v307 = vld [vmem:[#allocation7 + $0x460] sm:$0xff]
    %v308 = vld [vmem:[#allocation7 + $0x468] sm:$0xff]
    %v309 = vld [vmem:[#allocation7 + $0x470] sm:$0xff]
    %v310 = vld [vmem:[#allocation7 + $0x478] sm:$0xff]
    %v311 = vld [vmem:[#allocation7 + $0x480] sm:$0xff]
    %v312 = vld [vmem:[#allocation7 + $0x488] sm:$0xff]
    %v313 = vld [vmem:[#allocation7 + $0x490] sm:$0xff]
    %v314 = vld [vmem:[#allocation7 + $0x498] sm:$0xff]
    %v315 = vld [vmem:[#allocation7 + $0x4a0] sm:$0xff]
    %v316 = vld [vmem:[#allocation7 + $0x4a8] sm:$0xff]
    %v317 = vld [vmem:[#allocation7 + $0x4b0] sm:$0xff]
    %v318 = vld [vmem:[#allocation7 + $0x4b8] sm:$0xff]
    %v319 = vld [vmem:[#allocation7 + $0x4c0] sm:$0xff]
    %v320 = vld [vmem:[#allocation7 + $0x4c8] sm:$0xff]
    %v321 = vld [vmem:[#allocation7 + $0x4d0] sm:$0xff]
    %v322 = vld [vmem:[#allocation7 + $0x4d8] sm:$0xff]
    %v323 = vld [vmem:[#allocation7 + $0x4e0] sm:$0xff]
    %v324 = vld [vmem:[#allocation7 + $0x4e8] sm:$0xff]
    %v325 = vld [vmem:[#allocation7 + $0x4f0] sm:$0xff]
    %v326 = vld [vmem:[#allocation7 + $0x4f8] sm:$0xff]
    %v327 = vld [vmem:[#allocation7 + $0x500] sm:$0xff]
    %v328 = vld [vmem:[#allocation7 + $0x508] sm:$0xff]
    %v329 = vld [vmem:[#allocation7 + $0x510] sm:$0xff]
    %v330 = vld [vmem:[#allocation7 + $0x518] sm:$0xff]
    %v331 = vld [vmem:[#allocation7 + $0x520] sm:$0xff]
    %v332 = vld [vmem:[#allocation7 + $0x528] sm:$0xff]
    %v333 = vld [vmem:[#allocation7 + $0x530] sm:$0xff]
    %v334 = vld [vmem:[#allocation7 + $0x538] sm:$0xff]
    %v335 = vld [vmem:[#allocation7 + $0x540] sm:$0xff]
    %v336 = vld [vmem:[#allocation7 + $0x548] sm:$0xff]
    %v337 = vld [vmem:[#allocation7 + $0x550] sm:$0xff]
    %v338 = vld [vmem:[#allocation7 + $0x558] sm:$0xff]
    %v339 = vld [vmem:[#allocation7 + $0x560] sm:$0xff]
    %v340 = vld [vmem:[#allocation7 + $0x568] sm:$0xff]
    %v341 = vld [vmem:[#allocation7 + $0x570] sm:$0xff]
    %v342 = vld [vmem:[#allocation7 + $0x578] sm:$0xff]
    %v343 = vld [vmem:[#allocation7 + $0x580] sm:$0xff]
    %v344 = vld [vmem:[#allocation7 + $0x588] sm:$0xff]
    %v345 = vld [vmem:[#allocation7 + $0x590] sm:$0xff]
    %v346 = vld [vmem:[#allocation7 + $0x598] sm:$0xff]
    %v347 = vld [vmem:[#allocation7 + $0x5a0] sm:$0xff]
    %v348 = vld [vmem:[#allocation7 + $0x5a8] sm:$0xff]
    %v349 = vld [vmem:[#allocation7 + $0x5b0] sm:$0xff]
    %v350 = vld [vmem:[#allocation7 + $0x5b8] sm:$0xff]
    %v351 = vld [vmem:[#allocation7 + $0x5c0] sm:$0xff]
    %v352 = vld [vmem:[#allocation7 + $0x5c8] sm:$0xff]
    %v353 = vld [vmem:[#allocation7 + $0x5d0] sm:$0xff]
    %v354 = vld [vmem:[#allocation7 + $0x5d8] sm:$0xff]
    %v355 = vld [vmem:[#allocation7 + $0x5e0] sm:$0xff]
    %v356 = vld [vmem:[#allocation7 + $0x5e8] sm:$0xff]
    %v357 = vld [vmem:[#allocation7 + $0x5f0] sm:$0xff]
    %v358 = vld [vmem:[#allocation7 + $0x5f8] sm:$0xff]
    %v359 = vld [vmem:[#allocation7 + $0x600] sm:$0xff]
    %v360 = vld [vmem:[#allocation7 + $0x608] sm:$0xff]
    %v361 = vld [vmem:[#allocation7 + $0x610] sm:$0xff]
    %v362 = vld [vmem:[#allocation7 + $0x618] sm:$0xff]
    %v363 = vld [vmem:[#allocation7 + $0x620] sm:$0xff]
    %v364 = vld [vmem:[#allocation7 + $0x628] sm:$0xff]
    %v365 = vld [vmem:[#allocation7 + $0x630] sm:$0xff]
    %v366 = vld [vmem:[#allocation7 + $0x638] sm:$0xff]
    %v367 = vld [vmem:[#allocation7 + $0x640] sm:$0xff]
    %v368 = vld [vmem:[#allocation7 + $0x648] sm:$0xff]
    %v369 = vld [vmem:[#allocation7 + $0x650] sm:$0xff]
    %v370 = vld [vmem:[#allocation7 + $0x658] sm:$0xff]
    %v371 = vld [vmem:[#allocation7 + $0x660] sm:$0xff]
    %v372 = vld [vmem:[#allocation7 + $0x668] sm:$0xff]
    %v373 = vld [vmem:[#allocation7 + $0x670] sm:$0xff]
    %v374 = vld [vmem:[#allocation7 + $0x678] sm:$0xff]
    %v375 = vld [vmem:[#allocation7 + $0x680] sm:$0xff]
    %v376 = vld [vmem:[#allocation7 + $0x688] sm:$0xff]
    %v377 = vld [vmem:[#allocation7 + $0x690] sm:$0xff]
    %v378 = vld [vmem:[#allocation7 + $0x698] sm:$0xff]
    %v379 = vld [vmem:[#allocation7 + $0x6a0] sm:$0xff]
    %v380 = vld [vmem:[#allocation7 + $0x6a8] sm:$0xff]
    %v381 = vld [vmem:[#allocation7 + $0x6b0] sm:$0xff]
    %v382 = vld [vmem:[#allocation7 + $0x6b8] sm:$0xff]
    %v383 = vld [vmem:[#allocation7 + $0x6c0] sm:$0xff]
    %v384 = vld [vmem:[#allocation7 + $0x6c8] sm:$0xff]
    %v385 = vld [vmem:[#allocation7 + $0x6d0] sm:$0xff]
    %v386 = vld [vmem:[#allocation7 + $0x6d8] sm:$0xff]
    %v387 = vld [vmem:[#allocation7 + $0x6e0] sm:$0xff]
    %v388 = vld [vmem:[#allocation7 + $0x6e8] sm:$0xff]
    %v389 = vld [vmem:[#allocation7 + $0x6f0] sm:$0xff]
    %v390 = vld [vmem:[#allocation7 + $0x6f8] sm:$0xff]
    %v391 = vld [vmem:[#allocation7 + $0x700] sm:$0xff]
    %v392 = vld [vmem:[#allocation7 + $0x708] sm:$0xff]
    %v393 = vld [vmem:[#allocation7 + $0x710] sm:$0xff]
    %v394 = vld [vmem:[#allocation7 + $0x718] sm:$0xff]
    %v395 = vld [vmem:[#allocation7 + $0x720] sm:$0xff]
    %v396 = vld [vmem:[#allocation7 + $0x728] sm:$0xff]
    %v397 = vld [vmem:[#allocation7 + $0x730] sm:$0xff]
    %v398 = vld [vmem:[#allocation7 + $0x738] sm:$0xff]
    %v399 = vld [vmem:[#allocation7 + $0x740] sm:$0xff]
    %v400 = vld [vmem:[#allocation7 + $0x748] sm:$0xff]
    %v401 = vld [vmem:[#allocation7 + $0x750] sm:$0xff]
    %v402 = vld [vmem:[#allocation7 + $0x758] sm:$0xff]
    %v403 = vld [vmem:[#allocation7 + $0x760] sm:$0xff]
    %v404 = vld [vmem:[#allocation7 + $0x768] sm:$0xff]
    %v405 = vld [vmem:[#allocation7 + $0x770] sm:$0xff]
    %v406 = vld [vmem:[#allocation7 + $0x778] sm:$0xff]
    %v407 = vld [vmem:[#allocation7 + $0x780] sm:$0xff]
    %v408 = vld [vmem:[#allocation7 + $0x788] sm:$0xff]
    %v409 = vld [vmem:[#allocation7 + $0x790] sm:$0xff]
    %v410 = vld [vmem:[#allocation7 + $0x798] sm:$0xff]
    %v411 = vld [vmem:[#allocation7 + $0x7a0] sm:$0xff]
    %v412 = vld [vmem:[#allocation7 + $0x7a8] sm:$0xff]
    %v413 = vld [vmem:[#allocation7 + $0x7b0] sm:$0xff]
    %v414 = vld [vmem:[#allocation7 + $0x7b8] sm:$0xff]
    %v415 = vld [vmem:[#allocation7 + $0x7c0] sm:$0xff]
    %v416 = vld [vmem:[#allocation7 + $0x7c8] sm:$0xff]
    %v417 = vld [vmem:[#allocation7 + $0x7d0] sm:$0xff]
    %v418 = vld [vmem:[#allocation7 + $0x7d8] sm:$0xff]
    %v419 = vld [vmem:[#allocation7 + $0x7e0] sm:$0xff]
    %v420 = vld [vmem:[#allocation7 + $0x7e8] sm:$0xff]
    %v421 = vld [vmem:[#allocation7 + $0x7f0] sm:$0xff]
    %v422 = vld [vmem:[#allocation7 + $0x7f8] sm:$0xff]
    %v423 = vld [vmem:[#allocation7 + $0x800] sm:$0xff]
    %v424 = vld [vmem:[#allocation7 + $0x808] sm:$0xff]
    %v425 = vld [vmem:[#allocation7 + $0x810] sm:$0xff]
    %v426 = vld [vmem:[#allocation7 + $0x818] sm:$0xff]
    %v427 = vld [vmem:[#allocation7 + $0x820] sm:$0xff]
    %v428 = vld [vmem:[#allocation7 + $0x828] sm:$0xff]
    %v429 = vld [vmem:[#allocation7 + $0x830] sm:$0xff]
    %v430 = vld [vmem:[#allocation7 + $0x838] sm:$0xff]
    %v431 = vld [vmem:[#allocation7 + $0x840] sm:$0xff]
    %v432 = vld [vmem:[#allocation7 + $0x848] sm:$0xff]
    %v433 = vld [vmem:[#allocation7 + $0x850] sm:$0xff]
    %v434 = vld [vmem:[#allocation7 + $0x858] sm:$0xff]
    %v435 = vld [vmem:[#allocation7 + $0x860] sm:$0xff]
    %v436 = vld [vmem:[#allocation7 + $0x868] sm:$0xff]
    %v437 = vld [vmem:[#allocation7 + $0x870] sm:$0xff]
    %v438 = vld [vmem:[#allocation7 + $0x878] sm:$0xff]
    %v439 = vld [vmem:[#allocation7 + $0x880] sm:$0xff]
    %v440 = vld [vmem:[#allocation7 + $0x888] sm:$0xff]
    %v441 = vld [vmem:[#allocation7 + $0x890] sm:$0xff]
    %v442 = vld [vmem:[#allocation7 + $0x898] sm:$0xff]
    %v443 = vld [vmem:[#allocation7 + $0x8a0] sm:$0xff]
    %v444 = vld [vmem:[#allocation7 + $0x8a8] sm:$0xff]
    %v445 = vld [vmem:[#allocation7 + $0x8b0] sm:$0xff]
    %v446 = vld [vmem:[#allocation7 + $0x8b8] sm:$0xff]
    %v447 = vld [vmem:[#allocation7 + $0x8c0] sm:$0xff]
    %v448 = vld [vmem:[#allocation7 + $0x8c8] sm:$0xff]
    %v449 = vld [vmem:[#allocation7 + $0x8d0] sm:$0xff]
    %v450 = vld [vmem:[#allocation7 + $0x8d8] sm:$0xff]
    %v451 = vld [vmem:[#allocation7 + $0x8e0] sm:$0xff]
    %v452 = vld [vmem:[#allocation7 + $0x8e8] sm:$0xff]
    %v453 = vld [vmem:[#allocation7 + $0x8f0] sm:$0xff]
    %v454 = vld [vmem:[#allocation7 + $0x8f8] sm:$0xff]
    %v455 = vld [vmem:[#allocation7 + $0x900] sm:$0xff]
    %v456 = vld [vmem:[#allocation7 + $0x908] sm:$0xff]
    %v457 = vld [vmem:[#allocation7 + $0x910] sm:$0xff]
    %v458 = vld [vmem:[#allocation7 + $0x918] sm:$0xff]
    %v459 = vld [vmem:[#allocation7 + $0x920] sm:$0xff]
    %v460 = vld [vmem:[#allocation7 + $0x928] sm:$0xff]
    %v461 = vld [vmem:[#allocation7 + $0x930] sm:$0xff]
    %v462 = vld [vmem:[#allocation7 + $0x938] sm:$0xff]
    %v463 = vld [vmem:[#allocation7 + $0x940] sm:$0xff]
    %v464 = vld [vmem:[#allocation7 + $0x948] sm:$0xff]
    %v465 = vld [vmem:[#allocation7 + $0x950] sm:$0xff]
    %v466 = vld [vmem:[#allocation7 + $0x958] sm:$0xff]
    %v467 = vld [vmem:[#allocation7 + $0x960] sm:$0xff]
    %v468 = vld [vmem:[#allocation7 + $0x968] sm:$0xff]
    %v469 = vld [vmem:[#allocation7 + $0x970] sm:$0xff]
    %v470 = vld [vmem:[#allocation7 + $0x978] sm:$0xff]
    %v471 = vld [vmem:[#allocation7 + $0x980] sm:$0xff]
    %v472 = vld [vmem:[#allocation7 + $0x988] sm:$0xff]
    %v473 = vld [vmem:[#allocation7 + $0x990] sm:$0xff]
    %v474 = vld [vmem:[#allocation7 + $0x998] sm:$0xff]
    %v475 = vld [vmem:[#allocation7 + $0x9a0] sm:$0xff]
    %v476 = vld [vmem:[#allocation7 + $0x9a8] sm:$0xff]
    %v477 = vld [vmem:[#allocation7 + $0x9b0] sm:$0xff]
    %v478 = vld [vmem:[#allocation7 + $0x9b8] sm:$0xff]
    %v479 = vld [vmem:[#allocation7 + $0x9c0] sm:$0xff]
    %v480 = vld [vmem:[#allocation7 + $0x9c8] sm:$0xff]
    %v481 = vld [vmem:[#allocation7 + $0x9d0] sm:$0xff]
    %v482 = vld [vmem:[#allocation7 + $0x9d8] sm:$0xff]
    %v483 = vld [vmem:[#allocation7 + $0x9e0] sm:$0xff]
    %v484 = vld [vmem:[#allocation7 + $0x9e8] sm:$0xff]
    %v485 = vld [vmem:[#allocation7 + $0x9f0] sm:$0xff]
    %v486 = vld [vmem:[#allocation7 + $0x9f8] sm:$0xff]
    %v487 = vld [vmem:[#allocation7 + $0xa00] sm:$0xff]
    %v488 = vld [vmem:[#allocation7 + $0xa08] sm:$0xff]
    %v489 = vld [vmem:[#allocation7 + $0xa10] sm:$0xff]
    %v490 = vld [vmem:[#allocation7 + $0xa18] sm:$0xff]
    %v491 = vld [vmem:[#allocation7 + $0xa20] sm:$0xff]
    %v492 = vld [vmem:[#allocation7 + $0xa28] sm:$0xff]
    %v493 = vld [vmem:[#allocation7 + $0xa30] sm:$0xff]
    %v494 = vld [vmem:[#allocation7 + $0xa38] sm:$0xff]
    %v495 = vld [vmem:[#allocation7 + $0xa40] sm:$0xff]
    %v496 = vld [vmem:[#allocation7 + $0xa48] sm:$0xff]
    %v497 = vld [vmem:[#allocation7 + $0xa50] sm:$0xff]
    %v498 = vld [vmem:[#allocation7 + $0xa58] sm:$0xff]
    %v499 = vld [vmem:[#allocation7 + $0xa60] sm:$0xff]
    %v500 = vld [vmem:[#allocation7 + $0xa68] sm:$0xff]
    %v501 = vld [vmem:[#allocation7 + $0xa70] sm:$0xff]
    %v502 = vld [vmem:[#allocation7 + $0xa78] sm:$0xff]
    %v503 = vld [vmem:[#allocation7 + $0xa80] sm:$0xff]
    %v504 = vld [vmem:[#allocation7 + $0xa88] sm:$0xff]
    %v505 = vld [vmem:[#allocation7 + $0xa90] sm:$0xff]
    %v506 = vld [vmem:[#allocation7 + $0xa98] sm:$0xff]
    %v507 = vld [vmem:[#allocation7 + $0xaa0] sm:$0xff]
    %v508 = vld [vmem:[#allocation7 + $0xaa8] sm:$0xff]
    %v509 = vld [vmem:[#allocation7 + $0xab0] sm:$0xff]
    %v510 = vld [vmem:[#allocation7 + $0xab8] sm:$0xff]
    %v511 = vld [vmem:[#allocation7 + $0xac0] sm:$0xff]
    %v512 = vld [vmem:[#allocation7 + $0xac8] sm:$0xff]
    %v513 = vld [vmem:[#allocation7 + $0xad0] sm:$0xff]
    %v514 = vld [vmem:[#allocation7 + $0xad8] sm:$0xff]
    %v515 = vld [vmem:[#allocation7 + $0xae0] sm:$0xff]
    %v516 = vld [vmem:[#allocation7 + $0xae8] sm:$0xff]
    %v517 = vld [vmem:[#allocation7 + $0xaf0] sm:$0xff]
    %v518 = vld [vmem:[#allocation7 + $0xaf8] sm:$0xff]
    %v519 = vld [vmem:[#allocation7 + $0xb00] sm:$0xff]
    %v520 = vld [vmem:[#allocation7 + $0xb08] sm:$0xff]
    %v521 = vld [vmem:[#allocation7 + $0xb10] sm:$0xff]
    %v522 = vld [vmem:[#allocation7 + $0xb18] sm:$0xff]
    %v523 = vld [vmem:[#allocation7 + $0xb20] sm:$0xff]
    %v524 = vld [vmem:[#allocation7 + $0xb28] sm:$0xff]
    %v525 = vld [vmem:[#allocation7 + $0xb30] sm:$0xff]
    %v526 = vld [vmem:[#allocation7 + $0xb38] sm:$0xff]
    %v527 = vld [vmem:[#allocation7 + $0xb40] sm:$0xff]
    %v528 = vld [vmem:[#allocation7 + $0xb48] sm:$0xff]
    %v529 = vld [vmem:[#allocation7 + $0xb50] sm:$0xff]
    %v530 = vld [vmem:[#allocation7 + $0xb58] sm:$0xff]
    %v531 = vld [vmem:[#allocation7 + $0xb60] sm:$0xff]
    %v532 = vld [vmem:[#allocation7 + $0xb68] sm:$0xff]
    %v533 = vld [vmem:[#allocation7 + $0xb70] sm:$0xff]
    %v534 = vld [vmem:[#allocation7 + $0xb78] sm:$0xff]
    %v535 = vld [vmem:[#allocation7 + $0xb80] sm:$0xff]
    %v536 = vld [vmem:[#allocation7 + $0xb88] sm:$0xff]
    %v537 = vld [vmem:[#allocation7 + $0xb90] sm:$0xff]
    %v538 = vld [vmem:[#allocation7 + $0xb98] sm:$0xff]
    %v539 = vld [vmem:[#allocation7 + $0xba0] sm:$0xff]
    %v540 = vld [vmem:[#allocation7 + $0xba8] sm:$0xff]
    %v541 = vld [vmem:[#allocation7 + $0xbb0] sm:$0xff]
    %v542 = vld [vmem:[#allocation7 + $0xbb8] sm:$0xff]
    %v543 = vld [vmem:[#allocation7 + $0xbc0] sm:$0xff]
    %v544 = vld [vmem:[#allocation7 + $0xbc8] sm:$0xff]
    %v545 = vld [vmem:[#allocation7 + $0xbd0] sm:$0xff]
    %v546 = vld [vmem:[#allocation7 + $0xbd8] sm:$0xff]
    %v547 = vld [vmem:[#allocation7 + $0xbe0] sm:$0xff]
    %v548 = vld [vmem:[#allocation7 + $0xbe8] sm:$0xff]
    %v549 = vld [vmem:[#allocation7 + $0xbf0] sm:$0xff]
    %v550 = vld [vmem:[#allocation7 + $0xbf8] sm:$0xff]
    %v551 = vld [vmem:[#allocation9] sm:$0xff]
    %v552 = vld [vmem:[#allocation9 + $0x8] sm:$0xf]
    %v555 = vlaneseq
    %v556 = vshrl.u32 %v555, 7
    %v557 = vsub.s32 0, %v556
    %v558 = vrot.slane %v551, %v557
    %v559 = vlaneseq
    %v560 = vshrl.u32 %v559, 7
    %v561 = vsub.s32 1, %v560
    %v562 = vrot.slane %v551, %v561
    %v563 = vlaneseq
    %v564 = vshrl.u32 %v563, 7
    %v565 = vsub.s32 2, %v564
    %v566 = vrot.slane %v551, %v565
    %v567 = vlaneseq
    %v568 = vshrl.u32 %v567, 7
    %v569 = vsub.s32 3, %v568
    %v570 = vrot.slane %v551, %v569
    %v571 = vlaneseq
    %v572 = vshrl.u32 %v571, 7
    %v573 = vsub.s32 4, %v572
    %v574 = vrot.slane %v551, %v573
    %v575 = vlaneseq
    %v576 = vshrl.u32 %v575, 7
    %v577 = vsub.s32 5, %v576
    %v578 = vrot.slane %v551, %v577
    %v579 = vlaneseq
    %v580 = vshrl.u32 %v579, 7
    %v581 = vsub.s32 6, %v580
    %v582 = vrot.slane %v551, %v581
    %v583 = vlaneseq
    %v584 = vshrl.u32 %v583, 7
    %v585 = vsub.s32 7, %v584
    %v586 = vrot.slane %v551, %v585
    %v587 = vlaneseq
    %v588 = vshrl.u32 %v587, 7
    %v589 = vsub.s32 0, %v588
    %v590 = vrot.slane %v552, %v589
    %v591 = vlaneseq
    %v592 = vshrl.u32 %v591, 7
    %v593 = vsub.s32 1, %v592
    %v594 = vrot.slane %v552, %v593
    %v595 = vlaneseq
    %v596 = vshrl.u32 %v595, 7
    %v597 = vsub.s32 2, %v596
    %v598 = vrot.slane %v552, %v597
    %v599 = vlaneseq
    %v600 = vshrl.u32 %v599, 7
    %v601 = vsub.s32 3, %v600
    %v602 = vrot.slane %v552, %v601
    %v999 = vunpack.c.l.b16 %v167
    %v1000 = vunpack.c.h.b16 %v167
    %v1001 = vunpack.c.l.b16 %v168
    %v1002 = vunpack.c.h.b16 %v168
    %v1003 = vunpack.c.l.b16 %v169
    %v1004 = vunpack.c.h.b16 %v169
    %v1005 = vunpack.c.l.b16 %v170
    %v1006 = vunpack.c.h.b16 %v170
    %v1007 = vunpack.c.l.b16 %v171
    %v1008 = vunpack.c.h.b16 %v171
    %v1009 = vunpack.c.l.b16 %v172
    %v1010 = vunpack.c.h.b16 %v172
    %v1011 = vunpack.c.l.b16 %v173
    %v1012 = vunpack.c.h.b16 %v173
    %v1013 = vunpack.c.l.b16 %v174
    %v1014 = vunpack.c.h.b16 %v174
    %v1015 = vunpack.c.l.b16 %v175
    %v1016 = vunpack.c.h.b16 %v175
    %v1017 = vunpack.c.l.b16 %v176
    %v1018 = vunpack.c.h.b16 %v176
    %v1019 = vunpack.c.l.b16 %v177
    %v1020 = vunpack.c.h.b16 %v177
    %v1021 = vunpack.c.l.b16 %v178
    %v1022 = vunpack.c.h.b16 %v178
    %v1023 = vunpack.c.l.b16 %v179
    %v1024 = vunpack.c.h.b16 %v179
    %v1025 = vunpack.c.l.b16 %v180
    %v1026 = vunpack.c.h.b16 %v180
    %v1027 = vunpack.c.l.b16 %v181
    %v1028 = vunpack.c.h.b16 %v181
    %v1029 = vunpack.c.l.b16 %v182
    %v1030 = vunpack.c.h.b16 %v182
    %v1031 = vunpack.c.l.b16 %v183
    %v1032 = vunpack.c.h.b16 %v183
    %v1033 = vunpack.c.l.b16 %v184
    %v1034 = vunpack.c.h.b16 %v184
    %v1035 = vunpack.c.l.b16 %v185
    %v1036 = vunpack.c.h.b16 %v185
    %v1037 = vunpack.c.l.b16 %v186
    %v1038 = vunpack.c.h.b16 %v186
    %v1039 = vunpack.c.l.b16 %v187
    %v1040 = vunpack.c.h.b16 %v187
    %v1041 = vunpack.c.l.b16 %v188
    %v1042 = vunpack.c.h.b16 %v188
    %v1043 = vunpack.c.l.b16 %v189
    %v1044 = vunpack.c.h.b16 %v189
    %v1045 = vunpack.c.l.b16 %v190
    %v1046 = vunpack.c.h.b16 %v190
    %v1047 = vunpack.c.l.b16 %v191
    %v1048 = vunpack.c.h.b16 %v191
    %v1049 = vunpack.c.l.b16 %v192
    %v1050 = vunpack.c.h.b16 %v192
    %v1051 = vunpack.c.l.b16 %v193
    %v1052 = vunpack.c.h.b16 %v193
    %v1053 = vunpack.c.l.b16 %v194
    %v1054 = vunpack.c.h.b16 %v194
    %v1055 = vunpack.c.l.b16 %v195
    %v1056 = vunpack.c.h.b16 %v195
    %v1057 = vunpack.c.l.b16 %v196
    %v1058 = vunpack.c.h.b16 %v196
    %v1059 = vunpack.c.l.b16 %v197
    %v1060 = vunpack.c.h.b16 %v197
    %v1061 = vunpack.c.l.b16 %v198
    %v1062 = vunpack.c.h.b16 %v198
    %v1063 = vunpack.c.l.b16 %v199
    %v1064 = vunpack.c.h.b16 %v199
    %v1065 = vunpack.c.l.b16 %v200
    %v1066 = vunpack.c.h.b16 %v200
    %v1067 = vunpack.c.l.b16 %v201
    %v1068 = vunpack.c.h.b16 %v201
    %v1069 = vunpack.c.l.b16 %v202
    %v1070 = vunpack.c.h.b16 %v202
    %v1071 = vunpack.c.l.b16 %v203
    %v1072 = vunpack.c.h.b16 %v203
    %v1073 = vunpack.c.l.b16 %v204
    %v1074 = vunpack.c.h.b16 %v204
    %v1075 = vunpack.c.l.b16 %v205
    %v1076 = vunpack.c.h.b16 %v205
    %v1077 = vunpack.c.l.b16 %v206
    %v1078 = vunpack.c.h.b16 %v206
    %v1079 = vunpack.c.l.b16 %v207
    %v1080 = vunpack.c.h.b16 %v207
    %v1081 = vunpack.c.l.b16 %v208
    %v1082 = vunpack.c.h.b16 %v208
    %v1083 = vunpack.c.l.b16 %v209
    %v1084 = vunpack.c.h.b16 %v209
    %v1085 = vunpack.c.l.b16 %v210
    %v1086 = vunpack.c.h.b16 %v210
    %v1087 = vunpack.c.l.b16 %v211
    %v1088 = vunpack.c.h.b16 %v211
    %v1089 = vunpack.c.l.b16 %v212
    %v1090 = vunpack.c.h.b16 %v212
    %v1091 = vunpack.c.l.b16 %v213
    %v1092 = vunpack.c.h.b16 %v213
    %v1093 = vunpack.c.l.b16 %v214
    %v1094 = vunpack.c.h.b16 %v214
    %v1095 = vunpack.c.l.b16 %v215
    %v1096 = vunpack.c.h.b16 %v215
    %v1097 = vunpack.c.l.b16 %v216
    %v1098 = vunpack.c.h.b16 %v216
    %v1099 = vunpack.c.l.b16 %v217
    %v1100 = vunpack.c.h.b16 %v217
    %v1101 = vunpack.c.l.b16 %v218
    %v1102 = vunpack.c.h.b16 %v218
    %v1103 = vunpack.c.l.b16 %v219
    %v1104 = vunpack.c.h.b16 %v219
    %v1105 = vunpack.c.l.b16 %v220
    %v1106 = vunpack.c.h.b16 %v220
    %v1107 = vunpack.c.l.b16 %v221
    %v1108 = vunpack.c.h.b16 %v221
    %v1109 = vunpack.c.l.b16 %v222
    %v1110 = vunpack.c.h.b16 %v222
    %v1111 = vunpack.c.l.b16 %v223
    %v1112 = vunpack.c.h.b16 %v223
    %v1113 = vunpack.c.l.b16 %v224
    %v1114 = vunpack.c.h.b16 %v224
    %v1115 = vunpack.c.l.b16 %v225
    %v1116 = vunpack.c.h.b16 %v225
    %v1117 = vunpack.c.l.b16 %v226
    %v1118 = vunpack.c.h.b16 %v226
    %v1119 = vunpack.c.l.b16 %v227
    %v1120 = vunpack.c.h.b16 %v227
    %v1121 = vunpack.c.l.b16 %v228
    %v1122 = vunpack.c.h.b16 %v228
    %v1123 = vunpack.c.l.b16 %v229
    %v1124 = vunpack.c.h.b16 %v229
    %v1125 = vunpack.c.l.b16 %v230
    %v1126 = vunpack.c.h.b16 %v230
    %v1127 = vunpack.c.l.b16 %v231
    %v1128 = vunpack.c.h.b16 %v231
    %v1129 = vunpack.c.l.b16 %v232
    %v1130 = vunpack.c.h.b16 %v232
    %v1131 = vunpack.c.l.b16 %v233
    %v1132 = vunpack.c.h.b16 %v233
    %v1133 = vunpack.c.l.b16 %v234
    %v1134 = vunpack.c.h.b16 %v234
    %v1135 = vunpack.c.l.b16 %v235
    %v1136 = vunpack.c.h.b16 %v235
    %v1137 = vunpack.c.l.b16 %v236
    %v1138 = vunpack.c.h.b16 %v236
    %v1139 = vunpack.c.l.b16 %v237
    %v1140 = vunpack.c.h.b16 %v237
    %v1141 = vunpack.c.l.b16 %v238
    %v1142 = vunpack.c.h.b16 %v238
    %v1143 = vunpack.c.l.b16 %v239
    %v1144 = vunpack.c.h.b16 %v239
    %v1145 = vunpack.c.l.b16 %v240
    %v1146 = vunpack.c.h.b16 %v240
    %v1147 = vunpack.c.l.b16 %v241
    %v1148 = vunpack.c.h.b16 %v241
    %v1149 = vunpack.c.l.b16 %v242
    %v1150 = vunpack.c.h.b16 %v242
    %v1151 = vunpack.c.l.b16 %v243
    %v1152 = vunpack.c.h.b16 %v243
    %v1153 = vunpack.c.l.b16 %v244
    %v1154 = vunpack.c.h.b16 %v244
    %v1155 = vunpack.c.l.b16 %v245
    %v1156 = vunpack.c.h.b16 %v245
    %v1157 = vunpack.c.l.b16 %v246
    %v1158 = vunpack.c.h.b16 %v246
    %v1159 = vunpack.c.l.b16 %v247
    %v1160 = vunpack.c.h.b16 %v247
    %v1161 = vunpack.c.l.b16 %v248
    %v1162 = vunpack.c.h.b16 %v248
    %v1163 = vunpack.c.l.b16 %v249
    %v1164 = vunpack.c.h.b16 %v249
    %v1165 = vunpack.c.l.b16 %v250
    %v1166 = vunpack.c.h.b16 %v250
    %v1167 = vunpack.c.l.b16 %v251
    %v1168 = vunpack.c.h.b16 %v251
    %v1169 = vunpack.c.l.b16 %v252
    %v1170 = vunpack.c.h.b16 %v252
    %v1171 = vunpack.c.l.b16 %v253
    %v1172 = vunpack.c.h.b16 %v253
    %v1173 = vunpack.c.l.b16 %v254
    %v1174 = vunpack.c.h.b16 %v254
    %v1175 = vunpack.c.l.b16 %v255
    %v1176 = vunpack.c.h.b16 %v255
    %v1177 = vunpack.c.l.b16 %v256
    %v1178 = vunpack.c.h.b16 %v256
    %v1179 = vunpack.c.l.b16 %v257
    %v1180 = vunpack.c.h.b16 %v257
    %v1181 = vunpack.c.l.b16 %v258
    %v1182 = vunpack.c.h.b16 %v258
    %v1183 = vunpack.c.l.b16 %v259
    %v1184 = vunpack.c.h.b16 %v259
    %v1185 = vunpack.c.l.b16 %v260
    %v1186 = vunpack.c.h.b16 %v260
    %v1187 = vunpack.c.l.b16 %v261
    %v1188 = vunpack.c.h.b16 %v261
    %v1189 = vunpack.c.l.b16 %v262
    %v1190 = vunpack.c.h.b16 %v262
    %v1191 = vunpack.c.l.b16 %v263
    %v1192 = vunpack.c.h.b16 %v263
    %v1193 = vunpack.c.l.b16 %v264
    %v1194 = vunpack.c.h.b16 %v264
    %v1195 = vunpack.c.l.b16 %v265
    %v1196 = vunpack.c.h.b16 %v265
    %v1197 = vunpack.c.l.b16 %v266
    %v1198 = vunpack.c.h.b16 %v266
    %v1199 = vunpack.c.l.b16 %v267
    %v1200 = vunpack.c.h.b16 %v267
    %v1201 = vunpack.c.l.b16 %v268
    %v1202 = vunpack.c.h.b16 %v268
    %v1203 = vunpack.c.l.b16 %v269
    %v1204 = vunpack.c.h.b16 %v269
    %v1205 = vunpack.c.l.b16 %v270
    %v1206 = vunpack.c.h.b16 %v270
    %v1207 = vunpack.c.l.b16 %v271
    %v1208 = vunpack.c.h.b16 %v271
    %v1209 = vunpack.c.l.b16 %v272
    %v1210 = vunpack.c.h.b16 %v272
    %v1211 = vunpack.c.l.b16 %v273
    %v1212 = vunpack.c.h.b16 %v273
    %v1213 = vunpack.c.l.b16 %v274
    %v1214 = vunpack.c.h.b16 %v274
    %v1215 = vunpack.c.l.b16 %v275
    %v1216 = vunpack.c.h.b16 %v275
    %v1217 = vunpack.c.l.b16 %v276
    %v1218 = vunpack.c.h.b16 %v276
    %v1219 = vunpack.c.l.b16 %v277
    %v1220 = vunpack.c.h.b16 %v277
    %v1221 = vunpack.c.l.b16 %v278
    %v1222 = vunpack.c.h.b16 %v278
    %v1223 = vunpack.c.l.b16 %v279
    %v1224 = vunpack.c.h.b16 %v279
    %v1225 = vunpack.c.l.b16 %v280
    %v1226 = vunpack.c.h.b16 %v280
    %v1227 = vunpack.c.l.b16 %v281
    %v1228 = vunpack.c.h.b16 %v281
    %v1229 = vunpack.c.l.b16 %v282
    %v1230 = vunpack.c.h.b16 %v282
    %v1231 = vunpack.c.l.b16 %v283
    %v1232 = vunpack.c.h.b16 %v283
    %v1233 = vunpack.c.l.b16 %v284
    %v1234 = vunpack.c.h.b16 %v284
    %v1235 = vunpack.c.l.b16 %v285
    %v1236 = vunpack.c.h.b16 %v285
    %v1237 = vunpack.c.l.b16 %v286
    %v1238 = vunpack.c.h.b16 %v286
    %v1239 = vunpack.c.l.b16 %v287
    %v1240 = vunpack.c.h.b16 %v287
    %v1241 = vunpack.c.l.b16 %v288
    %v1242 = vunpack.c.h.b16 %v288
    %v1243 = vunpack.c.l.b16 %v289
    %v1244 = vunpack.c.h.b16 %v289
    %v1245 = vunpack.c.l.b16 %v290
    %v1246 = vunpack.c.h.b16 %v290
    %v1247 = vunpack.c.l.b16 %v291
    %v1248 = vunpack.c.h.b16 %v291
    %v1249 = vunpack.c.l.b16 %v292
    %v1250 = vunpack.c.h.b16 %v292
    %v1251 = vunpack.c.l.b16 %v293
    %v1252 = vunpack.c.h.b16 %v293
    %v1253 = vunpack.c.l.b16 %v294
    %v1254 = vunpack.c.h.b16 %v294
    %v1255 = vunpack.c.l.b16 %v295
    %v1256 = vunpack.c.h.b16 %v295
    %v1257 = vunpack.c.l.b16 %v296
    %v1258 = vunpack.c.h.b16 %v296
    %v1259 = vunpack.c.l.b16 %v297
    %v1260 = vunpack.c.h.b16 %v297
    %v1261 = vunpack.c.l.b16 %v298
    %v1262 = vunpack.c.h.b16 %v298
    %v1263 = vunpack.c.l.b16 %v299
    %v1264 = vunpack.c.h.b16 %v299
    %v1265 = vunpack.c.l.b16 %v300
    %v1266 = vunpack.c.h.b16 %v300
    %v1267 = vunpack.c.l.b16 %v301
    %v1268 = vunpack.c.h.b16 %v301
    %v1269 = vunpack.c.l.b16 %v302
    %v1270 = vunpack.c.h.b16 %v302
    %v1271 = vunpack.c.l.b16 %v303
    %v1272 = vunpack.c.h.b16 %v303
    %v1273 = vunpack.c.l.b16 %v304
    %v1274 = vunpack.c.h.b16 %v304
    %v1275 = vunpack.c.l.b16 %v305
    %v1276 = vunpack.c.h.b16 %v305
    %v1277 = vunpack.c.l.b16 %v306
    %v1278 = vunpack.c.h.b16 %v306
    %v1279 = vunpack.c.l.b16 %v307
    %v1280 = vunpack.c.h.b16 %v307
    %v1281 = vunpack.c.l.b16 %v308
    %v1282 = vunpack.c.h.b16 %v308
    %v1283 = vunpack.c.l.b16 %v309
    %v1284 = vunpack.c.h.b16 %v309
    %v1285 = vunpack.c.l.b16 %v310
    %v1286 = vunpack.c.h.b16 %v310
    %v1287 = vunpack.c.l.b16 %v311
    %v1288 = vunpack.c.h.b16 %v311
    %v1289 = vunpack.c.l.b16 %v312
    %v1290 = vunpack.c.h.b16 %v312
    %v1291 = vunpack.c.l.b16 %v313
    %v1292 = vunpack.c.h.b16 %v313
    %v1293 = vunpack.c.l.b16 %v314
    %v1294 = vunpack.c.h.b16 %v314
    %v1295 = vunpack.c.l.b16 %v315
    %v1296 = vunpack.c.h.b16 %v315
    %v1297 = vunpack.c.l.b16 %v316
    %v1298 = vunpack.c.h.b16 %v316
    %v1299 = vunpack.c.l.b16 %v317
    %v1300 = vunpack.c.h.b16 %v317
    %v1301 = vunpack.c.l.b16 %v318
    %v1302 = vunpack.c.h.b16 %v318
    %v1303 = vunpack.c.l.b16 %v319
    %v1304 = vunpack.c.h.b16 %v319
    %v1305 = vunpack.c.l.b16 %v320
    %v1306 = vunpack.c.h.b16 %v320
    %v1307 = vunpack.c.l.b16 %v321
    %v1308 = vunpack.c.h.b16 %v321
    %v1309 = vunpack.c.l.b16 %v322
    %v1310 = vunpack.c.h.b16 %v322
    %v1311 = vunpack.c.l.b16 %v323
    %v1312 = vunpack.c.h.b16 %v323
    %v1313 = vunpack.c.l.b16 %v324
    %v1314 = vunpack.c.h.b16 %v324
    %v1315 = vunpack.c.l.b16 %v325
    %v1316 = vunpack.c.h.b16 %v325
    %v1317 = vunpack.c.l.b16 %v326
    %v1318 = vunpack.c.h.b16 %v326
    %v1319 = vunpack.c.l.b16 %v327
    %v1320 = vunpack.c.h.b16 %v327
    %v1321 = vunpack.c.l.b16 %v328
    %v1322 = vunpack.c.h.b16 %v328
    %v1323 = vunpack.c.l.b16 %v329
    %v1324 = vunpack.c.h.b16 %v329
    %v1325 = vunpack.c.l.b16 %v330
    %v1326 = vunpack.c.h.b16 %v330
    %v1327 = vunpack.c.l.b16 %v331
    %v1328 = vunpack.c.h.b16 %v331
    %v1329 = vunpack.c.l.b16 %v332
    %v1330 = vunpack.c.h.b16 %v332
    %v1331 = vunpack.c.l.b16 %v333
    %v1332 = vunpack.c.h.b16 %v333
    %v1333 = vunpack.c.l.b16 %v334
    %v1334 = vunpack.c.h.b16 %v334
    %v1335 = vunpack.c.l.b16 %v335
    %v1336 = vunpack.c.h.b16 %v335
    %v1337 = vunpack.c.l.b16 %v336
    %v1338 = vunpack.c.h.b16 %v336
    %v1339 = vunpack.c.l.b16 %v337
    %v1340 = vunpack.c.h.b16 %v337
    %v1341 = vunpack.c.l.b16 %v338
    %v1342 = vunpack.c.h.b16 %v338
    %v1343 = vunpack.c.l.b16 %v339
    %v1344 = vunpack.c.h.b16 %v339
    %v1345 = vunpack.c.l.b16 %v340
    %v1346 = vunpack.c.h.b16 %v340
    %v1347 = vunpack.c.l.b16 %v341
    %v1348 = vunpack.c.h.b16 %v341
    %v1349 = vunpack.c.l.b16 %v342
    %v1350 = vunpack.c.h.b16 %v342
    %v1351 = vunpack.c.l.b16 %v343
    %v1352 = vunpack.c.h.b16 %v343
    %v1353 = vunpack.c.l.b16 %v344
    %v1354 = vunpack.c.h.b16 %v344
    %v1355 = vunpack.c.l.b16 %v345
    %v1356 = vunpack.c.h.b16 %v345
    %v1357 = vunpack.c.l.b16 %v346
    %v1358 = vunpack.c.h.b16 %v346
    %v1359 = vunpack.c.l.b16 %v347
    %v1360 = vunpack.c.h.b16 %v347
    %v1361 = vunpack.c.l.b16 %v348
    %v1362 = vunpack.c.h.b16 %v348
    %v1363 = vunpack.c.l.b16 %v349
    %v1364 = vunpack.c.h.b16 %v349
    %v1365 = vunpack.c.l.b16 %v350
    %v1366 = vunpack.c.h.b16 %v350
    %v1367 = vunpack.c.l.b16 %v351
    %v1368 = vunpack.c.h.b16 %v351
    %v1369 = vunpack.c.l.b16 %v352
    %v1370 = vunpack.c.h.b16 %v352
    %v1371 = vunpack.c.l.b16 %v353
    %v1372 = vunpack.c.h.b16 %v353
    %v1373 = vunpack.c.l.b16 %v354
    %v1374 = vunpack.c.h.b16 %v354
    %v1375 = vunpack.c.l.b16 %v355
    %v1376 = vunpack.c.h.b16 %v355
    %v1377 = vunpack.c.l.b16 %v356
    %v1378 = vunpack.c.h.b16 %v356
    %v1379 = vunpack.c.l.b16 %v357
    %v1380 = vunpack.c.h.b16 %v357
    %v1381 = vunpack.c.l.b16 %v358
    %v1382 = vunpack.c.h.b16 %v358
    %v1383 = vunpack.c.l.b16 %v359
    %v1384 = vunpack.c.h.b16 %v359
    %v1385 = vunpack.c.l.b16 %v360
    %v1386 = vunpack.c.h.b16 %v360
    %v1387 = vunpack.c.l.b16 %v361
    %v1388 = vunpack.c.h.b16 %v361
    %v1389 = vunpack.c.l.b16 %v362
    %v1390 = vunpack.c.h.b16 %v362
    %v1391 = vunpack.c.l.b16 %v363
    %v1392 = vunpack.c.h.b16 %v363
    %v1393 = vunpack.c.l.b16 %v364
    %v1394 = vunpack.c.h.b16 %v364
    %v1395 = vunpack.c.l.b16 %v365
    %v1396 = vunpack.c.h.b16 %v365
    %v1397 = vunpack.c.l.b16 %v366
    %v1398 = vunpack.c.h.b16 %v366
    %v1399 = vunpack.c.l.b16 %v367
    %v1400 = vunpack.c.h.b16 %v367
    %v1401 = vunpack.c.l.b16 %v368
    %v1402 = vunpack.c.h.b16 %v368
    %v1403 = vunpack.c.l.b16 %v369
    %v1404 = vunpack.c.h.b16 %v369
    %v1405 = vunpack.c.l.b16 %v370
    %v1406 = vunpack.c.h.b16 %v370
    %v1407 = vunpack.c.l.b16 %v371
    %v1408 = vunpack.c.h.b16 %v371
    %v1409 = vunpack.c.l.b16 %v372
    %v1410 = vunpack.c.h.b16 %v372
    %v1411 = vunpack.c.l.b16 %v373
    %v1412 = vunpack.c.h.b16 %v373
    %v1413 = vunpack.c.l.b16 %v374
    %v1414 = vunpack.c.h.b16 %v374
    %v1415 = vunpack.c.l.b16 %v375
    %v1416 = vunpack.c.h.b16 %v375
    %v1417 = vunpack.c.l.b16 %v376
    %v1418 = vunpack.c.h.b16 %v376
    %v1419 = vunpack.c.l.b16 %v377
    %v1420 = vunpack.c.h.b16 %v377
    %v1421 = vunpack.c.l.b16 %v378
    %v1422 = vunpack.c.h.b16 %v378
    %v1423 = vunpack.c.l.b16 %v379
    %v1424 = vunpack.c.h.b16 %v379
    %v1425 = vunpack.c.l.b16 %v380
    %v1426 = vunpack.c.h.b16 %v380
    %v1427 = vunpack.c.l.b16 %v381
    %v1428 = vunpack.c.h.b16 %v381
    %v1429 = vunpack.c.l.b16 %v382
    %v1430 = vunpack.c.h.b16 %v382
    %v1431 = vunpack.c.l.b16 %v383
    %v1432 = vunpack.c.h.b16 %v383
    %v1433 = vunpack.c.l.b16 %v384
    %v1434 = vunpack.c.h.b16 %v384
    %v1435 = vunpack.c.l.b16 %v385
    %v1436 = vunpack.c.h.b16 %v385
    %v1437 = vunpack.c.l.b16 %v386
    %v1438 = vunpack.c.h.b16 %v386
    %v1439 = vunpack.c.l.b16 %v387
    %v1440 = vunpack.c.h.b16 %v387
    %v1441 = vunpack.c.l.b16 %v388
    %v1442 = vunpack.c.h.b16 %v388
    %v1443 = vunpack.c.l.b16 %v389
    %v1444 = vunpack.c.h.b16 %v389
    %v1445 = vunpack.c.l.b16 %v390
    %v1446 = vunpack.c.h.b16 %v390
    %v1447 = vunpack.c.l.b16 %v391
    %v1448 = vunpack.c.h.b16 %v391
    %v1449 = vunpack.c.l.b16 %v392
    %v1450 = vunpack.c.h.b16 %v392
    %v1451 = vunpack.c.l.b16 %v393
    %v1452 = vunpack.c.h.b16 %v393
    %v1453 = vunpack.c.l.b16 %v394
    %v1454 = vunpack.c.h.b16 %v394
    %v1455 = vunpack.c.l.b16 %v395
    %v1456 = vunpack.c.h.b16 %v395
    %v1457 = vunpack.c.l.b16 %v396
    %v1458 = vunpack.c.h.b16 %v396
    %v1459 = vunpack.c.l.b16 %v397
    %v1460 = vunpack.c.h.b16 %v397
    %v1461 = vunpack.c.l.b16 %v398
    %v1462 = vunpack.c.h.b16 %v398
    %v1463 = vunpack.c.l.b16 %v399
    %v1464 = vunpack.c.h.b16 %v399
    %v1465 = vunpack.c.l.b16 %v400
    %v1466 = vunpack.c.h.b16 %v400
    %v1467 = vunpack.c.l.b16 %v401
    %v1468 = vunpack.c.h.b16 %v401
    %v1469 = vunpack.c.l.b16 %v402
    %v1470 = vunpack.c.h.b16 %v402
    %v1471 = vunpack.c.l.b16 %v403
    %v1472 = vunpack.c.h.b16 %v403
    %v1473 = vunpack.c.l.b16 %v404
    %v1474 = vunpack.c.h.b16 %v404
    %v1475 = vunpack.c.l.b16 %v405
    %v1476 = vunpack.c.h.b16 %v405
    %v1477 = vunpack.c.l.b16 %v406
    %v1478 = vunpack.c.h.b16 %v406
    %v1479 = vunpack.c.l.b16 %v407
    %v1480 = vunpack.c.h.b16 %v407
    %v1481 = vunpack.c.l.b16 %v408
    %v1482 = vunpack.c.h.b16 %v408
    %v1483 = vunpack.c.l.b16 %v409
    %v1484 = vunpack.c.h.b16 %v409
    %v1485 = vunpack.c.l.b16 %v410
    %v1486 = vunpack.c.h.b16 %v410
    %v1487 = vunpack.c.l.b16 %v411
    %v1488 = vunpack.c.h.b16 %v411
    %v1489 = vunpack.c.l.b16 %v412
    %v1490 = vunpack.c.h.b16 %v412
    %v1491 = vunpack.c.l.b16 %v413
    %v1492 = vunpack.c.h.b16 %v413
    %v1493 = vunpack.c.l.b16 %v414
    %v1494 = vunpack.c.h.b16 %v414
    %v1495 = vunpack.c.l.b16 %v415
    %v1496 = vunpack.c.h.b16 %v415
    %v1497 = vunpack.c.l.b16 %v416
    %v1498 = vunpack.c.h.b16 %v416
    %v1499 = vunpack.c.l.b16 %v417
    %v1500 = vunpack.c.h.b16 %v417
    %v1501 = vunpack.c.l.b16 %v418
    %v1502 = vunpack.c.h.b16 %v418
    %v1503 = vunpack.c.l.b16 %v419
    %v1504 = vunpack.c.h.b16 %v419
    %v1505 = vunpack.c.l.b16 %v420
    %v1506 = vunpack.c.h.b16 %v420
    %v1507 = vunpack.c.l.b16 %v421
    %v1508 = vunpack.c.h.b16 %v421
    %v1509 = vunpack.c.l.b16 %v422
    %v1510 = vunpack.c.h.b16 %v422
    %v1511 = vunpack.c.l.b16 %v423
    %v1512 = vunpack.c.h.b16 %v423
    %v1513 = vunpack.c.l.b16 %v424
    %v1514 = vunpack.c.h.b16 %v424
    %v1515 = vunpack.c.l.b16 %v425
    %v1516 = vunpack.c.h.b16 %v425
    %v1517 = vunpack.c.l.b16 %v426
    %v1518 = vunpack.c.h.b16 %v426
    %v1519 = vunpack.c.l.b16 %v427
    %v1520 = vunpack.c.h.b16 %v427
    %v1521 = vunpack.c.l.b16 %v428
    %v1522 = vunpack.c.h.b16 %v428
    %v1523 = vunpack.c.l.b16 %v429
    %v1524 = vunpack.c.h.b16 %v429
    %v1525 = vunpack.c.l.b16 %v430
    %v1526 = vunpack.c.h.b16 %v430
    %v1527 = vunpack.c.l.b16 %v431
    %v1528 = vunpack.c.h.b16 %v431
    %v1529 = vunpack.c.l.b16 %v432
    %v1530 = vunpack.c.h.b16 %v432
    %v1531 = vunpack.c.l.b16 %v433
    %v1532 = vunpack.c.h.b16 %v433
    %v1533 = vunpack.c.l.b16 %v434
    %v1534 = vunpack.c.h.b16 %v434
    %v1535 = vunpack.c.l.b16 %v435
    %v1536 = vunpack.c.h.b16 %v435
    %v1537 = vunpack.c.l.b16 %v436
    %v1538 = vunpack.c.h.b16 %v436
    %v1539 = vunpack.c.l.b16 %v437
    %v1540 = vunpack.c.h.b16 %v437
    %v1541 = vunpack.c.l.b16 %v438
    %v1542 = vunpack.c.h.b16 %v438
    %v1543 = vunpack.c.l.b16 %v439
    %v1544 = vunpack.c.h.b16 %v439
    %v1545 = vunpack.c.l.b16 %v440
    %v1546 = vunpack.c.h.b16 %v440
    %v1547 = vunpack.c.l.b16 %v441
    %v1548 = vunpack.c.h.b16 %v441
    %v1549 = vunpack.c.l.b16 %v442
    %v1550 = vunpack.c.h.b16 %v442
    %v1551 = vunpack.c.l.b16 %v443
    %v1552 = vunpack.c.h.b16 %v443
    %v1553 = vunpack.c.l.b16 %v444
    %v1554 = vunpack.c.h.b16 %v444
    %v1555 = vunpack.c.l.b16 %v445
    %v1556 = vunpack.c.h.b16 %v445
    %v1557 = vunpack.c.l.b16 %v446
    %v1558 = vunpack.c.h.b16 %v446
    %v1559 = vunpack.c.l.b16 %v447
    %v1560 = vunpack.c.h.b16 %v447
    %v1561 = vunpack.c.l.b16 %v448
    %v1562 = vunpack.c.h.b16 %v448
    %v1563 = vunpack.c.l.b16 %v449
    %v1564 = vunpack.c.h.b16 %v449
    %v1565 = vunpack.c.l.b16 %v450
    %v1566 = vunpack.c.h.b16 %v450
    %v1567 = vunpack.c.l.b16 %v451
    %v1568 = vunpack.c.h.b16 %v451
    %v1569 = vunpack.c.l.b16 %v452
    %v1570 = vunpack.c.h.b16 %v452
    %v1571 = vunpack.c.l.b16 %v453
    %v1572 = vunpack.c.h.b16 %v453
    %v1573 = vunpack.c.l.b16 %v454
    %v1574 = vunpack.c.h.b16 %v454
    %v1575 = vunpack.c.l.b16 %v455
    %v1576 = vunpack.c.h.b16 %v455
    %v1577 = vunpack.c.l.b16 %v456
    %v1578 = vunpack.c.h.b16 %v456
    %v1579 = vunpack.c.l.b16 %v457
    %v1580 = vunpack.c.h.b16 %v457
    %v1581 = vunpack.c.l.b16 %v458
    %v1582 = vunpack.c.h.b16 %v458
    %v1583 = vunpack.c.l.b16 %v459
    %v1584 = vunpack.c.h.b16 %v459
    %v1585 = vunpack.c.l.b16 %v460
    %v1586 = vunpack.c.h.b16 %v460
    %v1587 = vunpack.c.l.b16 %v461
    %v1588 = vunpack.c.h.b16 %v461
    %v1589 = vunpack.c.l.b16 %v462
    %v1590 = vunpack.c.h.b16 %v462
    %v1591 = vunpack.c.l.b16 %v463
    %v1592 = vunpack.c.h.b16 %v463
    %v1593 = vunpack.c.l.b16 %v464
    %v1594 = vunpack.c.h.b16 %v464
    %v1595 = vunpack.c.l.b16 %v465
    %v1596 = vunpack.c.h.b16 %v465
    %v1597 = vunpack.c.l.b16 %v466
    %v1598 = vunpack.c.h.b16 %v466
    %v1599 = vunpack.c.l.b16 %v467
    %v1600 = vunpack.c.h.b16 %v467
    %v1601 = vunpack.c.l.b16 %v468
    %v1602 = vunpack.c.h.b16 %v468
    %v1603 = vunpack.c.l.b16 %v469
    %v1604 = vunpack.c.h.b16 %v469
    %v1605 = vunpack.c.l.b16 %v470
    %v1606 = vunpack.c.h.b16 %v470
    %v1607 = vunpack.c.l.b16 %v471
    %v1608 = vunpack.c.h.b16 %v471
    %v1609 = vunpack.c.l.b16 %v472
    %v1610 = vunpack.c.h.b16 %v472
    %v1611 = vunpack.c.l.b16 %v473
    %v1612 = vunpack.c.h.b16 %v473
    %v1613 = vunpack.c.l.b16 %v474
    %v1614 = vunpack.c.h.b16 %v474
    %v1615 = vunpack.c.l.b16 %v475
    %v1616 = vunpack.c.h.b16 %v475
    %v1617 = vunpack.c.l.b16 %v476
    %v1618 = vunpack.c.h.b16 %v476
    %v1619 = vunpack.c.l.b16 %v477
    %v1620 = vunpack.c.h.b16 %v477
    %v1621 = vunpack.c.l.b16 %v478
    %v1622 = vunpack.c.h.b16 %v478
    %v1623 = vunpack.c.l.b16 %v479
    %v1624 = vunpack.c.h.b16 %v479
    %v1625 = vunpack.c.l.b16 %v480
    %v1626 = vunpack.c.h.b16 %v480
    %v1627 = vunpack.c.l.b16 %v481
    %v1628 = vunpack.c.h.b16 %v481
    %v1629 = vunpack.c.l.b16 %v482
    %v1630 = vunpack.c.h.b16 %v482
    %v1631 = vunpack.c.l.b16 %v483
    %v1632 = vunpack.c.h.b16 %v483
    %v1633 = vunpack.c.l.b16 %v484
    %v1634 = vunpack.c.h.b16 %v484
    %v1635 = vunpack.c.l.b16 %v485
    %v1636 = vunpack.c.h.b16 %v485
    %v1637 = vunpack.c.l.b16 %v486
    %v1638 = vunpack.c.h.b16 %v486
    %v1639 = vunpack.c.l.b16 %v487
    %v1640 = vunpack.c.h.b16 %v487
    %v1641 = vunpack.c.l.b16 %v488
    %v1642 = vunpack.c.h.b16 %v488
    %v1643 = vunpack.c.l.b16 %v489
    %v1644 = vunpack.c.h.b16 %v489
    %v1645 = vunpack.c.l.b16 %v490
    %v1646 = vunpack.c.h.b16 %v490
    %v1647 = vunpack.c.l.b16 %v491
    %v1648 = vunpack.c.h.b16 %v491
    %v1649 = vunpack.c.l.b16 %v492
    %v1650 = vunpack.c.h.b16 %v492
    %v1651 = vunpack.c.l.b16 %v493
    %v1652 = vunpack.c.h.b16 %v493
    %v1653 = vunpack.c.l.b16 %v494
    %v1654 = vunpack.c.h.b16 %v494
    %v1655 = vunpack.c.l.b16 %v495
    %v1656 = vunpack.c.h.b16 %v495
    %v1657 = vunpack.c.l.b16 %v496
    %v1658 = vunpack.c.h.b16 %v496
    %v1659 = vunpack.c.l.b16 %v497
    %v1660 = vunpack.c.h.b16 %v497
    %v1661 = vunpack.c.l.b16 %v498
    %v1662 = vunpack.c.h.b16 %v498
    %v1663 = vunpack.c.l.b16 %v499
    %v1664 = vunpack.c.h.b16 %v499
    %v1665 = vunpack.c.l.b16 %v500
    %v1666 = vunpack.c.h.b16 %v500
    %v1667 = vunpack.c.l.b16 %v501
    %v1668 = vunpack.c.h.b16 %v501
    %v1669 = vunpack.c.l.b16 %v502
    %v1670 = vunpack.c.h.b16 %v502
    %v1671 = vunpack.c.l.b16 %v503
    %v1672 = vunpack.c.h.b16 %v503
    %v1673 = vunpack.c.l.b16 %v504
    %v1674 = vunpack.c.h.b16 %v504
    %v1675 = vunpack.c.l.b16 %v505
    %v1676 = vunpack.c.h.b16 %v505
    %v1677 = vunpack.c.l.b16 %v506
    %v1678 = vunpack.c.h.b16 %v506
    %v1679 = vunpack.c.l.b16 %v507
    %v1680 = vunpack.c.h.b16 %v507
    %v1681 = vunpack.c.l.b16 %v508
    %v1682 = vunpack.c.h.b16 %v508
    %v1683 = vunpack.c.l.b16 %v509
    %v1684 = vunpack.c.h.b16 %v509
    %v1685 = vunpack.c.l.b16 %v510
    %v1686 = vunpack.c.h.b16 %v510
    %v1687 = vunpack.c.l.b16 %v511
    %v1688 = vunpack.c.h.b16 %v511
    %v1689 = vunpack.c.l.b16 %v512
    %v1690 = vunpack.c.h.b16 %v512
    %v1691 = vunpack.c.l.b16 %v513
    %v1692 = vunpack.c.h.b16 %v513
    %v1693 = vunpack.c.l.b16 %v514
    %v1694 = vunpack.c.h.b16 %v514
    %v1695 = vunpack.c.l.b16 %v515
    %v1696 = vunpack.c.h.b16 %v515
    %v1697 = vunpack.c.l.b16 %v516
    %v1698 = vunpack.c.h.b16 %v516
    %v1699 = vunpack.c.l.b16 %v517
    %v1700 = vunpack.c.h.b16 %v517
    %v1701 = vunpack.c.l.b16 %v518
    %v1702 = vunpack.c.h.b16 %v518
    %v1703 = vunpack.c.l.b16 %v519
    %v1704 = vunpack.c.h.b16 %v519
    %v1705 = vunpack.c.l.b16 %v520
    %v1706 = vunpack.c.h.b16 %v520
    %v1707 = vunpack.c.l.b16 %v521
    %v1708 = vunpack.c.h.b16 %v521
    %v1709 = vunpack.c.l.b16 %v522
    %v1710 = vunpack.c.h.b16 %v522
    %v1711 = vunpack.c.l.b16 %v523
    %v1712 = vunpack.c.h.b16 %v523
    %v1713 = vunpack.c.l.b16 %v524
    %v1714 = vunpack.c.h.b16 %v524
    %v1715 = vunpack.c.l.b16 %v525
    %v1716 = vunpack.c.h.b16 %v525
    %v1717 = vunpack.c.l.b16 %v526
    %v1718 = vunpack.c.h.b16 %v526
    %v1719 = vunpack.c.l.b16 %v527
    %v1720 = vunpack.c.h.b16 %v527
    %v1721 = vunpack.c.l.b16 %v528
    %v1722 = vunpack.c.h.b16 %v528
    %v1723 = vunpack.c.l.b16 %v529
    %v1724 = vunpack.c.h.b16 %v529
    %v1725 = vunpack.c.l.b16 %v530
    %v1726 = vunpack.c.h.b16 %v530
    %v1727 = vunpack.c.l.b16 %v531
    %v1728 = vunpack.c.h.b16 %v531
    %v1729 = vunpack.c.l.b16 %v532
    %v1730 = vunpack.c.h.b16 %v532
    %v1731 = vunpack.c.l.b16 %v533
    %v1732 = vunpack.c.h.b16 %v533
    %v1733 = vunpack.c.l.b16 %v534
    %v1734 = vunpack.c.h.b16 %v534
    %v1735 = vunpack.c.l.b16 %v535
    %v1736 = vunpack.c.h.b16 %v535
    %v1737 = vunpack.c.l.b16 %v536
    %v1738 = vunpack.c.h.b16 %v536
    %v1739 = vunpack.c.l.b16 %v537
    %v1740 = vunpack.c.h.b16 %v537
    %v1741 = vunpack.c.l.b16 %v538
    %v1742 = vunpack.c.h.b16 %v538
    %v1743 = vunpack.c.l.b16 %v539
    %v1744 = vunpack.c.h.b16 %v539
    %v1745 = vunpack.c.l.b16 %v540
    %v1746 = vunpack.c.h.b16 %v540
    %v1747 = vunpack.c.l.b16 %v541
    %v1748 = vunpack.c.h.b16 %v541
    %v1749 = vunpack.c.l.b16 %v542
    %v1750 = vunpack.c.h.b16 %v542
    %v1751 = vunpack.c.l.b16 %v543
    %v1752 = vunpack.c.h.b16 %v543
    %v1753 = vunpack.c.l.b16 %v544
    %v1754 = vunpack.c.h.b16 %v544
    %v1755 = vunpack.c.l.b16 %v545
    %v1756 = vunpack.c.h.b16 %v545
    %v1757 = vunpack.c.l.b16 %v546
    %v1758 = vunpack.c.h.b16 %v546
    %v1759 = vunpack.c.l.b16 %v547
    %v1760 = vunpack.c.h.b16 %v547
    %v1761 = vunpack.c.l.b16 %v548
    %v1762 = vunpack.c.h.b16 %v548
    %v1763 = vunpack.c.l.b16 %v549
    %v1764 = vunpack.c.h.b16 %v549
    %v1765 = vunpack.c.l.b16 %v550
    %v1766 = vunpack.c.h.b16 %v550
    %v1767 = vpack.c.b16 %v1011, %v999
    %v1768 = vpack.c.b16 %v1012, %v1000
    %v1769 = vpack.c.b16 %v1013, %v1001
    %v1770 = vpack.c.b16 %v1014, %v1002
    %v1771 = vpack.c.b16 %v1015, %v1003
    %v1772 = vpack.c.b16 %v1016, %v1004
    %v1773 = vpack.c.b16 %v1017, %v1005
    %v1774 = vpack.c.b16 %v1018, %v1006
    %v1775 = vpack.c.b16 %v1019, %v1007
    %v1776 = vpack.c.b16 %v1020, %v1008
    %v1777 = vpack.c.b16 %v1021, %v1009
    %v1778 = vpack.c.b16 %v1022, %v1010
    %v1779 = vpack.c.b16 %v1035, %v1023
    %v1780 = vpack.c.b16 %v1036, %v1024
    %v1781 = vpack.c.b16 %v1037, %v1025
    %v1782 = vpack.c.b16 %v1038, %v1026
    %v1783 = vpack.c.b16 %v1039, %v1027
    %v1784 = vpack.c.b16 %v1040, %v1028
    %v1785 = vpack.c.b16 %v1041, %v1029
    %v1786 = vpack.c.b16 %v1042, %v1030
    %v1787 = vpack.c.b16 %v1043, %v1031
    %v1788 = vpack.c.b16 %v1044, %v1032
    %v1789 = vpack.c.b16 %v1045, %v1033
    %v1790 = vpack.c.b16 %v1046, %v1034
    %v1791 = vpack.c.b16 %v1059, %v1047
    %v1792 = vpack.c.b16 %v1060, %v1048
    %v1793 = vpack.c.b16 %v1061, %v1049
    %v1794 = vpack.c.b16 %v1062, %v1050
    %v1795 = vpack.c.b16 %v1063, %v1051
    %v1796 = vpack.c.b16 %v1064, %v1052
    %v1797 = vpack.c.b16 %v1065, %v1053
    %v1798 = vpack.c.b16 %v1066, %v1054
    %v1799 = vpack.c.b16 %v1067, %v1055
    %v1800 = vpack.c.b16 %v1068, %v1056
    %v1801 = vpack.c.b16 %v1069, %v1057
    %v1802 = vpack.c.b16 %v1070, %v1058
    %v1803 = vpack.c.b16 %v1083, %v1071
    %v1804 = vpack.c.b16 %v1084, %v1072
    %v1805 = vpack.c.b16 %v1085, %v1073
    %v1806 = vpack.c.b16 %v1086, %v1074
    %v1807 = vpack.c.b16 %v1087, %v1075
    %v1808 = vpack.c.b16 %v1088, %v1076
    %v1809 = vpack.c.b16 %v1089, %v1077
    %v1810 = vpack.c.b16 %v1090, %v1078
    %v1811 = vpack.c.b16 %v1091, %v1079
    %v1812 = vpack.c.b16 %v1092, %v1080
    %v1813 = vpack.c.b16 %v1093, %v1081
    %v1814 = vpack.c.b16 %v1094, %v1082
    %v1815 = vpack.c.b16 %v1107, %v1095
    %v1816 = vpack.c.b16 %v1108, %v1096
    %v1817 = vpack.c.b16 %v1109, %v1097
    %v1818 = vpack.c.b16 %v1110, %v1098
    %v1819 = vpack.c.b16 %v1111, %v1099
    %v1820 = vpack.c.b16 %v1112, %v1100
    %v1821 = vpack.c.b16 %v1113, %v1101
    %v1822 = vpack.c.b16 %v1114, %v1102
    %v1823 = vpack.c.b16 %v1115, %v1103
    %v1824 = vpack.c.b16 %v1116, %v1104
    %v1825 = vpack.c.b16 %v1117, %v1105
    %v1826 = vpack.c.b16 %v1118, %v1106
    %v1827 = vpack.c.b16 %v1131, %v1119
    %v1828 = vpack.c.b16 %v1132, %v1120
    %v1829 = vpack.c.b16 %v1133, %v1121
    %v1830 = vpack.c.b16 %v1134, %v1122
    %v1831 = vpack.c.b16 %v1135, %v1123
    %v1832 = vpack.c.b16 %v1136, %v1124
    %v1833 = vpack.c.b16 %v1137, %v1125
    %v1834 = vpack.c.b16 %v1138, %v1126
    %v1835 = vpack.c.b16 %v1139, %v1127
    %v1836 = vpack.c.b16 %v1140, %v1128
    %v1837 = vpack.c.b16 %v1141, %v1129
    %v1838 = vpack.c.b16 %v1142, %v1130
    %v1839 = vpack.c.b16 %v1155, %v1143
    %v1840 = vpack.c.b16 %v1156, %v1144
    %v1841 = vpack.c.b16 %v1157, %v1145
    %v1842 = vpack.c.b16 %v1158, %v1146
    %v1843 = vpack.c.b16 %v1159, %v1147
    %v1844 = vpack.c.b16 %v1160, %v1148
    %v1845 = vpack.c.b16 %v1161, %v1149
    %v1846 = vpack.c.b16 %v1162, %v1150
    %v1847 = vpack.c.b16 %v1163, %v1151
    %v1848 = vpack.c.b16 %v1164, %v1152
    %v1849 = vpack.c.b16 %v1165, %v1153
    %v1850 = vpack.c.b16 %v1166, %v1154
    %v1851 = vpack.c.b16 %v1179, %v1167
    %v1852 = vpack.c.b16 %v1180, %v1168
    %v1853 = vpack.c.b16 %v1181, %v1169
    %v1854 = vpack.c.b16 %v1182, %v1170
    %v1855 = vpack.c.b16 %v1183, %v1171
    %v1856 = vpack.c.b16 %v1184, %v1172
    %v1857 = vpack.c.b16 %v1185, %v1173
    %v1858 = vpack.c.b16 %v1186, %v1174
    %v1859 = vpack.c.b16 %v1187, %v1175
    %v1860 = vpack.c.b16 %v1188, %v1176
    %v1861 = vpack.c.b16 %v1189, %v1177
    %v1862 = vpack.c.b16 %v1190, %v1178
    %v1863 = vpack.c.b16 %v1203, %v1191
    %v1864 = vpack.c.b16 %v1204, %v1192
    %v1865 = vpack.c.b16 %v1205, %v1193
    %v1866 = vpack.c.b16 %v1206, %v1194
    %v1867 = vpack.c.b16 %v1207, %v1195
    %v1868 = vpack.c.b16 %v1208, %v1196
    %v1869 = vpack.c.b16 %v1209, %v1197
    %v1870 = vpack.c.b16 %v1210, %v1198
    %v1871 = vpack.c.b16 %v1211, %v1199
    %v1872 = vpack.c.b16 %v1212, %v1200
    %v1873 = vpack.c.b16 %v1213, %v1201
    %v1874 = vpack.c.b16 %v1214, %v1202
    %v1875 = vpack.c.b16 %v1227, %v1215
    %v1876 = vpack.c.b16 %v1228, %v1216
    %v1877 = vpack.c.b16 %v1229, %v1217
    %v1878 = vpack.c.b16 %v1230, %v1218
    %v1879 = vpack.c.b16 %v1231, %v1219
    %v1880 = vpack.c.b16 %v1232, %v1220
    %v1881 = vpack.c.b16 %v1233, %v1221
    %v1882 = vpack.c.b16 %v1234, %v1222
    %v1883 = vpack.c.b16 %v1235, %v1223
    %v1884 = vpack.c.b16 %v1236, %v1224
    %v1885 = vpack.c.b16 %v1237, %v1225
    %v1886 = vpack.c.b16 %v1238, %v1226
    %v1887 = vpack.c.b16 %v1251, %v1239
    %v1888 = vpack.c.b16 %v1252, %v1240
    %v1889 = vpack.c.b16 %v1253, %v1241
    %v1890 = vpack.c.b16 %v1254, %v1242
    %v1891 = vpack.c.b16 %v1255, %v1243
    %v1892 = vpack.c.b16 %v1256, %v1244
    %v1893 = vpack.c.b16 %v1257, %v1245
    %v1894 = vpack.c.b16 %v1258, %v1246
    %v1895 = vpack.c.b16 %v1259, %v1247
    %v1896 = vpack.c.b16 %v1260, %v1248
    %v1897 = vpack.c.b16 %v1261, %v1249
    %v1898 = vpack.c.b16 %v1262, %v1250
    %v1899 = vpack.c.b16 %v1275, %v1263
    %v1900 = vpack.c.b16 %v1276, %v1264
    %v1901 = vpack.c.b16 %v1277, %v1265
    %v1902 = vpack.c.b16 %v1278, %v1266
    %v1903 = vpack.c.b16 %v1279, %v1267
    %v1904 = vpack.c.b16 %v1280, %v1268
    %v1905 = vpack.c.b16 %v1281, %v1269
    %v1906 = vpack.c.b16 %v1282, %v1270
    %v1907 = vpack.c.b16 %v1283, %v1271
    %v1908 = vpack.c.b16 %v1284, %v1272
    %v1909 = vpack.c.b16 %v1285, %v1273
    %v1910 = vpack.c.b16 %v1286, %v1274
    %v1911 = vpack.c.b16 %v1299, %v1287
    %v1912 = vpack.c.b16 %v1300, %v1288
    %v1913 = vpack.c.b16 %v1301, %v1289
    %v1914 = vpack.c.b16 %v1302, %v1290
    %v1915 = vpack.c.b16 %v1303, %v1291
    %v1916 = vpack.c.b16 %v1304, %v1292
    %v1917 = vpack.c.b16 %v1305, %v1293
    %v1918 = vpack.c.b16 %v1306, %v1294
    %v1919 = vpack.c.b16 %v1307, %v1295
    %v1920 = vpack.c.b16 %v1308, %v1296
    %v1921 = vpack.c.b16 %v1309, %v1297
    %v1922 = vpack.c.b16 %v1310, %v1298
    %v1923 = vpack.c.b16 %v1323, %v1311
    %v1924 = vpack.c.b16 %v1324, %v1312
    %v1925 = vpack.c.b16 %v1325, %v1313
    %v1926 = vpack.c.b16 %v1326, %v1314
    %v1927 = vpack.c.b16 %v1327, %v1315
    %v1928 = vpack.c.b16 %v1328, %v1316
    %v1929 = vpack.c.b16 %v1329, %v1317
    %v1930 = vpack.c.b16 %v1330, %v1318
    %v1931 = vpack.c.b16 %v1331, %v1319
    %v1932 = vpack.c.b16 %v1332, %v1320
    %v1933 = vpack.c.b16 %v1333, %v1321
    %v1934 = vpack.c.b16 %v1334, %v1322
    %v1935 = vpack.c.b16 %v1347, %v1335
    %v1936 = vpack.c.b16 %v1348, %v1336
    %v1937 = vpack.c.b16 %v1349, %v1337
    %v1938 = vpack.c.b16 %v1350, %v1338
    %v1939 = vpack.c.b16 %v1351, %v1339
    %v1940 = vpack.c.b16 %v1352, %v1340
    %v1941 = vpack.c.b16 %v1353, %v1341
    %v1942 = vpack.c.b16 %v1354, %v1342
    %v1943 = vpack.c.b16 %v1355, %v1343
    %v1944 = vpack.c.b16 %v1356, %v1344
    %v1945 = vpack.c.b16 %v1357, %v1345
    %v1946 = vpack.c.b16 %v1358, %v1346
    %v1947 = vpack.c.b16 %v1371, %v1359
    %v1948 = vpack.c.b16 %v1372, %v1360
    %v1949 = vpack.c.b16 %v1373, %v1361
    %v1950 = vpack.c.b16 %v1374, %v1362
    %v1951 = vpack.c.b16 %v1375, %v1363
    %v1952 = vpack.c.b16 %v1376, %v1364
    %v1953 = vpack.c.b16 %v1377, %v1365
    %v1954 = vpack.c.b16 %v1378, %v1366
    %v1955 = vpack.c.b16 %v1379, %v1367
    %v1956 = vpack.c.b16 %v1380, %v1368
    %v1957 = vpack.c.b16 %v1381, %v1369
    %v1958 = vpack.c.b16 %v1382, %v1370
    %v1959 = vpack.c.b16 %v1395, %v1383
    %v1960 = vpack.c.b16 %v1396, %v1384
    %v1961 = vpack.c.b16 %v1397, %v1385
    %v1962 = vpack.c.b16 %v1398, %v1386
    %v1963 = vpack.c.b16 %v1399, %v1387
    %v1964 = vpack.c.b16 %v1400, %v1388
    %v1965 = vpack.c.b16 %v1401, %v1389
    %v1966 = vpack.c.b16 %v1402, %v1390
    %v1967 = vpack.c.b16 %v1403, %v1391
    %v1968 = vpack.c.b16 %v1404, %v1392
    %v1969 = vpack.c.b16 %v1405, %v1393
    %v1970 = vpack.c.b16 %v1406, %v1394
    %v1971 = vpack.c.b16 %v1419, %v1407
    %v1972 = vpack.c.b16 %v1420, %v1408
    %v1973 = vpack.c.b16 %v1421, %v1409
    %v1974 = vpack.c.b16 %v1422, %v1410
    %v1975 = vpack.c.b16 %v1423, %v1411
    %v1976 = vpack.c.b16 %v1424, %v1412
    %v1977 = vpack.c.b16 %v1425, %v1413
    %v1978 = vpack.c.b16 %v1426, %v1414
    %v1979 = vpack.c.b16 %v1427, %v1415
    %v1980 = vpack.c.b16 %v1428, %v1416
    %v1981 = vpack.c.b16 %v1429, %v1417
    %v1982 = vpack.c.b16 %v1430, %v1418
    %v1983 = vpack.c.b16 %v1443, %v1431
    %v1984 = vpack.c.b16 %v1444, %v1432
    %v1985 = vpack.c.b16 %v1445, %v1433
    %v1986 = vpack.c.b16 %v1446, %v1434
    %v1987 = vpack.c.b16 %v1447, %v1435
    %v1988 = vpack.c.b16 %v1448, %v1436
    %v1989 = vpack.c.b16 %v1449, %v1437
    %v1990 = vpack.c.b16 %v1450, %v1438
    %v1991 = vpack.c.b16 %v1451, %v1439
    %v1992 = vpack.c.b16 %v1452, %v1440
    %v1993 = vpack.c.b16 %v1453, %v1441
    %v1994 = vpack.c.b16 %v1454, %v1442
    %v1995 = vpack.c.b16 %v1467, %v1455
    %v1996 = vpack.c.b16 %v1468, %v1456
    %v1997 = vpack.c.b16 %v1469, %v1457
    %v1998 = vpack.c.b16 %v1470, %v1458
    %v1999 = vpack.c.b16 %v1471, %v1459
    %v2000 = vpack.c.b16 %v1472, %v1460
    %v2001 = vpack.c.b16 %v1473, %v1461
    %v2002 = vpack.c.b16 %v1474, %v1462
    %v2003 = vpack.c.b16 %v1475, %v1463
    %v2004 = vpack.c.b16 %v1476, %v1464
    %v2005 = vpack.c.b16 %v1477, %v1465
    %v2006 = vpack.c.b16 %v1478, %v1466
    %v2007 = vpack.c.b16 %v1491, %v1479
    %v2008 = vpack.c.b16 %v1492, %v1480
    %v2009 = vpack.c.b16 %v1493, %v1481
    %v2010 = vpack.c.b16 %v1494, %v1482
    %v2011 = vpack.c.b16 %v1495, %v1483
    %v2012 = vpack.c.b16 %v1496, %v1484
    %v2013 = vpack.c.b16 %v1497, %v1485
    %v2014 = vpack.c.b16 %v1498, %v1486
    %v2015 = vpack.c.b16 %v1499, %v1487
    %v2016 = vpack.c.b16 %v1500, %v1488
    %v2017 = vpack.c.b16 %v1501, %v1489
    %v2018 = vpack.c.b16 %v1502, %v1490
    %v2019 = vpack.c.b16 %v1515, %v1503
    %v2020 = vpack.c.b16 %v1516, %v1504
    %v2021 = vpack.c.b16 %v1517, %v1505
    %v2022 = vpack.c.b16 %v1518, %v1506
    %v2023 = vpack.c.b16 %v1519, %v1507
    %v2024 = vpack.c.b16 %v1520, %v1508
    %v2025 = vpack.c.b16 %v1521, %v1509
    %v2026 = vpack.c.b16 %v1522, %v1510
    %v2027 = vpack.c.b16 %v1523, %v1511
    %v2028 = vpack.c.b16 %v1524, %v1512
    %v2029 = vpack.c.b16 %v1525, %v1513
    %v2030 = vpack.c.b16 %v1526, %v1514
    %v2031 = vpack.c.b16 %v1539, %v1527
    %v2032 = vpack.c.b16 %v1540, %v1528
    %v2033 = vpack.c.b16 %v1541, %v1529
    %v2034 = vpack.c.b16 %v1542, %v1530
    %v2035 = vpack.c.b16 %v1543, %v1531
    %v2036 = vpack.c.b16 %v1544, %v1532
    %v2037 = vpack.c.b16 %v1545, %v1533
    %v2038 = vpack.c.b16 %v1546, %v1534
    %v2039 = vpack.c.b16 %v1547, %v1535
    %v2040 = vpack.c.b16 %v1548, %v1536
    %v2041 = vpack.c.b16 %v1549, %v1537
    %v2042 = vpack.c.b16 %v1550, %v1538
    %v2043 = vpack.c.b16 %v1563, %v1551
    %v2044 = vpack.c.b16 %v1564, %v1552
    %v2045 = vpack.c.b16 %v1565, %v1553
    %v2046 = vpack.c.b16 %v1566, %v1554
    %v2047 = vpack.c.b16 %v1567, %v1555
    %v2048 = vpack.c.b16 %v1568, %v1556
    %v2049 = vpack.c.b16 %v1569, %v1557
    %v2050 = vpack.c.b16 %v1570, %v1558
    %v2051 = vpack.c.b16 %v1571, %v1559
    %v2052 = vpack.c.b16 %v1572, %v1560
    %v2053 = vpack.c.b16 %v1573, %v1561
    %v2054 = vpack.c.b16 %v1574, %v1562
    %v2055 = vpack.c.b16 %v1587, %v1575
    %v2056 = vpack.c.b16 %v1588, %v1576
    %v2057 = vpack.c.b16 %v1589, %v1577
    %v2058 = vpack.c.b16 %v1590, %v1578
    %v2059 = vpack.c.b16 %v1591, %v1579
    %v2060 = vpack.c.b16 %v1592, %v1580
    %v2061 = vpack.c.b16 %v1593, %v1581
    %v2062 = vpack.c.b16 %v1594, %v1582
    %v2063 = vpack.c.b16 %v1595, %v1583
    %v2064 = vpack.c.b16 %v1596, %v1584
    %v2065 = vpack.c.b16 %v1597, %v1585
    %v2066 = vpack.c.b16 %v1598, %v1586
    %v2067 = vpack.c.b16 %v1611, %v1599
    %v2068 = vpack.c.b16 %v1612, %v1600
    %v2069 = vpack.c.b16 %v1613, %v1601
    %v2070 = vpack.c.b16 %v1614, %v1602
    %v2071 = vpack.c.b16 %v1615, %v1603
    %v2072 = vpack.c.b16 %v1616, %v1604
    %v2073 = vpack.c.b16 %v1617, %v1605
    %v2074 = vpack.c.b16 %v1618, %v1606
    %v2075 = vpack.c.b16 %v1619, %v1607
    %v2076 = vpack.c.b16 %v1620, %v1608
    %v2077 = vpack.c.b16 %v1621, %v1609
    %v2078 = vpack.c.b16 %v1622, %v1610
    %v2079 = vpack.c.b16 %v1635, %v1623
    %v2080 = vpack.c.b16 %v1636, %v1624
    %v2081 = vpack.c.b16 %v1637, %v1625
    %v2082 = vpack.c.b16 %v1638, %v1626
    %v2083 = vpack.c.b16 %v1639, %v1627
    %v2084 = vpack.c.b16 %v1640, %v1628
    %v2085 = vpack.c.b16 %v1641, %v1629
    %v2086 = vpack.c.b16 %v1642, %v1630
    %v2087 = vpack.c.b16 %v1643, %v1631
    %v2088 = vpack.c.b16 %v1644, %v1632
    %v2089 = vpack.c.b16 %v1645, %v1633
    %v2090 = vpack.c.b16 %v1646, %v1634
    %v2091 = vpack.c.b16 %v1659, %v1647
    %v2092 = vpack.c.b16 %v1660, %v1648
    %v2093 = vpack.c.b16 %v1661, %v1649
    %v2094 = vpack.c.b16 %v1662, %v1650
    %v2095 = vpack.c.b16 %v1663, %v1651
    %v2096 = vpack.c.b16 %v1664, %v1652
    %v2097 = vpack.c.b16 %v1665, %v1653
    %v2098 = vpack.c.b16 %v1666, %v1654
    %v2099 = vpack.c.b16 %v1667, %v1655
    %v2100 = vpack.c.b16 %v1668, %v1656
    %v2101 = vpack.c.b16 %v1669, %v1657
    %v2102 = vpack.c.b16 %v1670, %v1658
    %v2103 = vpack.c.b16 %v1683, %v1671
    %v2104 = vpack.c.b16 %v1684, %v1672
    %v2105 = vpack.c.b16 %v1685, %v1673
    %v2106 = vpack.c.b16 %v1686, %v1674
    %v2107 = vpack.c.b16 %v1687, %v1675
    %v2108 = vpack.c.b16 %v1688, %v1676
    %v2109 = vpack.c.b16 %v1689, %v1677
    %v2110 = vpack.c.b16 %v1690, %v1678
    %v2111 = vpack.c.b16 %v1691, %v1679
    %v2112 = vpack.c.b16 %v1692, %v1680
    %v2113 = vpack.c.b16 %v1693, %v1681
    %v2114 = vpack.c.b16 %v1694, %v1682
    %v2115 = vpack.c.b16 %v1707, %v1695
    %v2116 = vpack.c.b16 %v1708, %v1696
    %v2117 = vpack.c.b16 %v1709, %v1697
    %v2118 = vpack.c.b16 %v1710, %v1698
    %v2119 = vpack.c.b16 %v1711, %v1699
    %v2120 = vpack.c.b16 %v1712, %v1700
    %v2121 = vpack.c.b16 %v1713, %v1701
    %v2122 = vpack.c.b16 %v1714, %v1702
    %v2123 = vpack.c.b16 %v1715, %v1703
    %v2124 = vpack.c.b16 %v1716, %v1704
    %v2125 = vpack.c.b16 %v1717, %v1705
    %v2126 = vpack.c.b16 %v1718, %v1706
    %v2127 = vpack.c.b16 %v1731, %v1719
    %v2128 = vpack.c.b16 %v1732, %v1720
    %v2129 = vpack.c.b16 %v1733, %v1721
    %v2130 = vpack.c.b16 %v1734, %v1722
    %v2131 = vpack.c.b16 %v1735, %v1723
    %v2132 = vpack.c.b16 %v1736, %v1724
    %v2133 = vpack.c.b16 %v1737, %v1725
    %v2134 = vpack.c.b16 %v1738, %v1726
    %v2135 = vpack.c.b16 %v1739, %v1727
    %v2136 = vpack.c.b16 %v1740, %v1728
    %v2137 = vpack.c.b16 %v1741, %v1729
    %v2138 = vpack.c.b16 %v1742, %v1730
    %v2139 = vpack.c.b16 %v1755, %v1743
    %v2140 = vpack.c.b16 %v1756, %v1744
    %v2141 = vpack.c.b16 %v1757, %v1745
    %v2142 = vpack.c.b16 %v1758, %v1746
    %v2143 = vpack.c.b16 %v1759, %v1747
    %v2144 = vpack.c.b16 %v1760, %v1748
    %v2145 = vpack.c.b16 %v1761, %v1749
    %v2146 = vpack.c.b16 %v1762, %v1750
    %v2147 = vpack.c.b16 %v1763, %v1751
    %v2148 = vpack.c.b16 %v1764, %v1752
    %v2149 = vpack.c.b16 %v1765, %v1753
    %v2150 = vpack.c.b16 %v1766, %v1754
    %2535 = vmatprep.subr.bf16.mxu0 %v1852
    %2536 = vmatpush1.bf16.msra.mxu0 %v1851
    %2537 = vmatprep.subr.bf16.mxu0 %v1840
    %2538 = vmatpush1.bf16.msra.mxu0 %v1839
    %2539 = vmatprep.subr.bf16.mxu0 %v1828
    %2540 = vmatpush1.bf16.msra.mxu0 %v1827
    %2541 = vmatprep.subr.bf16.mxu0 %v1816
    %2542 = vmatpush1.bf16.msra.mxu0 %v1815
    %2543 = vmatprep.subr.bf16.mxu0 %v1804
    %2544 = vmatpush1.bf16.msra.mxu0 %v1803
    %2545 = vmatprep.subr.bf16.mxu0 %v1792
    %2546 = vmatpush1.bf16.msra.mxu0 %v1791
    %2547 = vmatprep.subr.bf16.mxu0 %v1780
    %2548 = vmatpush1.bf16.msra.mxu0 %v1779
    %2549 = vmatprep.subr.bf16.mxu0 %v1768
    %2550 = vmatpush1.bf16.msra.mxu0 %v1767
    %2551 = vmatprep.subr.bf16.mxu0 %v1948
    %2552 = vmatpush2.bf16.msra.mxu0 %v1947
    %2553 = vmatprep.subr.bf16.mxu0 %v1936
    %2554 = vmatpush2.bf16.msra.mxu0 %v1935
    %2555 = vmatprep.subr.bf16.mxu0 %v1924
    %2556 = vmatpush2.bf16.msra.mxu0 %v1923
    %2557 = vmatprep.subr.bf16.mxu0 %v1912
    %2558 = vmatpush2.bf16.msra.mxu0 %v1911
    %2559 = vmatprep.subr.bf16.mxu0 %v1900
    %2560 = vmatpush2.bf16.msra.mxu0 %v1899
    %2561 = vmatprep.subr.bf16.mxu0 %v1888
    %2562 = vmatpush2.bf16.msra.mxu0 %v1887
    %2563 = vmatprep.subr.bf16.mxu0 %v1876
    %2564 = vmatpush2.bf16.msra.mxu0 %v1875
    %2565 = vmatprep.subr.bf16.mxu0 %v1864
    %2566 = vmatpush2.bf16.msra.mxu0 %v1863
    %2567 = vmatprep.mubr.bf16.mxu0 %v157
    %2568 = vmatmul.mubr.bf16.gmra.mxu0 %v153
    %v2569 = vpop.f32.mrf.mxu0
    %v2570 = vadd.f32 %v558, %v2569
    %v2571 = vpop.f32.mrf.mxu0
    %v2572 = vadd.f32 %v562, %v2571
    %v2573 = vpop.f32.mrf.mxu0
    %v2574 = vadd.f32 %v558, %v2573
    %v2575 = vpop.f32.mrf.mxu0
    %v2576 = vadd.f32 %v562, %v2575
    %2577 = vdwg.mxu0
    %2578 = vmatprep.subr.bf16.mxu0 %v2044
    %2579 = vmatpush1.bf16.msra.mxu0 %v2043
    %2580 = vmatprep.subr.bf16.mxu0 %v2032
    %2581 = vmatpush1.bf16.msra.mxu0 %v2031
    %2582 = vmatprep.subr.bf16.mxu0 %v2020
    %2583 = vmatpush1.bf16.msra.mxu0 %v2019
    %2584 = vmatprep.subr.bf16.mxu0 %v2008
    %2585 = vmatpush1.bf16.msra.mxu0 %v2007
    %2586 = vmatprep.subr.bf16.mxu0 %v1996
    %2587 = vmatpush1.bf16.msra.mxu0 %v1995
    %2588 = vmatprep.subr.bf16.mxu0 %v1984
    %2589 = vmatpush1.bf16.msra.mxu0 %v1983
    %2590 = vmatprep.subr.bf16.mxu0 %v1972
    %2591 = vmatpush1.bf16.msra.mxu0 %v1971
    %2592 = vmatprep.subr.bf16.mxu0 %v1960
    %2593 = vmatpush1.bf16.msra.mxu0 %v1959
    %2594 = vmatprep.subr.bf16.mxu0 %v2140
    %2595 = vmatpush2.bf16.msra.mxu0 %v2139
    %2596 = vmatprep.subr.bf16.mxu0 %v2128
    %2597 = vmatpush2.bf16.msra.mxu0 %v2127
    %2598 = vmatprep.subr.bf16.mxu0 %v2116
    %2599 = vmatpush2.bf16.msra.mxu0 %v2115
    %2600 = vmatprep.subr.bf16.mxu0 %v2104
    %2601 = vmatpush2.bf16.msra.mxu0 %v2103
    %2602 = vmatprep.subr.bf16.mxu0 %v2092
    %2603 = vmatpush2.bf16.msra.mxu0 %v2091
    %2604 = vmatprep.subr.bf16.mxu0 %v2080
    %2605 = vmatpush2.bf16.msra.mxu0 %v2079
    %2606 = vmatprep.subr.bf16.mxu0 %v2068
    %2607 = vmatpush2.bf16.msra.mxu0 %v2067
    %2608 = vmatprep.subr.bf16.mxu0 %v2056
    %2609 = vmatpush2.bf16.msra.mxu0 %v2055
    %2610 = vmatprep.mubr.bf16.mxu0 %v165
    %2611 = vmatmul.mubr.bf16.gmra.mxu0 %v161
    %v2612 = vpop.f32.mrf.mxu0
    %v2613 = vadd.f32 %v2570, %v2612
    %v2614 = vpop.f32.mrf.mxu0
    %v2615 = vadd.f32 %v2572, %v2614
    %v2616 = vpop.f32.mrf.mxu0
    %v2617 = vadd.f32 %v2574, %v2616
    %v2618 = vpop.f32.mrf.mxu0
    %v2619 = vadd.f32 %v2576, %v2618
    %2620 = vdwg.mxu0
    %2621 = vmatprep.subr.bf16.mxu0 %v1854
    %2622 = vmatpush1.bf16.msra.mxu0 %v1853
    %2623 = vmatprep.subr.bf16.mxu0 %v1842
    %2624 = vmatpush1.bf16.msra.mxu0 %v1841
    %2625 = vmatprep.subr.bf16.mxu0 %v1830
    %2626 = vmatpush1.bf16.msra.mxu0 %v1829
    %2627 = vmatprep.subr.bf16.mxu0 %v1818
    %2628 = vmatpush1.bf16.msra.mxu0 %v1817
    %2629 = vmatprep.subr.bf16.mxu0 %v1806
    %2630 = vmatpush1.bf16.msra.mxu0 %v1805
    %2631 = vmatprep.subr.bf16.mxu0 %v1794
    %2632 = vmatpush1.bf16.msra.mxu0 %v1793
    %2633 = vmatprep.subr.bf16.mxu0 %v1782
    %2634 = vmatpush1.bf16.msra.mxu0 %v1781
    %2635 = vmatprep.subr.bf16.mxu0 %v1770
    %2636 = vmatpush1.bf16.msra.mxu0 %v1769
    %2637 = vmatprep.subr.bf16.mxu0 %v1950
    %2638 = vmatpush2.bf16.msra.mxu0 %v1949
    %2639 = vmatprep.subr.bf16.mxu0 %v1938
    %2640 = vmatpush2.bf16.msra.mxu0 %v1937
    %2641 = vmatprep.subr.bf16.mxu0 %v1926
    %2642 = vmatpush2.bf16.msra.mxu0 %v1925
    %2643 = vmatprep.subr.bf16.mxu0 %v1914
    %2644 = vmatpush2.bf16.msra.mxu0 %v1913
    %2645 = vmatprep.subr.bf16.mxu0 %v1902
    %2646 = vmatpush2.bf16.msra.mxu0 %v1901
    %2647 = vmatprep.subr.bf16.mxu0 %v1890
    %2648 = vmatpush2.bf16.msra.mxu0 %v1889
    %2649 = vmatprep.subr.bf16.mxu0 %v1878
    %2650 = vmatpush2.bf16.msra.mxu0 %v1877
    %2651 = vmatprep.subr.bf16.mxu0 %v1866
    %2652 = vmatpush2.bf16.msra.mxu0 %v1865
    %2653 = vmatprep.mubr.bf16.mxu0 %v157
    %2654 = vmatmul.mubr.bf16.gmra.mxu0 %v153
    %v2655 = vpop.f32.mrf.mxu0
    %v2656 = vadd.f32 %v566, %v2655
    %v2657 = vpop.f32.mrf.mxu0
    %v2658 = vadd.f32 %v570, %v2657
    %v2659 = vpop.f32.mrf.mxu0
    %v2660 = vadd.f32 %v566, %v2659
    %v2661 = vpop.f32.mrf.mxu0
    %v2662 = vadd.f32 %v570, %v2661
    %2663 = vdwg.mxu0
    %2664 = vmatprep.subr.bf16.mxu0 %v2046
    %2665 = vmatpush1.bf16.msra.mxu0 %v2045
    %2666 = vmatprep.subr.bf16.mxu0 %v2034
    %2667 = vmatpush1.bf16.msra.mxu0 %v2033
    %2668 = vmatprep.subr.bf16.mxu0 %v2022
    %2669 = vmatpush1.bf16.msra.mxu0 %v2021
    %2670 = vmatprep.subr.bf16.mxu0 %v2010
    %2671 = vmatpush1.bf16.msra.mxu0 %v2009
    %2672 = vmatprep.subr.bf16.mxu0 %v1998
    %2673 = vmatpush1.bf16.msra.mxu0 %v1997
    %2674 = vmatprep.subr.bf16.mxu0 %v1986
    %2675 = vmatpush1.bf16.msra.mxu0 %v1985
    %2676 = vmatprep.subr.bf16.mxu0 %v1974
    %2677 = vmatpush1.bf16.msra.mxu0 %v1973
    %2678 = vmatprep.subr.bf16.mxu0 %v1962
    %2679 = vmatpush1.bf16.msra.mxu0 %v1961
    %2680 = vmatprep.subr.bf16.mxu0 %v2142
    %2681 = vmatpush2.bf16.msra.mxu0 %v2141
    %2682 = vmatprep.subr.bf16.mxu0 %v2130
    %2683 = vmatpush2.bf16.msra.mxu0 %v2129
    %2684 = vmatprep.subr.bf16.mxu0 %v2118
    %2685 = vmatpush2.bf16.msra.mxu0 %v2117
    %2686 = vmatprep.subr.bf16.mxu0 %v2106
    %2687 = vmatpush2.bf16.msra.mxu0 %v2105
    %2688 = vmatprep.subr.bf16.mxu0 %v2094
    %2689 = vmatpush2.bf16.msra.mxu0 %v2093
    %2690 = vmatprep.subr.bf16.mxu0 %v2082
    %2691 = vmatpush2.bf16.msra.mxu0 %v2081
    %2692 = vmatprep.subr.bf16.mxu0 %v2070
    %2693 = vmatpush2.bf16.msra.mxu0 %v2069
    %2694 = vmatprep.subr.bf16.mxu0 %v2058
    %2695 = vmatpush2.bf16.msra.mxu0 %v2057
    %2696 = vmatprep.mubr.bf16.mxu0 %v165
    %2697 = vmatmul.mubr.bf16.gmra.mxu0 %v161
    %v2698 = vpop.f32.mrf.mxu0
    %v2699 = vadd.f32 %v2656, %v2698
    %v2700 = vpop.f32.mrf.mxu0
    %v2701 = vadd.f32 %v2658, %v2700
    %v2702 = vpop.f32.mrf.mxu0
    %v2703 = vadd.f32 %v2660, %v2702
    %v2704 = vpop.f32.mrf.mxu0
    %v2705 = vadd.f32 %v2662, %v2704
    %2706 = vdwg.mxu0
    %2707 = vmatprep.subr.bf16.mxu0 %v1856
    %2708 = vmatpush1.bf16.msra.mxu0 %v1855
    %2709 = vmatprep.subr.bf16.mxu0 %v1844
    %2710 = vmatpush1.bf16.msra.mxu0 %v1843
    %2711 = vmatprep.subr.bf16.mxu0 %v1832
    %2712 = vmatpush1.bf16.msra.mxu0 %v1831
    %2713 = vmatprep.subr.bf16.mxu0 %v1820
    %2714 = vmatpush1.bf16.msra.mxu0 %v1819
    %2715 = vmatprep.subr.bf16.mxu0 %v1808
    %2716 = vmatpush1.bf16.msra.mxu0 %v1807
    %2717 = vmatprep.subr.bf16.mxu0 %v1796
    %2718 = vmatpush1.bf16.msra.mxu0 %v1795
    %2719 = vmatprep.subr.bf16.mxu0 %v1784
    %2720 = vmatpush1.bf16.msra.mxu0 %v1783
    %2721 = vmatprep.subr.bf16.mxu0 %v1772
    %2722 = vmatpush1.bf16.msra.mxu0 %v1771
    %2723 = vmatprep.subr.bf16.mxu0 %v1952
    %2724 = vmatpush2.bf16.msra.mxu0 %v1951
    %2725 = vmatprep.subr.bf16.mxu0 %v1940
    %2726 = vmatpush2.bf16.msra.mxu0 %v1939
    %2727 = vmatprep.subr.bf16.mxu0 %v1928
    %2728 = vmatpush2.bf16.msra.mxu0 %v1927
    %2729 = vmatprep.subr.bf16.mxu0 %v1916
    %2730 = vmatpush2.bf16.msra.mxu0 %v1915
    %2731 = vmatprep.subr.bf16.mxu0 %v1904
    %2732 = vmatpush2.bf16.msra.mxu0 %v1903
    %2733 = vmatprep.subr.bf16.mxu0 %v1892
    %2734 = vmatpush2.bf16.msra.mxu0 %v1891
    %2735 = vmatprep.subr.bf16.mxu0 %v1880
    %2736 = vmatpush2.bf16.msra.mxu0 %v1879
    %2737 = vmatprep.subr.bf16.mxu0 %v1868
    %2738 = vmatpush2.bf16.msra.mxu0 %v1867
    %2739 = vmatprep.mubr.bf16.mxu0 %v157
    %2740 = vmatmul.mubr.bf16.gmra.mxu0 %v153
    %v2741 = vpop.f32.mrf.mxu0
    %v2742 = vadd.f32 %v574, %v2741
    %v2743 = vpop.f32.mrf.mxu0
    %v2744 = vadd.f32 %v578, %v2743
    %v2745 = vpop.f32.mrf.mxu0
    %v2746 = vadd.f32 %v574, %v2745
    %v2747 = vpop.f32.mrf.mxu0
    %v2748 = vadd.f32 %v578, %v2747
    %2749 = vdwg.mxu0
    %2750 = vmatprep.subr.bf16.mxu0 %v2048
    %2751 = vmatpush1.bf16.msra.mxu0 %v2047
    %2752 = vmatprep.subr.bf16.mxu0 %v2036
    %2753 = vmatpush1.bf16.msra.mxu0 %v2035
    %2754 = vmatprep.subr.bf16.mxu0 %v2024
    %2755 = vmatpush1.bf16.msra.mxu0 %v2023
    %2756 = vmatprep.subr.bf16.mxu0 %v2012
    %2757 = vmatpush1.bf16.msra.mxu0 %v2011
    %2758 = vmatprep.subr.bf16.mxu0 %v2000
    %2759 = vmatpush1.bf16.msra.mxu0 %v1999
    %2760 = vmatprep.subr.bf16.mxu0 %v1988
    %2761 = vmatpush1.bf16.msra.mxu0 %v1987
    %2762 = vmatprep.subr.bf16.mxu0 %v1976
    %2763 = vmatpush1.bf16.msra.mxu0 %v1975
    %2764 = vmatprep.subr.bf16.mxu0 %v1964
    %2765 = vmatpush1.bf16.msra.mxu0 %v1963
    %2766 = vmatprep.subr.bf16.mxu0 %v2144
    %2767 = vmatpush2.bf16.msra.mxu0 %v2143
    %2768 = vmatprep.subr.bf16.mxu0 %v2132
    %2769 = vmatpush2.bf16.msra.mxu0 %v2131
    %2770 = vmatprep.subr.bf16.mxu0 %v2120
    %2771 = vmatpush2.bf16.msra.mxu0 %v2119
    %2772 = vmatprep.subr.bf16.mxu0 %v2108
    %2773 = vmatpush2.bf16.msra.mxu0 %v2107
    %2774 = vmatprep.subr.bf16.mxu0 %v2096
    %2775 = vmatpush2.bf16.msra.mxu0 %v2095
    %2776 = vmatprep.subr.bf16.mxu0 %v2084
    %2777 = vmatpush2.bf16.msra.mxu0 %v2083
    %2778 = vmatprep.subr.bf16.mxu0 %v2072
    %2779 = vmatpush2.bf16.msra.mxu0 %v2071
    %2780 = vmatprep.subr.bf16.mxu0 %v2060
    %2781 = vmatpush2.bf16.msra.mxu0 %v2059
    %2782 = vmatprep.mubr.bf16.mxu0 %v165
    %2783 = vmatmul.mubr.bf16.gmra.mxu0 %v161
    %v2784 = vpop.f32.mrf.mxu0
    %v2785 = vadd.f32 %v2742, %v2784
    %v2786 = vpop.f32.mrf.mxu0
    %v2787 = vadd.f32 %v2744, %v2786
    %v2788 = vpop.f32.mrf.mxu0
    %v2789 = vadd.f32 %v2746, %v2788
    %v2790 = vpop.f32.mrf.mxu0
    %v2791 = vadd.f32 %v2748, %v2790
    %2792 = vdwg.mxu0
    %2793 = vmatprep.subr.bf16.mxu0 %v1858
    %2794 = vmatpush1.bf16.msra.mxu0 %v1857
    %2795 = vmatprep.subr.bf16.mxu0 %v1846
    %2796 = vmatpush1.bf16.msra.mxu0 %v1845
    %2797 = vmatprep.subr.bf16.mxu0 %v1834
    %2798 = vmatpush1.bf16.msra.mxu0 %v1833
    %2799 = vmatprep.subr.bf16.mxu0 %v1822
    %2800 = vmatpush1.bf16.msra.mxu0 %v1821
    %2801 = vmatprep.subr.bf16.mxu0 %v1810
    %2802 = vmatpush1.bf16.msra.mxu0 %v1809
    %2803 = vmatprep.subr.bf16.mxu0 %v1798
    %2804 = vmatpush1.bf16.msra.mxu0 %v1797
    %2805 = vmatprep.subr.bf16.mxu0 %v1786
    %2806 = vmatpush1.bf16.msra.mxu0 %v1785
    %2807 = vmatprep.subr.bf16.mxu0 %v1774
    %2808 = vmatpush1.bf16.msra.mxu0 %v1773
    %2809 = vmatprep.subr.bf16.mxu0 %v1954
    %2810 = vmatpush2.bf16.msra.mxu0 %v1953
    %2811 = vmatprep.subr.bf16.mxu0 %v1942
    %2812 = vmatpush2.bf16.msra.mxu0 %v1941
    %2813 = vmatprep.subr.bf16.mxu0 %v1930
    %2814 = vmatpush2.bf16.msra.mxu0 %v1929
    %2815 = vmatprep.subr.bf16.mxu0 %v1918
    %2816 = vmatpush2.bf16.msra.mxu0 %v1917
    %2817 = vmatprep.subr.bf16.mxu0 %v1906
    %2818 = vmatpush2.bf16.msra.mxu0 %v1905
    %2819 = vmatprep.subr.bf16.mxu0 %v1894
    %2820 = vmatpush2.bf16.msra.mxu0 %v1893
    %2821 = vmatprep.subr.bf16.mxu0 %v1882
    %2822 = vmatpush2.bf16.msra.mxu0 %v1881
    %2823 = vmatprep.subr.bf16.mxu0 %v1870
    %2824 = vmatpush2.bf16.msra.mxu0 %v1869
    %2825 = vmatprep.mubr.bf16.mxu0 %v157
    %2826 = vmatmul.mubr.bf16.gmra.mxu0 %v153
    %v2827 = vpop.f32.mrf.mxu0
    %v2828 = vadd.f32 %v582, %v2827
    %v2829 = vpop.f32.mrf.mxu0
    %v2830 = vadd.f32 %v586, %v2829
    %v2831 = vpop.f32.mrf.mxu0
    %v2832 = vadd.f32 %v582, %v2831
    %v2833 = vpop.f32.mrf.mxu0
    %v2834 = vadd.f32 %v586, %v2833
    %2835 = vdwg.mxu0
    %2836 = vmatprep.subr.bf16.mxu0 %v2050
    %2837 = vmatpush1.bf16.msra.mxu0 %v2049
    %2838 = vmatprep.subr.bf16.mxu0 %v2038
    %2839 = vmatpush1.bf16.msra.mxu0 %v2037
    %2840 = vmatprep.subr.bf16.mxu0 %v2026
    %2841 = vmatpush1.bf16.msra.mxu0 %v2025
    %2842 = vmatprep.subr.bf16.mxu0 %v2014
    %2843 = vmatpush1.bf16.msra.mxu0 %v2013
    %2844 = vmatprep.subr.bf16.mxu0 %v2002
    %2845 = vmatpush1.bf16.msra.mxu0 %v2001
    %2846 = vmatprep.subr.bf16.mxu0 %v1990
    %2847 = vmatpush1.bf16.msra.mxu0 %v1989
    %2848 = vmatprep.subr.bf16.mxu0 %v1978
    %2849 = vmatpush1.bf16.msra.mxu0 %v1977
    %2850 = vmatprep.subr.bf16.mxu0 %v1966
    %2851 = vmatpush1.bf16.msra.mxu0 %v1965
    %2852 = vmatprep.subr.bf16.mxu0 %v2146
    %2853 = vmatpush2.bf16.msra.mxu0 %v2145
    %2854 = vmatprep.subr.bf16.mxu0 %v2134
    %2855 = vmatpush2.bf16.msra.mxu0 %v2133
    %2856 = vmatprep.subr.bf16.mxu0 %v2122
    %2857 = vmatpush2.bf16.msra.mxu0 %v2121
    %2858 = vmatprep.subr.bf16.mxu0 %v2110
    %2859 = vmatpush2.bf16.msra.mxu0 %v2109
    %2860 = vmatprep.subr.bf16.mxu0 %v2098
    %2861 = vmatpush2.bf16.msra.mxu0 %v2097
    %2862 = vmatprep.subr.bf16.mxu0 %v2086
    %2863 = vmatpush2.bf16.msra.mxu0 %v2085
    %2864 = vmatprep.subr.bf16.mxu0 %v2074
    %2865 = vmatpush2.bf16.msra.mxu0 %v2073
    %2866 = vmatprep.subr.bf16.mxu0 %v2062
    %2867 = vmatpush2.bf16.msra.mxu0 %v2061
    %2868 = vmatprep.mubr.bf16.mxu0 %v165
    %2869 = vmatmul.mubr.bf16.gmra.mxu0 %v161
    %v2870 = vpop.f32.mrf.mxu0
    %v2871 = vadd.f32 %v2828, %v2870
    %v2872 = vpop.f32.mrf.mxu0
    %v2873 = vadd.f32 %v2830, %v2872
    %v2874 = vpop.f32.mrf.mxu0
    %v2875 = vadd.f32 %v2832, %v2874
    %v2876 = vpop.f32.mrf.mxu0
    %v2877 = vadd.f32 %v2834, %v2876
    %2878 = vdwg.mxu0
    %2879 = vmatprep.subr.bf16.mxu0 %v1860
    %2880 = vmatpush1.bf16.msra.mxu0 %v1859
    %2881 = vmatprep.subr.bf16.mxu0 %v1848
    %2882 = vmatpush1.bf16.msra.mxu0 %v1847
    %2883 = vmatprep.subr.bf16.mxu0 %v1836
    %2884 = vmatpush1.bf16.msra.mxu0 %v1835
    %2885 = vmatprep.subr.bf16.mxu0 %v1824
    %2886 = vmatpush1.bf16.msra.mxu0 %v1823
    %2887 = vmatprep.subr.bf16.mxu0 %v1812
    %2888 = vmatpush1.bf16.msra.mxu0 %v1811
    %2889 = vmatprep.subr.bf16.mxu0 %v1800
    %2890 = vmatpush1.bf16.msra.mxu0 %v1799
    %2891 = vmatprep.subr.bf16.mxu0 %v1788
    %2892 = vmatpush1.bf16.msra.mxu0 %v1787
    %2893 = vmatprep.subr.bf16.mxu0 %v1776
    %2894 = vmatpush1.bf16.msra.mxu0 %v1775
    %2895 = vmatprep.subr.bf16.mxu0 %v1956
    %2896 = vmatpush2.bf16.msra.mxu0 %v1955
    %2897 = vmatprep.subr.bf16.mxu0 %v1944
    %2898 = vmatpush2.bf16.msra.mxu0 %v1943
    %2899 = vmatprep.subr.bf16.mxu0 %v1932
    %2900 = vmatpush2.bf16.msra.mxu0 %v1931
    %2901 = vmatprep.subr.bf16.mxu0 %v1920
    %2902 = vmatpush2.bf16.msra.mxu0 %v1919
    %2903 = vmatprep.subr.bf16.mxu0 %v1908
    %2904 = vmatpush2.bf16.msra.mxu0 %v1907
    %2905 = vmatprep.subr.bf16.mxu0 %v1896
    %2906 = vmatpush2.bf16.msra.mxu0 %v1895
    %2907 = vmatprep.subr.bf16.mxu0 %v1884
    %2908 = vmatpush2.bf16.msra.mxu0 %v1883
    %2909 = vmatprep.subr.bf16.mxu0 %v1872
    %2910 = vmatpush2.bf16.msra.mxu0 %v1871
    %2911 = vmatprep.mubr.bf16.mxu0 %v157
    %2912 = vmatmul.mubr.bf16.gmra.mxu0 %v153
    %v2913 = vpop.f32.mrf.mxu0
    %v2914 = vadd.f32 %v590, %v2913
    %v2915 = vpop.f32.mrf.mxu0
    %v2916 = vadd.f32 %v594, %v2915
    %v2917 = vpop.f32.mrf.mxu0
    %v2918 = vadd.f32 %v590, %v2917
    %v2919 = vpop.f32.mrf.mxu0
    %v2920 = vadd.f32 %v594, %v2919
    %2921 = vdwg.mxu0
    %2922 = vmatprep.subr.bf16.mxu0 %v2052
    %2923 = vmatpush1.bf16.msra.mxu0 %v2051
    %2924 = vmatprep.subr.bf16.mxu0 %v2040
    %2925 = vmatpush1.bf16.msra.mxu0 %v2039
    %2926 = vmatprep.subr.bf16.mxu0 %v2028
    %2927 = vmatpush1.bf16.msra.mxu0 %v2027
    %2928 = vmatprep.subr.bf16.mxu0 %v2016
    %2929 = vmatpush1.bf16.msra.mxu0 %v2015
    %2930 = vmatprep.subr.bf16.mxu0 %v2004
    %2931 = vmatpush1.bf16.msra.mxu0 %v2003
    %2932 = vmatprep.subr.bf16.mxu0 %v1992
    %2933 = vmatpush1.bf16.msra.mxu0 %v1991
    %2934 = vmatprep.subr.bf16.mxu0 %v1980
    %2935 = vmatpush1.bf16.msra.mxu0 %v1979
    %2936 = vmatprep.subr.bf16.mxu0 %v1968
    %2937 = vmatpush1.bf16.msra.mxu0 %v1967
    %2938 = vmatprep.subr.bf16.mxu0 %v2148
    %2939 = vmatpush2.bf16.msra.mxu0 %v2147
    %2940 = vmatprep.subr.bf16.mxu0 %v2136
    %2941 = vmatpush2.bf16.msra.mxu0 %v2135
    %2942 = vmatprep.subr.bf16.mxu0 %v2124
    %2943 = vmatpush2.bf16.msra.mxu0 %v2123
    %2944 = vmatprep.subr.bf16.mxu0 %v2112
    %2945 = vmatpush2.bf16.msra.mxu0 %v2111
    %2946 = vmatprep.subr.bf16.mxu0 %v2100
    %2947 = vmatpush2.bf16.msra.mxu0 %v2099
    %2948 = vmatprep.subr.bf16.mxu0 %v2088
    %2949 = vmatpush2.bf16.msra.mxu0 %v2087
    %2950 = vmatprep.subr.bf16.mxu0 %v2076
    %2951 = vmatpush2.bf16.msra.mxu0 %v2075
    %2952 = vmatprep.subr.bf16.mxu0 %v2064
    %2953 = vmatpush2.bf16.msra.mxu0 %v2063
    %2954 = vmatprep.mubr.bf16.mxu0 %v165
    %2955 = vmatmul.mubr.bf16.gmra.mxu0 %v161
    %v2956 = vpop.f32.mrf.mxu0
    %v2957 = vadd.f32 %v2914, %v2956
    %v2958 = vpop.f32.mrf.mxu0
    %v2959 = vadd.f32 %v2916, %v2958
    %v2960 = vpop.f32.mrf.mxu0
    %v2961 = vadd.f32 %v2918, %v2960
    %v2962 = vpop.f32.mrf.mxu0
    %v2963 = vadd.f32 %v2920, %v2962
    %2964 = vdwg.mxu0
    %2965 = vmatprep.subr.bf16.mxu0 %v1862
    %2966 = vmatpush1.bf16.msra.mxu0 %v1861
    %2967 = vmatprep.subr.bf16.mxu0 %v1850
    %2968 = vmatpush1.bf16.msra.mxu0 %v1849
    %2969 = vmatprep.subr.bf16.mxu0 %v1838
    %2970 = vmatpush1.bf16.msra.mxu0 %v1837
    %2971 = vmatprep.subr.bf16.mxu0 %v1826
    %2972 = vmatpush1.bf16.msra.mxu0 %v1825
    %2973 = vmatprep.subr.bf16.mxu0 %v1814
    %2974 = vmatpush1.bf16.msra.mxu0 %v1813
    %2975 = vmatprep.subr.bf16.mxu0 %v1802
    %2976 = vmatpush1.bf16.msra.mxu0 %v1801
    %2977 = vmatprep.subr.bf16.mxu0 %v1790
    %2978 = vmatpush1.bf16.msra.mxu0 %v1789
    %2979 = vmatprep.subr.bf16.mxu0 %v1778
    %2980 = vmatpush1.bf16.msra.mxu0 %v1777
    %2981 = vmatprep.subr.bf16.mxu0 %v1958
    %2982 = vmatpush2.bf16.msra.mxu0 %v1957
    %2983 = vmatprep.subr.bf16.mxu0 %v1946
    %2984 = vmatpush2.bf16.msra.mxu0 %v1945
    %2985 = vmatprep.subr.bf16.mxu0 %v1934
    %2986 = vmatpush2.bf16.msra.mxu0 %v1933
    %2987 = vmatprep.subr.bf16.mxu0 %v1922
    %2988 = vmatpush2.bf16.msra.mxu0 %v1921
    %2989 = vmatprep.subr.bf16.mxu0 %v1910
    %2990 = vmatpush2.bf16.msra.mxu0 %v1909
    %2991 = vmatprep.subr.bf16.mxu0 %v1898
    %2992 = vmatpush2.bf16.msra.mxu0 %v1897
    %2993 = vmatprep.subr.bf16.mxu0 %v1886
    %2994 = vmatpush2.bf16.msra.mxu0 %v1885
    %2995 = vmatprep.subr.bf16.mxu0 %v1874
    %2996 = vmatpush2.bf16.msra.mxu0 %v1873
    %2997 = vmatprep.mubr.bf16.mxu0 %v157
    %2998 = vmatmul.mubr.bf16.gmra.mxu0 %v153
    %v2999 = vpop.f32.mrf.mxu0
    %v3000 = vadd.f32 %v598, %v2999
    %v3001 = vpop.f32.mrf.mxu0
    %v3002 = vadd.f32 %v602, %v3001
    %v3003 = vpop.f32.mrf.mxu0
    %v3004 = vadd.f32 %v598, %v3003
    %v3005 = vpop.f32.mrf.mxu0
    %v3006 = vadd.f32 %v602, %v3005
    %3007 = vdwg.mxu0
    %3008 = vmatprep.subr.bf16.mxu0 %v2054
    %3009 = vmatpush1.bf16.msra.mxu0 %v2053
    %3010 = vmatprep.subr.bf16.mxu0 %v2042
    %3011 = vmatpush1.bf16.msra.mxu0 %v2041
    %3012 = vmatprep.subr.bf16.mxu0 %v2030
    %3013 = vmatpush1.bf16.msra.mxu0 %v2029
    %3014 = vmatprep.subr.bf16.mxu0 %v2018
    %3015 = vmatpush1.bf16.msra.mxu0 %v2017
    %3016 = vmatprep.subr.bf16.mxu0 %v2006
    %3017 = vmatpush1.bf16.msra.mxu0 %v2005
    %3018 = vmatprep.subr.bf16.mxu0 %v1994
    %3019 = vmatpush1.bf16.msra.mxu0 %v1993
    %3020 = vmatprep.subr.bf16.mxu0 %v1982
    %3021 = vmatpush1.bf16.msra.mxu0 %v1981
    %3022 = vmatprep.subr.bf16.mxu0 %v1970
    %3023 = vmatpush1.bf16.msra.mxu0 %v1969
    %3024 = vmatprep.subr.bf16.mxu0 %v2150
    %3025 = vmatpush2.bf16.msra.mxu0 %v2149
    %3026 = vmatprep.subr.bf16.mxu0 %v2138
    %3027 = vmatpush2.bf16.msra.mxu0 %v2137
    %3028 = vmatprep.subr.bf16.mxu0 %v2126
    %3029 = vmatpush2.bf16.msra.mxu0 %v2125
    %3030 = vmatprep.subr.bf16.mxu0 %v2114
    %3031 = vmatpush2.bf16.msra.mxu0 %v2113
    %3032 = vmatprep.subr.bf16.mxu0 %v2102
    %3033 = vmatpush2.bf16.msra.mxu0 %v2101
    %3034 = vmatprep.subr.bf16.mxu0 %v2090
    %3035 = vmatpush2.bf16.msra.mxu0 %v2089
    %3036 = vmatprep.subr.bf16.mxu0 %v2078
    %3037 = vmatpush2.bf16.msra.mxu0 %v2077
    %3038 = vmatprep.subr.bf16.mxu0 %v2066
    %3039 = vmatpush2.bf16.msra.mxu0 %v2065
    %3040 = vmatprep.mubr.bf16.mxu0 %v165
    %3041 = vmatmul.mubr.bf16.gmra.mxu0 %v161
    %v3042 = vpop.f32.mrf.mxu0
    %v3043 = vadd.f32 %v3000, %v3042
    %v3044 = vpop.f32.mrf.mxu0
    %v3045 = vadd.f32 %v3002, %v3044
    %v3046 = vpop.f32.mrf.mxu0
    %v3047 = vadd.f32 %v3004, %v3046
    %v3048 = vpop.f32.mrf.mxu0
    %v3049 = vadd.f32 %v3006, %v3048
    %3050 = vdwg.mxu0
    %v3051 = vpack.c.bf16 %v2613, %v2613
    %v3052 = vpack.c.bf16 %v2615, %v2615
    %v3053 = vpack.c.bf16 %v2699, %v2699
    %v3054 = vpack.c.bf16 %v2701, %v2701
    %v3055 = vpack.c.bf16 %v2789, %v2789
    %v3056 = vpack.c.bf16 %v2791, %v2791
    %v3057 = vpack.c.bf16 %v2875, %v2875
    %v3058 = vpack.c.bf16 %v2877, %v2877
    %3059 = vmatprep.subr.bf16.mxu0 0
    %3060 = vmatpush1.bf16.xpose.msra.mxu0 0
    %3061 = vmatprep.subr.bf16.mxu0 0
    %3062 = vmatpush1.bf16.xpose.msra.mxu0 0
    %3063 = vmatprep.subr.bf16.mxu0 0
    %3064 = vmatpush1.bf16.xpose.msra.mxu0 0
    %3065 = vmatprep.subr.bf16.mxu0 0
    %3066 = vmatpush1.bf16.xpose.msra.mxu0 0
    %3067 = vmatprep.subr.bf16.mxu0 0
    %3068 = vmatpush1.bf16.xpose.msra.mxu0 0
    %3069 = vmatprep.subr.bf16.mxu0 0
    %3070 = vmatpush1.bf16.xpose.msra.mxu0 0
    %3071 = vmatprep.subr.bf16.mxu0 0
    %3072 = vmatpush1.bf16.xpose.msra.mxu0 0
    %3073 = vmatprep.subr.bf16.mxu0 %v3056
    %3074 = vmatpush1.bf16.xpose.msra.mxu0 %v3055
    %3075 = vmatprep.subr.bf16.mxu0 0
    %3076 = vmatpush2.bf16.xpose.msra.mxu0 0
    %3077 = vmatprep.subr.bf16.mxu0 0
    %3078 = vmatpush2.bf16.xpose.msra.mxu0 0
    %3079 = vmatprep.subr.bf16.mxu0 0
    %3080 = vmatpush2.bf16.xpose.msra.mxu0 0
    %3081 = vmatprep.subr.bf16.mxu0 0
    %3082 = vmatpush2.bf16.xpose.msra.mxu0 0
    %3083 = vmatprep.subr.bf16.mxu0 0
    %3084 = vmatpush2.bf16.xpose.msra.mxu0 0
    %3085 = vmatprep.subr.bf16.mxu0 0
    %3086 = vmatpush2.bf16.xpose.msra.mxu0 0
    %3087 = vmatprep.subr.bf16.mxu0 0
    %3088 = vmatpush2.bf16.xpose.msra.mxu0 0
    %3089 = vmatprep.subr.bf16.mxu0 0
    %3090 = vmatpush2.bf16.xpose.msra.mxu0 0
    %3091 = vmatprep.mubr.bf16.mxu0 %v3052
    %3092 = vmatmul.mubr.bf16.gmra.mxu0 %v3051
    %v3093 = vpop.f32.mrf.mxu0
    %v3094 = vadd.f32 0.0, %v3093
    %v3095 = vpop.f32.mrf.mxu0
    %v3096 = vpop.f32.mrf.mxu0
    %v3097 = vpop.f32.mrf.mxu0
    %3098 = vdwg.mxu0
    %3099 = vmatprep.subr.bf16.mxu0 0
    %3100 = vmatpush1.bf16.xpose.msra.mxu0 0
    %3101 = vmatprep.subr.bf16.mxu0 0
    %3102 = vmatpush1.bf16.xpose.msra.mxu0 0
    %3103 = vmatprep.subr.bf16.mxu0 0
    %3104 = vmatpush1.bf16.xpose.msra.mxu0 0
    %3105 = vmatprep.subr.bf16.mxu0 0
    %3106 = vmatpush1.bf16.xpose.msra.mxu0 0
    %3107 = vmatprep.subr.bf16.mxu0 0
    %3108 = vmatpush1.bf16.xpose.msra.mxu0 0
    %3109 = vmatprep.subr.bf16.mxu0 0
    %3110 = vmatpush1.bf16.xpose.msra.mxu0 0
    %3111 = vmatprep.subr.bf16.mxu0 0
    %3112 = vmatpush1.bf16.xpose.msra.mxu0 0
    %3113 = vmatprep.subr.bf16.mxu0 %v3058
    %3114 = vmatpush1.bf16.xpose.msra.mxu0 %v3057
    %3115 = vmatprep.subr.bf16.mxu0 0
    %3116 = vmatpush2.bf16.xpose.msra.mxu0 0
    %3117 = vmatprep.subr.bf16.mxu0 0
    %3118 = vmatpush2.bf16.xpose.msra.mxu0 0
    %3119 = vmatprep.subr.bf16.mxu0 0
    %3120 = vmatpush2.bf16.xpose.msra.mxu0 0
    %3121 = vmatprep.subr.bf16.mxu0 0
    %3122 = vmatpush2.bf16.xpose.msra.mxu0 0
    %3123 = vmatprep.subr.bf16.mxu0 0
    %3124 = vmatpush2.bf16.xpose.msra.mxu0 0
    %3125 = vmatprep.subr.bf16.mxu0 0
    %3126 = vmatpush2.bf16.xpose.msra.mxu0 0
    %3127 = vmatprep.subr.bf16.mxu0 0
    %3128 = vmatpush2.bf16.xpose.msra.mxu0 0
    %3129 = vmatprep.subr.bf16.mxu0 0
    %3130 = vmatpush2.bf16.xpose.msra.mxu0 0
    %3131 = vmatprep.mubr.bf16.mxu0 %v3054
    %3132 = vmatmul.mubr.bf16.gmra.mxu0 %v3053
    %v3133 = vpop.f32.mrf.mxu0
    %v3134 = vadd.f32 %v3094, %v3133
    %v3135 = vpop.f32.mrf.mxu0
    %v3136 = vpop.f32.mrf.mxu0
    %v3137 = vpop.f32.mrf.mxu0
    %3138 = vdwg.mxu0
    %vm3139 = vcmask 64512
    %v3140 = vsel %vm3139, %v3134, -inf
    %3141 = vmax.xlane.f32.xlu0 %v3140
    %v3142 = vpop.xlane.xlu0 %3141
    %v3143 = vsub.f32 %v3134, %v3142
    %v3144 = vmul.f32 %v3143, 1.442695
    %v3145 = vpow.pop %v3144
    %v3146 = vsel %vm3139, %v3145, 0.0
    %3147 = vadd.xlane.f32.xlu0 %v3146
    %v3148 = vpop.xlane.xlu0 %3147
    %v3149 = vrcp.pop %v3148
    %v3150 = vmul.f32 %v3145, %v3149
    %v3151 = vpack.c.bf16 %v3150, %v3150
    %v3152 = vpack.c.bf16 %v2961, %v2961
    %v3153 = vpack.c.bf16 %v2963, %v2963
    %v3154 = vpack.c.bf16 %v3047, %v3047
    %v3155 = vpack.c.bf16 %v3049, %v3049
    %v3157 = vsel %vm3139, %v3151, 0
    %v3160 = vsel %vm150, %v3152, 0
    %v3163 = vsel %vm150, %v3153, 0
    %v3166 = vsel %vm150, %v3154, 0
    %v3169 = vsel %vm150, %v3155, 0
    %3171 = vmatprep.subr.bf16.mxu0 0
    %3172 = vmatpush1.bf16.msra.mxu0 0
    %3173 = vmatprep.subr.bf16.mxu0 0
    %3174 = vmatpush1.bf16.msra.mxu0 0
    %3175 = vmatprep.subr.bf16.mxu0 0
    %3176 = vmatpush1.bf16.msra.mxu0 0
    %3177 = vmatprep.subr.bf16.mxu0 0
    %3178 = vmatpush1.bf16.msra.mxu0 0
    %3179 = vmatprep.subr.bf16.mxu0 0
    %3180 = vmatpush1.bf16.msra.mxu0 0
    %3181 = vmatprep.subr.bf16.mxu0 0
    %3182 = vmatpush1.bf16.msra.mxu0 0
    %3183 = vmatprep.subr.bf16.mxu0 0
    %3184 = vmatpush1.bf16.msra.mxu0 0
    %3185 = vmatprep.subr.bf16.mxu0 %v3163
    %3186 = vmatpush1.bf16.msra.mxu0 %v3160
    %3187 = vmatprep.subr.bf16.mxu0 0
    %3188 = vmatpush2.bf16.msra.mxu0 0
    %3189 = vmatprep.subr.bf16.mxu0 0
    %3190 = vmatpush2.bf16.msra.mxu0 0
    %3191 = vmatprep.subr.bf16.mxu0 0
    %3192 = vmatpush2.bf16.msra.mxu0 0
    %3193 = vmatprep.subr.bf16.mxu0 0
    %3194 = vmatpush2.bf16.msra.mxu0 0
    %3195 = vmatprep.subr.bf16.mxu0 0
    %3196 = vmatpush2.bf16.msra.mxu0 0
    %3197 = vmatprep.subr.bf16.mxu0 0
    %3198 = vmatpush2.bf16.msra.mxu0 0
    %3199 = vmatprep.subr.bf16.mxu0 0
    %3200 = vmatpush2.bf16.msra.mxu0 0
    %3201 = vmatprep.subr.bf16.mxu0 0
    %3202 = vmatpush2.bf16.msra.mxu0 0
    %3203 = vmatprep.mubr.bf16.mxu0 0
    %3204 = vmatmul.mubr.bf16.gmra.mxu0 %v3157
    %v3205 = vpop.f32.mrf.mxu0
    %v3206 = vadd.f32 0.0, %v3205
    %v3207 = vpop.f32.mrf.mxu0
    %v3208 = vadd.f32 0.0, %v3207
    %v3209 = vpop.f32.mrf.mxu0
    %v3210 = vpop.f32.mrf.mxu0
    %3211 = vdwg.mxu0
    %3212 = vmatprep.subr.bf16.mxu0 0
    %3213 = vmatpush1.bf16.msra.mxu0 0
    %3214 = vmatprep.subr.bf16.mxu0 0
    %3215 = vmatpush1.bf16.msra.mxu0 0
    %3216 = vmatprep.subr.bf16.mxu0 0
    %3217 = vmatpush1.bf16.msra.mxu0 0
    %3218 = vmatprep.subr.bf16.mxu0 0
    %3219 = vmatpush1.bf16.msra.mxu0 0
    %3220 = vmatprep.subr.bf16.mxu0 0
    %3221 = vmatpush1.bf16.msra.mxu0 0
    %3222 = vmatprep.subr.bf16.mxu0 0
    %3223 = vmatpush1.bf16.msra.mxu0 0
    %3224 = vmatprep.subr.bf16.mxu0 0
    %3225 = vmatpush1.bf16.msra.mxu0 0
    %3226 = vmatprep.subr.bf16.mxu0 %v3169
    %3227 = vmatpush1.bf16.msra.mxu0 %v3166
    %3228 = vmatprep.subr.bf16.mxu0 0
    %3229 = vmatpush2.bf16.msra.mxu0 0
    %3230 = vmatprep.subr.bf16.mxu0 0
    %3231 = vmatpush2.bf16.msra.mxu0 0
    %3232 = vmatprep.subr.bf16.mxu0 0
    %3233 = vmatpush2.bf16.msra.mxu0 0
    %3234 = vmatprep.subr.bf16.mxu0 0
    %3235 = vmatpush2.bf16.msra.mxu0 0
    %3236 = vmatprep.subr.bf16.mxu0 0
    %3237 = vmatpush2.bf16.msra.mxu0 0
    %3238 = vmatprep.subr.bf16.mxu0 0
    %3239 = vmatpush2.bf16.msra.mxu0 0
    %3240 = vmatprep.subr.bf16.mxu0 0
    %3241 = vmatpush2.bf16.msra.mxu0 0
    %3242 = vmatprep.subr.bf16.mxu0 0
    %3243 = vmatpush2.bf16.msra.mxu0 0
    %3244 = vmatprep.mubr.bf16.mxu0 0
    %3245 = vmatmul.mubr.bf16.gmra.mxu0 %v3157
    %v3246 = vpop.f32.mrf.mxu0
    %v3247 = vadd.f32 0.0, %v3246
    %v3248 = vpop.f32.mrf.mxu0
    %v3249 = vadd.f32 0.0, %v3248
    %v3250 = vpop.f32.mrf.mxu0
    %v3251 = vpop.f32.mrf.mxu0
    %3252 = vdwg.mxu0
    %v3253 = vpack.c.bf16 %v2617, %v2617
    %v3254 = vpack.c.bf16 %v2619, %v2619
    %v3255 = vpack.c.bf16 %v2703, %v2703
    %v3256 = vpack.c.bf16 %v2705, %v2705
    %v3257 = vpack.c.bf16 %v2785, %v2785
    %v3258 = vpack.c.bf16 %v2787, %v2787
    %v3259 = vpack.c.bf16 %v2871, %v2871
    %v3260 = vpack.c.bf16 %v2873, %v2873
    %3261 = vmatprep.subr.bf16.mxu0 0
    %3262 = vmatpush1.bf16.xpose.msra.mxu0 0
    %3263 = vmatprep.subr.bf16.mxu0 0
    %3264 = vmatpush1.bf16.xpose.msra.mxu0 0
    %3265 = vmatprep.subr.bf16.mxu0 0
    %3266 = vmatpush1.bf16.xpose.msra.mxu0 0
    %3267 = vmatprep.subr.bf16.mxu0 0
    %3268 = vmatpush1.bf16.xpose.msra.mxu0 0
    %3269 = vmatprep.subr.bf16.mxu0 0
    %3270 = vmatpush1.bf16.xpose.msra.mxu0 0
    %3271 = vmatprep.subr.bf16.mxu0 0
    %3272 = vmatpush1.bf16.xpose.msra.mxu0 0
    %3273 = vmatprep.subr.bf16.mxu0 0
    %3274 = vmatpush1.bf16.xpose.msra.mxu0 0
    %3275 = vmatprep.subr.bf16.mxu0 %v3258
    %3276 = vmatpush1.bf16.xpose.msra.mxu0 %v3257
    %3277 = vmatprep.subr.bf16.mxu0 0
    %3278 = vmatpush2.bf16.xpose.msra.mxu0 0
    %3279 = vmatprep.subr.bf16.mxu0 0
    %3280 = vmatpush2.bf16.xpose.msra.mxu0 0
    %3281 = vmatprep.subr.bf16.mxu0 0
    %3282 = vmatpush2.bf16.xpose.msra.mxu0 0
    %3283 = vmatprep.subr.bf16.mxu0 0
    %3284 = vmatpush2.bf16.xpose.msra.mxu0 0
    %3285 = vmatprep.subr.bf16.mxu0 0
    %3286 = vmatpush2.bf16.xpose.msra.mxu0 0
    %3287 = vmatprep.subr.bf16.mxu0 0
    %3288 = vmatpush2.bf16.xpose.msra.mxu0 0
    %3289 = vmatprep.subr.bf16.mxu0 0
    %3290 = vmatpush2.bf16.xpose.msra.mxu0 0
    %3291 = vmatprep.subr.bf16.mxu0 0
    %3292 = vmatpush2.bf16.xpose.msra.mxu0 0
    %3293 = vmatprep.mubr.bf16.mxu0 %v3254
    %3294 = vmatmul.mubr.bf16.gmra.mxu0 %v3253
    %v3295 = vpop.f32.mrf.mxu0
    %v3296 = vadd.f32 0.0, %v3295
    %v3297 = vpop.f32.mrf.mxu0
    %v3298 = vpop.f32.mrf.mxu0
    %v3299 = vpop.f32.mrf.mxu0
    %3300 = vdwg.mxu0
    %3301 = vmatprep.subr.bf16.mxu0 0
    %3302 = vmatpush1.bf16.xpose.msra.mxu0 0
    %3303 = vmatprep.subr.bf16.mxu0 0
    %3304 = vmatpush1.bf16.xpose.msra.mxu0 0
    %3305 = vmatprep.subr.bf16.mxu0 0
    %3306 = vmatpush1.bf16.xpose.msra.mxu0 0
    %3307 = vmatprep.subr.bf16.mxu0 0
    %3308 = vmatpush1.bf16.xpose.msra.mxu0 0
    %3309 = vmatprep.subr.bf16.mxu0 0
    %3310 = vmatpush1.bf16.xpose.msra.mxu0 0
    %3311 = vmatprep.subr.bf16.mxu0 0
    %3312 = vmatpush1.bf16.xpose.msra.mxu0 0
    %3313 = vmatprep.subr.bf16.mxu0 0
    %3314 = vmatpush1.bf16.xpose.msra.mxu0 0
    %3315 = vmatprep.subr.bf16.mxu0 %v3260
    %3316 = vmatpush1.bf16.xpose.msra.mxu0 %v3259
    %3317 = vmatprep.subr.bf16.mxu0 0
    %3318 = vmatpush2.bf16.xpose.msra.mxu0 0
    %3319 = vmatprep.subr.bf16.mxu0 0
    %3320 = vmatpush2.bf16.xpose.msra.mxu0 0
    %3321 = vmatprep.subr.bf16.mxu0 0
    %3322 = vmatpush2.bf16.xpose.msra.mxu0 0
    %3323 = vmatprep.subr.bf16.mxu0 0
    %3324 = vmatpush2.bf16.xpose.msra.mxu0 0
    %3325 = vmatprep.subr.bf16.mxu0 0
    %3326 = vmatpush2.bf16.xpose.msra.mxu0 0
    %3327 = vmatprep.subr.bf16.mxu0 0
    %3328 = vmatpush2.bf16.xpose.msra.mxu0 0
    %3329 = vmatprep.subr.bf16.mxu0 0
    %3330 = vmatpush2.bf16.xpose.msra.mxu0 0
    %3331 = vmatprep.subr.bf16.mxu0 0
    %3332 = vmatpush2.bf16.xpose.msra.mxu0 0
    %3333 = vmatprep.mubr.bf16.mxu0 %v3256
    %3334 = vmatmul.mubr.bf16.gmra.mxu0 %v3255
    %v3335 = vpop.f32.mrf.mxu0
    %v3336 = vadd.f32 %v3296, %v3335
    %v3337 = vpop.f32.mrf.mxu0
    %v3338 = vpop.f32.mrf.mxu0
    %v3339 = vpop.f32.mrf.mxu0
    %3340 = vdwg.mxu0
    %v3341 = vsel %vm3139, %v3336, -inf
    %3342 = vmax.xlane.f32.xlu0 %v3341
    %v3343 = vpop.xlane.xlu0 %3342
    %v3344 = vsub.f32 %v3336, %v3343
    %v3345 = vmul.f32 %v3344, 1.442695
    %v3346 = vpow.pop %v3345
    %v3347 = vsel %vm3139, %v3346, 0.0
    %3348 = vadd.xlane.f32.xlu0 %v3347
    %v3349 = vpop.xlane.xlu0 %3348
    %v3350 = vrcp.pop %v3349
    %v3351 = vmul.f32 %v3346, %v3350
    %v3352 = vpack.c.bf16 %v3351, %v3351
    %v3353 = vpack.c.bf16 %v2957, %v2957
    %v3354 = vpack.c.bf16 %v2959, %v2959
    %v3355 = vpack.c.bf16 %v3043, %v3043
    %v3356 = vpack.c.bf16 %v3045, %v3045
    %v3358 = vsel %vm3139, %v3352, 0
    %v3361 = vsel %vm150, %v3353, 0
    %v3364 = vsel %vm150, %v3354, 0
    %v3367 = vsel %vm150, %v3355, 0
    %v3370 = vsel %vm150, %v3356, 0
    %3372 = vmatprep.subr.bf16.mxu0 0
    %3373 = vmatpush1.bf16.msra.mxu0 0
    %3374 = vmatprep.subr.bf16.mxu0 0
    %3375 = vmatpush1.bf16.msra.mxu0 0
    %3376 = vmatprep.subr.bf16.mxu0 0
    %3377 = vmatpush1.bf16.msra.mxu0 0
    %3378 = vmatprep.subr.bf16.mxu0 0
    %3379 = vmatpush1.bf16.msra.mxu0 0
    %3380 = vmatprep.subr.bf16.mxu0 0
    %3381 = vmatpush1.bf16.msra.mxu0 0
    %3382 = vmatprep.subr.bf16.mxu0 0
    %3383 = vmatpush1.bf16.msra.mxu0 0
    %3384 = vmatprep.subr.bf16.mxu0 0
    %3385 = vmatpush1.bf16.msra.mxu0 0
    %3386 = vmatprep.subr.bf16.mxu0 %v3364
    %3387 = vmatpush1.bf16.msra.mxu0 %v3361
    %3388 = vmatprep.subr.bf16.mxu0 0
    %3389 = vmatpush2.bf16.msra.mxu0 0
    %3390 = vmatprep.subr.bf16.mxu0 0
    %3391 = vmatpush2.bf16.msra.mxu0 0
    %3392 = vmatprep.subr.bf16.mxu0 0
    %3393 = vmatpush2.bf16.msra.mxu0 0
    %3394 = vmatprep.subr.bf16.mxu0 0
    %3395 = vmatpush2.bf16.msra.mxu0 0
    %3396 = vmatprep.subr.bf16.mxu0 0
    %3397 = vmatpush2.bf16.msra.mxu0 0
    %3398 = vmatprep.subr.bf16.mxu0 0
    %3399 = vmatpush2.bf16.msra.mxu0 0
    %3400 = vmatprep.subr.bf16.mxu0 0
    %3401 = vmatpush2.bf16.msra.mxu0 0
    %3402 = vmatprep.subr.bf16.mxu0 0
    %3403 = vmatpush2.bf16.msra.mxu0 0
    %3404 = vmatprep.mubr.bf16.mxu0 0
    %3405 = vmatmul.mubr.bf16.gmra.mxu0 %v3358
    %v3406 = vpop.f32.mrf.mxu0
    %v3407 = vadd.f32 0.0, %v3406
    %v3408 = vpop.f32.mrf.mxu0
    %v3409 = vadd.f32 0.0, %v3408
    %v3410 = vpop.f32.mrf.mxu0
    %v3411 = vpop.f32.mrf.mxu0
    %3412 = vdwg.mxu0
    %3413 = vmatprep.subr.bf16.mxu0 0
    %3414 = vmatpush1.bf16.msra.mxu0 0
    %3415 = vmatprep.subr.bf16.mxu0 0
    %3416 = vmatpush1.bf16.msra.mxu0 0
    %3417 = vmatprep.subr.bf16.mxu0 0
    %3418 = vmatpush1.bf16.msra.mxu0 0
    %3419 = vmatprep.subr.bf16.mxu0 0
    %3420 = vmatpush1.bf16.msra.mxu0 0
    %3421 = vmatprep.subr.bf16.mxu0 0
    %3422 = vmatpush1.bf16.msra.mxu0 0
    %3423 = vmatprep.subr.bf16.mxu0 0
    %3424 = vmatpush1.bf16.msra.mxu0 0
    %3425 = vmatprep.subr.bf16.mxu0 0
    %3426 = vmatpush1.bf16.msra.mxu0 0
    %3427 = vmatprep.subr.bf16.mxu0 %v3370
    %3428 = vmatpush1.bf16.msra.mxu0 %v3367
    %3429 = vmatprep.subr.bf16.mxu0 0
    %3430 = vmatpush2.bf16.msra.mxu0 0
    %3431 = vmatprep.subr.bf16.mxu0 0
    %3432 = vmatpush2.bf16.msra.mxu0 0
    %3433 = vmatprep.subr.bf16.mxu0 0
    %3434 = vmatpush2.bf16.msra.mxu0 0
    %3435 = vmatprep.subr.bf16.mxu0 0
    %3436 = vmatpush2.bf16.msra.mxu0 0
    %3437 = vmatprep.subr.bf16.mxu0 0
    %3438 = vmatpush2.bf16.msra.mxu0 0
    %3439 = vmatprep.subr.bf16.mxu0 0
    %3440 = vmatpush2.bf16.msra.mxu0 0
    %3441 = vmatprep.subr.bf16.mxu0 0
    %3442 = vmatpush2.bf16.msra.mxu0 0
    %3443 = vmatprep.subr.bf16.mxu0 0
    %3444 = vmatpush2.bf16.msra.mxu0 0
    %3445 = vmatprep.mubr.bf16.mxu0 0
    %3446 = vmatmul.mubr.bf16.gmra.mxu0 %v3358
    %v3447 = vpop.f32.mrf.mxu0
    %v3448 = vadd.f32 0.0, %v3447
    %v3449 = vpop.f32.mrf.mxu0
    %v3450 = vadd.f32 0.0, %v3449
    %v3451 = vpop.f32.mrf.mxu0
    %v3452 = vpop.f32.mrf.mxu0
    %3453 = vdwg.mxu0
    %v3454 = vpack.c.bf16 %v3206, %v3206
    %v3455 = vpack.c.bf16 %v3208, %v3208
    %v3456 = vpack.c.bf16 %v3247, %v3247
    %v3457 = vpack.c.bf16 %v3249, %v3249
    %v3458 = vpack.c.bf16 %v3407, %v3407
    %v3459 = vpack.c.bf16 %v3409, %v3409
    %v3460 = vpack.c.bf16 %v3448, %v3448
    %v3461 = vpack.c.bf16 %v3450, %v3450
    %v3462 = vld [vmem:[#allocation10] sm:$0xff]
    %v3463 = vld [vmem:[#allocation10 + $0x8] sm:$0xff]
    %v3464 = vld [vmem:[#allocation10 + $0x10] sm:$0xff]
    %v3465 = vld [vmem:[#allocation10 + $0x18] sm:$0xff]
    %v3466 = vld [vmem:[#allocation10 + $0x20] sm:$0xff]
    %v3467 = vld [vmem:[#allocation10 + $0x28] sm:$0xff]
    %v3468 = vld [vmem:[#allocation10 + $0x30] sm:$0xff]
    %v3469 = vld [vmem:[#allocation10 + $0x38] sm:$0xff]
    %v3470 = vld [vmem:[#allocation10 + $0x40] sm:$0xff]
    %v3471 = vld [vmem:[#allocation10 + $0x48] sm:$0xff]
    %v3472 = vld [vmem:[#allocation10 + $0x50] sm:$0xff]
    %v3473 = vld [vmem:[#allocation10 + $0x58] sm:$0xff]
    %v3474 = vld [vmem:[#allocation12] sm:$0x1]
    %v3476 = vlaneseq
    %v3477 = vshrl.u32 %v3476, 7
    %v3478 = vsub.s32 0, %v3477
    %v3479 = vrot.slane %v3474, %v3478
    %v3493 = vunpack.c.l.b16 %v3462
    %v3494 = vunpack.c.h.b16 %v3462
    %v3495 = vunpack.c.l.b16 %v3463
    %v3496 = vunpack.c.h.b16 %v3463
    %v3497 = vunpack.c.l.b16 %v3464
    %v3498 = vunpack.c.h.b16 %v3464
    %v3499 = vunpack.c.l.b16 %v3465
    %v3500 = vunpack.c.h.b16 %v3465
    %v3501 = vunpack.c.l.b16 %v3466
    %v3502 = vunpack.c.h.b16 %v3466
    %v3503 = vunpack.c.l.b16 %v3467
    %v3504 = vunpack.c.h.b16 %v3467
    %v3505 = vunpack.c.l.b16 %v3468
    %v3506 = vunpack.c.h.b16 %v3468
    %v3507 = vunpack.c.l.b16 %v3469
    %v3508 = vunpack.c.h.b16 %v3469
    %v3509 = vunpack.c.l.b16 %v3470
    %v3510 = vunpack.c.h.b16 %v3470
    %v3511 = vunpack.c.l.b16 %v3471
    %v3512 = vunpack.c.h.b16 %v3471
    %v3513 = vunpack.c.l.b16 %v3472
    %v3514 = vunpack.c.h.b16 %v3472
    %v3515 = vunpack.c.l.b16 %v3473
    %v3516 = vunpack.c.h.b16 %v3473
    %v3517 = vpack.c.b16 %v3493, %v3493
    %v3518 = vpack.c.b16 %v3494, %v3494
    %v3519 = vpack.c.b16 %v3495, %v3495
    %v3520 = vpack.c.b16 %v3496, %v3496
    %v3521 = vpack.c.b16 %v3497, %v3497
    %v3522 = vpack.c.b16 %v3498, %v3498
    %v3523 = vpack.c.b16 %v3499, %v3499
    %v3524 = vpack.c.b16 %v3500, %v3500
    %v3525 = vpack.c.b16 %v3501, %v3501
    %v3526 = vpack.c.b16 %v3502, %v3502
    %v3527 = vpack.c.b16 %v3503, %v3503
    %v3528 = vpack.c.b16 %v3504, %v3504
    %v3529 = vpack.c.b16 %v3505, %v3505
    %v3530 = vpack.c.b16 %v3506, %v3506
    %v3531 = vpack.c.b16 %v3507, %v3507
    %v3532 = vpack.c.b16 %v3508, %v3508
    %v3533 = vpack.c.b16 %v3509, %v3509
    %v3534 = vpack.c.b16 %v3510, %v3510
    %v3535 = vpack.c.b16 %v3511, %v3511
    %v3536 = vpack.c.b16 %v3512, %v3512
    %v3537 = vpack.c.b16 %v3513, %v3513
    %v3538 = vpack.c.b16 %v3514, %v3514
    %v3539 = vpack.c.b16 %v3515, %v3515
    %v3540 = vpack.c.b16 %v3516, %v3516
    %3565 = vmatprep.subr.bf16.mxu0 0
    %3566 = vmatpush1.bf16.xpose.msra.mxu0 0
    %3567 = vmatprep.subr.bf16.mxu0 0
    %3568 = vmatpush1.bf16.xpose.msra.mxu0 0
    %3569 = vmatprep.subr.bf16.mxu0 0
    %3570 = vmatpush1.bf16.xpose.msra.mxu0 0
    %3571 = vmatprep.subr.bf16.mxu0 0
    %3572 = vmatpush1.bf16.xpose.msra.mxu0 0
    %3573 = vmatprep.subr.bf16.mxu0 0
    %3574 = vmatpush1.bf16.xpose.msra.mxu0 0
    %3575 = vmatprep.subr.bf16.mxu0 0
    %3576 = vmatpush1.bf16.xpose.msra.mxu0 0
    %3577 = vmatprep.subr.bf16.mxu0 0
    %3578 = vmatpush1.bf16.xpose.msra.mxu0 0
    %3579 = vmatprep.subr.bf16.mxu0 %v3518
    %3580 = vmatpush1.bf16.xpose.msra.mxu0 %v3517
    %3581 = vmatprep.subr.bf16.mxu0 0
    %3582 = vmatpush2.bf16.xpose.msra.mxu0 0
    %3583 = vmatprep.subr.bf16.mxu0 0
    %3584 = vmatpush2.bf16.xpose.msra.mxu0 0
    %3585 = vmatprep.subr.bf16.mxu0 0
    %3586 = vmatpush2.bf16.xpose.msra.mxu0 0
    %3587 = vmatprep.subr.bf16.mxu0 0
    %3588 = vmatpush2.bf16.xpose.msra.mxu0 0
    %3589 = vmatprep.subr.bf16.mxu0 0
    %3590 = vmatpush2.bf16.xpose.msra.mxu0 0
    %3591 = vmatprep.subr.bf16.mxu0 0
    %3592 = vmatpush2.bf16.xpose.msra.mxu0 0
    %3593 = vmatprep.subr.bf16.mxu0 0
    %3594 = vmatpush2.bf16.xpose.msra.mxu0 0
    %3595 = vmatprep.subr.bf16.mxu0 0
    %3596 = vmatpush2.bf16.xpose.msra.mxu0 0
    %3597 = vmatprep.mubr.bf16.mxu0 %v115
    %3598 = vmatmul.mubr.bf16.gmra.mxu0 %v114
    %v3599 = vpop.f32.mrf.mxu0
    %v3600 = vadd.f32 %v3479, %v3599
    %v3601 = vpop.f32.mrf.mxu0
    %v3602 = vpop.f32.mrf.mxu0
    %v3603 = vpop.f32.mrf.mxu0
    %3604 = vdwg.mxu0
    %3605 = vmatprep.subr.bf16.mxu0 0
    %3606 = vmatpush1.bf16.xpose.msra.mxu0 0
    %3607 = vmatprep.subr.bf16.mxu0 0
    %3608 = vmatpush1.bf16.xpose.msra.mxu0 0
    %3609 = vmatprep.subr.bf16.mxu0 0
    %3610 = vmatpush1.bf16.xpose.msra.mxu0 0
    %3611 = vmatprep.subr.bf16.mxu0 0
    %3612 = vmatpush1.bf16.xpose.msra.mxu0 0
    %3613 = vmatprep.subr.bf16.mxu0 0
    %3614 = vmatpush1.bf16.xpose.msra.mxu0 0
    %3615 = vmatprep.subr.bf16.mxu0 0
    %3616 = vmatpush1.bf16.xpose.msra.mxu0 0
    %3617 = vmatprep.subr.bf16.mxu0 0
    %3618 = vmatpush1.bf16.xpose.msra.mxu0 0
    %3619 = vmatprep.subr.bf16.mxu0 %v3520
    %3620 = vmatpush1.bf16.xpose.msra.mxu0 %v3519
    %3621 = vmatprep.subr.bf16.mxu0 0
    %3622 = vmatpush2.bf16.xpose.msra.mxu0 0
    %3623 = vmatprep.subr.bf16.mxu0 0
    %3624 = vmatpush2.bf16.xpose.msra.mxu0 0
    %3625 = vmatprep.subr.bf16.mxu0 0
    %3626 = vmatpush2.bf16.xpose.msra.mxu0 0
    %3627 = vmatprep.subr.bf16.mxu0 0
    %3628 = vmatpush2.bf16.xpose.msra.mxu0 0
    %3629 = vmatprep.subr.bf16.mxu0 0
    %3630 = vmatpush2.bf16.xpose.msra.mxu0 0
    %3631 = vmatprep.subr.bf16.mxu0 0
    %3632 = vmatpush2.bf16.xpose.msra.mxu0 0
    %3633 = vmatprep.subr.bf16.mxu0 0
    %3634 = vmatpush2.bf16.xpose.msra.mxu0 0
    %3635 = vmatprep.subr.bf16.mxu0 0
    %3636 = vmatpush2.bf16.xpose.msra.mxu0 0
    %3637 = vmatprep.mubr.bf16.mxu0 %v117
    %3638 = vmatmul.mubr.bf16.gmra.mxu0 %v116
    %v3639 = vpop.f32.mrf.mxu0
    %v3640 = vadd.f32 %v3600, %v3639
    %v3641 = vpop.f32.mrf.mxu0
    %v3642 = vpop.f32.mrf.mxu0
    %v3643 = vpop.f32.mrf.mxu0
    %3644 = vdwg.mxu0
    %3645 = vmatprep.subr.bf16.mxu0 0
    %3646 = vmatpush1.bf16.xpose.msra.mxu0 0
    %3647 = vmatprep.subr.bf16.mxu0 0
    %3648 = vmatpush1.bf16.xpose.msra.mxu0 0
    %3649 = vmatprep.subr.bf16.mxu0 0
    %3650 = vmatpush1.bf16.xpose.msra.mxu0 0
    %3651 = vmatprep.subr.bf16.mxu0 0
    %3652 = vmatpush1.bf16.xpose.msra.mxu0 0
    %3653 = vmatprep.subr.bf16.mxu0 0
    %3654 = vmatpush1.bf16.xpose.msra.mxu0 0
    %3655 = vmatprep.subr.bf16.mxu0 0
    %3656 = vmatpush1.bf16.xpose.msra.mxu0 0
    %3657 = vmatprep.subr.bf16.mxu0 0
    %3658 = vmatpush1.bf16.xpose.msra.mxu0 0
    %3659 = vmatprep.subr.bf16.mxu0 %v3522
    %3660 = vmatpush1.bf16.xpose.msra.mxu0 %v3521
    %3661 = vmatprep.subr.bf16.mxu0 0
    %3662 = vmatpush2.bf16.xpose.msra.mxu0 0
    %3663 = vmatprep.subr.bf16.mxu0 0
    %3664 = vmatpush2.bf16.xpose.msra.mxu0 0
    %3665 = vmatprep.subr.bf16.mxu0 0
    %3666 = vmatpush2.bf16.xpose.msra.mxu0 0
    %3667 = vmatprep.subr.bf16.mxu0 0
    %3668 = vmatpush2.bf16.xpose.msra.mxu0 0
    %3669 = vmatprep.subr.bf16.mxu0 0
    %3670 = vmatpush2.bf16.xpose.msra.mxu0 0
    %3671 = vmatprep.subr.bf16.mxu0 0
    %3672 = vmatpush2.bf16.xpose.msra.mxu0 0
    %3673 = vmatprep.subr.bf16.mxu0 0
    %3674 = vmatpush2.bf16.xpose.msra.mxu0 0
    %3675 = vmatprep.subr.bf16.mxu0 0
    %3676 = vmatpush2.bf16.xpose.msra.mxu0 0
    %3677 = vmatprep.mubr.bf16.mxu0 %v123
    %3678 = vmatmul.mubr.bf16.gmra.mxu0 %v122
    %v3679 = vpop.f32.mrf.mxu0
    %v3680 = vadd.f32 %v3640, %v3679
    %v3681 = vpop.f32.mrf.mxu0
    %v3682 = vpop.f32.mrf.mxu0
    %v3683 = vpop.f32.mrf.mxu0
    %3684 = vdwg.mxu0
    %3685 = vmatprep.subr.bf16.mxu0 0
    %3686 = vmatpush1.bf16.xpose.msra.mxu0 0
    %3687 = vmatprep.subr.bf16.mxu0 0
    %3688 = vmatpush1.bf16.xpose.msra.mxu0 0
    %3689 = vmatprep.subr.bf16.mxu0 0
    %3690 = vmatpush1.bf16.xpose.msra.mxu0 0
    %3691 = vmatprep.subr.bf16.mxu0 0
    %3692 = vmatpush1.bf16.xpose.msra.mxu0 0
    %3693 = vmatprep.subr.bf16.mxu0 0
    %3694 = vmatpush1.bf16.xpose.msra.mxu0 0
    %3695 = vmatprep.subr.bf16.mxu0 0
    %3696 = vmatpush1.bf16.xpose.msra.mxu0 0
    %3697 = vmatprep.subr.bf16.mxu0 0
    %3698 = vmatpush1.bf16.xpose.msra.mxu0 0
    %3699 = vmatprep.subr.bf16.mxu0 %v3524
    %3700 = vmatpush1.bf16.xpose.msra.mxu0 %v3523
    %3701 = vmatprep.subr.bf16.mxu0 0
    %3702 = vmatpush2.bf16.xpose.msra.mxu0 0
    %3703 = vmatprep.subr.bf16.mxu0 0
    %3704 = vmatpush2.bf16.xpose.msra.mxu0 0
    %3705 = vmatprep.subr.bf16.mxu0 0
    %3706 = vmatpush2.bf16.xpose.msra.mxu0 0
    %3707 = vmatprep.subr.bf16.mxu0 0
    %3708 = vmatpush2.bf16.xpose.msra.mxu0 0
    %3709 = vmatprep.subr.bf16.mxu0 0
    %3710 = vmatpush2.bf16.xpose.msra.mxu0 0
    %3711 = vmatprep.subr.bf16.mxu0 0
    %3712 = vmatpush2.bf16.xpose.msra.mxu0 0
    %3713 = vmatprep.subr.bf16.mxu0 0
    %3714 = vmatpush2.bf16.xpose.msra.mxu0 0
    %3715 = vmatprep.subr.bf16.mxu0 0
    %3716 = vmatpush2.bf16.xpose.msra.mxu0 0
    %3717 = vmatprep.mubr.bf16.mxu0 %v125
    %3718 = vmatmul.mubr.bf16.gmra.mxu0 %v124
    %v3719 = vpop.f32.mrf.mxu0
    %v3720 = vadd.f32 %v3680, %v3719
    %v3721 = vpop.f32.mrf.mxu0
    %v3722 = vpop.f32.mrf.mxu0
    %v3723 = vpop.f32.mrf.mxu0
    %3724 = vdwg.mxu0
    %3725 = vmatprep.subr.bf16.mxu0 0
    %3726 = vmatpush1.bf16.xpose.msra.mxu0 0
    %3727 = vmatprep.subr.bf16.mxu0 0
    %3728 = vmatpush1.bf16.xpose.msra.mxu0 0
    %3729 = vmatprep.subr.bf16.mxu0 0
    %3730 = vmatpush1.bf16.xpose.msra.mxu0 0
    %3731 = vmatprep.subr.bf16.mxu0 0
    %3732 = vmatpush1.bf16.xpose.msra.mxu0 0
    %3733 = vmatprep.subr.bf16.mxu0 0
    %3734 = vmatpush1.bf16.xpose.msra.mxu0 0
    %3735 = vmatprep.subr.bf16.mxu0 0
    %3736 = vmatpush1.bf16.xpose.msra.mxu0 0
    %3737 = vmatprep.subr.bf16.mxu0 0
    %3738 = vmatpush1.bf16.xpose.msra.mxu0 0
    %3739 = vmatprep.subr.bf16.mxu0 %v3526
    %3740 = vmatpush1.bf16.xpose.msra.mxu0 %v3525
    %3741 = vmatprep.subr.bf16.mxu0 0
    %3742 = vmatpush2.bf16.xpose.msra.mxu0 0
    %3743 = vmatprep.subr.bf16.mxu0 0
    %3744 = vmatpush2.bf16.xpose.msra.mxu0 0
    %3745 = vmatprep.subr.bf16.mxu0 0
    %3746 = vmatpush2.bf16.xpose.msra.mxu0 0
    %3747 = vmatprep.subr.bf16.mxu0 0
    %3748 = vmatpush2.bf16.xpose.msra.mxu0 0
    %3749 = vmatprep.subr.bf16.mxu0 0
    %3750 = vmatpush2.bf16.xpose.msra.mxu0 0
    %3751 = vmatprep.subr.bf16.mxu0 0
    %3752 = vmatpush2.bf16.xpose.msra.mxu0 0
    %3753 = vmatprep.subr.bf16.mxu0 0
    %3754 = vmatpush2.bf16.xpose.msra.mxu0 0
    %3755 = vmatprep.subr.bf16.mxu0 0
    %3756 = vmatpush2.bf16.xpose.msra.mxu0 0
    %3757 = vmatprep.mubr.bf16.mxu0 %v135
    %3758 = vmatmul.mubr.bf16.gmra.mxu0 %v134
    %v3759 = vpop.f32.mrf.mxu0
    %v3760 = vadd.f32 %v3720, %v3759
    %v3761 = vpop.f32.mrf.mxu0
    %v3762 = vpop.f32.mrf.mxu0
    %v3763 = vpop.f32.mrf.mxu0
    %3764 = vdwg.mxu0
    %3765 = vmatprep.subr.bf16.mxu0 0
    %3766 = vmatpush1.bf16.xpose.msra.mxu0 0
    %3767 = vmatprep.subr.bf16.mxu0 0
    %3768 = vmatpush1.bf16.xpose.msra.mxu0 0
    %3769 = vmatprep.subr.bf16.mxu0 0
    %3770 = vmatpush1.bf16.xpose.msra.mxu0 0
    %3771 = vmatprep.subr.bf16.mxu0 0
    %3772 = vmatpush1.bf16.xpose.msra.mxu0 0
    %3773 = vmatprep.subr.bf16.mxu0 0
    %3774 = vmatpush1.bf16.xpose.msra.mxu0 0
    %3775 = vmatprep.subr.bf16.mxu0 0
    %3776 = vmatpush1.bf16.xpose.msra.mxu0 0
    %3777 = vmatprep.subr.bf16.mxu0 0
    %3778 = vmatpush1.bf16.xpose.msra.mxu0 0
    %3779 = vmatprep.subr.bf16.mxu0 %v3528
    %3780 = vmatpush1.bf16.xpose.msra.mxu0 %v3527
    %3781 = vmatprep.subr.bf16.mxu0 0
    %3782 = vmatpush2.bf16.xpose.msra.mxu0 0
    %3783 = vmatprep.subr.bf16.mxu0 0
    %3784 = vmatpush2.bf16.xpose.msra.mxu0 0
    %3785 = vmatprep.subr.bf16.mxu0 0
    %3786 = vmatpush2.bf16.xpose.msra.mxu0 0
    %3787 = vmatprep.subr.bf16.mxu0 0
    %3788 = vmatpush2.bf16.xpose.msra.mxu0 0
    %3789 = vmatprep.subr.bf16.mxu0 0
    %3790 = vmatpush2.bf16.xpose.msra.mxu0 0
    %3791 = vmatprep.subr.bf16.mxu0 0
    %3792 = vmatpush2.bf16.xpose.msra.mxu0 0
    %3793 = vmatprep.subr.bf16.mxu0 0
    %3794 = vmatpush2.bf16.xpose.msra.mxu0 0
    %3795 = vmatprep.subr.bf16.mxu0 0
    %3796 = vmatpush2.bf16.xpose.msra.mxu0 0
    %3797 = vmatprep.mubr.bf16.mxu0 %v137
    %3798 = vmatmul.mubr.bf16.gmra.mxu0 %v136
    %v3799 = vpop.f32.mrf.mxu0
    %v3800 = vadd.f32 %v3760, %v3799
    %v3801 = vpop.f32.mrf.mxu0
    %v3802 = vpop.f32.mrf.mxu0
    %v3803 = vpop.f32.mrf.mxu0
    %3804 = vdwg.mxu0
    %3805 = vmatprep.subr.bf16.mxu0 0
    %3806 = vmatpush1.bf16.xpose.msra.mxu0 0
    %3807 = vmatprep.subr.bf16.mxu0 0
    %3808 = vmatpush1.bf16.xpose.msra.mxu0 0
    %3809 = vmatprep.subr.bf16.mxu0 0
    %3810 = vmatpush1.bf16.xpose.msra.mxu0 0
    %3811 = vmatprep.subr.bf16.mxu0 0
    %3812 = vmatpush1.bf16.xpose.msra.mxu0 0
    %3813 = vmatprep.subr.bf16.mxu0 0
    %3814 = vmatpush1.bf16.xpose.msra.mxu0 0
    %3815 = vmatprep.subr.bf16.mxu0 0
    %3816 = vmatpush1.bf16.xpose.msra.mxu0 0
    %3817 = vmatprep.subr.bf16.mxu0 0
    %3818 = vmatpush1.bf16.xpose.msra.mxu0 0
    %3819 = vmatprep.subr.bf16.mxu0 %v3530
    %3820 = vmatpush1.bf16.xpose.msra.mxu0 %v3529
    %3821 = vmatprep.subr.bf16.mxu0 0
    %3822 = vmatpush2.bf16.xpose.msra.mxu0 0
    %3823 = vmatprep.subr.bf16.mxu0 0
    %3824 = vmatpush2.bf16.xpose.msra.mxu0 0
    %3825 = vmatprep.subr.bf16.mxu0 0
    %3826 = vmatpush2.bf16.xpose.msra.mxu0 0
    %3827 = vmatprep.subr.bf16.mxu0 0
    %3828 = vmatpush2.bf16.xpose.msra.mxu0 0
    %3829 = vmatprep.subr.bf16.mxu0 0
    %3830 = vmatpush2.bf16.xpose.msra.mxu0 0
    %3831 = vmatprep.subr.bf16.mxu0 0
    %3832 = vmatpush2.bf16.xpose.msra.mxu0 0
    %3833 = vmatprep.subr.bf16.mxu0 0
    %3834 = vmatpush2.bf16.xpose.msra.mxu0 0
    %3835 = vmatprep.subr.bf16.mxu0 0
    %3836 = vmatpush2.bf16.xpose.msra.mxu0 0
    %3837 = vmatprep.mubr.bf16.mxu0 %v139
    %3838 = vmatmul.mubr.bf16.gmra.mxu0 %v138
    %v3839 = vpop.f32.mrf.mxu0
    %v3840 = vadd.f32 %v3800, %v3839
    %v3841 = vpop.f32.mrf.mxu0
    %v3842 = vpop.f32.mrf.mxu0
    %v3843 = vpop.f32.mrf.mxu0
    %3844 = vdwg.mxu0
    %3845 = vmatprep.subr.bf16.mxu0 0
    %3846 = vmatpush1.bf16.xpose.msra.mxu0 0
    %3847 = vmatprep.subr.bf16.mxu0 0
    %3848 = vmatpush1.bf16.xpose.msra.mxu0 0
    %3849 = vmatprep.subr.bf16.mxu0 0
    %3850 = vmatpush1.bf16.xpose.msra.mxu0 0
    %3851 = vmatprep.subr.bf16.mxu0 0
    %3852 = vmatpush1.bf16.xpose.msra.mxu0 0
    %3853 = vmatprep.subr.bf16.mxu0 0
    %3854 = vmatpush1.bf16.xpose.msra.mxu0 0
    %3855 = vmatprep.subr.bf16.mxu0 0
    %3856 = vmatpush1.bf16.xpose.msra.mxu0 0
    %3857 = vmatprep.subr.bf16.mxu0 0
    %3858 = vmatpush1.bf16.xpose.msra.mxu0 0
    %3859 = vmatprep.subr.bf16.mxu0 %v3532
    %3860 = vmatpush1.bf16.xpose.msra.mxu0 %v3531
    %3861 = vmatprep.subr.bf16.mxu0 0
    %3862 = vmatpush2.bf16.xpose.msra.mxu0 0
    %3863 = vmatprep.subr.bf16.mxu0 0
    %3864 = vmatpush2.bf16.xpose.msra.mxu0 0
    %3865 = vmatprep.subr.bf16.mxu0 0
    %3866 = vmatpush2.bf16.xpose.msra.mxu0 0
    %3867 = vmatprep.subr.bf16.mxu0 0
    %3868 = vmatpush2.bf16.xpose.msra.mxu0 0
    %3869 = vmatprep.subr.bf16.mxu0 0
    %3870 = vmatpush2.bf16.xpose.msra.mxu0 0
    %3871 = vmatprep.subr.bf16.mxu0 0
    %3872 = vmatpush2.bf16.xpose.msra.mxu0 0
    %3873 = vmatprep.subr.bf16.mxu0 0
    %3874 = vmatpush2.bf16.xpose.msra.mxu0 0
    %3875 = vmatprep.subr.bf16.mxu0 0
    %3876 = vmatpush2.bf16.xpose.msra.mxu0 0
    %3877 = vmatprep.mubr.bf16.mxu0 %v141
    %3878 = vmatmul.mubr.bf16.gmra.mxu0 %v140
    %v3879 = vpop.f32.mrf.mxu0
    %v3880 = vadd.f32 %v3840, %v3879
    %v3881 = vpop.f32.mrf.mxu0
    %v3882 = vpop.f32.mrf.mxu0
    %v3883 = vpop.f32.mrf.mxu0
    %3884 = vdwg.mxu0
    %3885 = vmatprep.subr.bf16.mxu0 0
    %3886 = vmatpush1.bf16.xpose.msra.mxu0 0
    %3887 = vmatprep.subr.bf16.mxu0 0
    %3888 = vmatpush1.bf16.xpose.msra.mxu0 0
    %3889 = vmatprep.subr.bf16.mxu0 0
    %3890 = vmatpush1.bf16.xpose.msra.mxu0 0
    %3891 = vmatprep.subr.bf16.mxu0 0
    %3892 = vmatpush1.bf16.xpose.msra.mxu0 0
    %3893 = vmatprep.subr.bf16.mxu0 0
    %3894 = vmatpush1.bf16.xpose.msra.mxu0 0
    %3895 = vmatprep.subr.bf16.mxu0 0
    %3896 = vmatpush1.bf16.xpose.msra.mxu0 0
    %3897 = vmatprep.subr.bf16.mxu0 0
    %3898 = vmatpush1.bf16.xpose.msra.mxu0 0
    %3899 = vmatprep.subr.bf16.mxu0 %v3534
    %3900 = vmatpush1.bf16.xpose.msra.mxu0 %v3533
    %3901 = vmatprep.subr.bf16.mxu0 0
    %3902 = vmatpush2.bf16.xpose.msra.mxu0 0
    %3903 = vmatprep.subr.bf16.mxu0 0
    %3904 = vmatpush2.bf16.xpose.msra.mxu0 0
    %3905 = vmatprep.subr.bf16.mxu0 0
    %3906 = vmatpush2.bf16.xpose.msra.mxu0 0
    %3907 = vmatprep.subr.bf16.mxu0 0
    %3908 = vmatpush2.bf16.xpose.msra.mxu0 0
    %3909 = vmatprep.subr.bf16.mxu0 0
    %3910 = vmatpush2.bf16.xpose.msra.mxu0 0
    %3911 = vmatprep.subr.bf16.mxu0 0
    %3912 = vmatpush2.bf16.xpose.msra.mxu0 0
    %3913 = vmatprep.subr.bf16.mxu0 0
    %3914 = vmatpush2.bf16.xpose.msra.mxu0 0
    %3915 = vmatprep.subr.bf16.mxu0 0
    %3916 = vmatpush2.bf16.xpose.msra.mxu0 0
    %3917 = vmatprep.mubr.bf16.mxu0 %v3455
    %3918 = vmatmul.mubr.bf16.gmra.mxu0 %v3454
    %v3919 = vpop.f32.mrf.mxu0
    %v3920 = vadd.f32 %v3880, %v3919
    %v3921 = vpop.f32.mrf.mxu0
    %v3922 = vpop.f32.mrf.mxu0
    %v3923 = vpop.f32.mrf.mxu0
    %3924 = vdwg.mxu0
    %3925 = vmatprep.subr.bf16.mxu0 0
    %3926 = vmatpush1.bf16.xpose.msra.mxu0 0
    %3927 = vmatprep.subr.bf16.mxu0 0
    %3928 = vmatpush1.bf16.xpose.msra.mxu0 0
    %3929 = vmatprep.subr.bf16.mxu0 0
    %3930 = vmatpush1.bf16.xpose.msra.mxu0 0
    %3931 = vmatprep.subr.bf16.mxu0 0
    %3932 = vmatpush1.bf16.xpose.msra.mxu0 0
    %3933 = vmatprep.subr.bf16.mxu0 0
    %3934 = vmatpush1.bf16.xpose.msra.mxu0 0
    %3935 = vmatprep.subr.bf16.mxu0 0
    %3936 = vmatpush1.bf16.xpose.msra.mxu0 0
    %3937 = vmatprep.subr.bf16.mxu0 0
    %3938 = vmatpush1.bf16.xpose.msra.mxu0 0
    %3939 = vmatprep.subr.bf16.mxu0 %v3536
    %3940 = vmatpush1.bf16.xpose.msra.mxu0 %v3535
    %3941 = vmatprep.subr.bf16.mxu0 0
    %3942 = vmatpush2.bf16.xpose.msra.mxu0 0
    %3943 = vmatprep.subr.bf16.mxu0 0
    %3944 = vmatpush2.bf16.xpose.msra.mxu0 0
    %3945 = vmatprep.subr.bf16.mxu0 0
    %3946 = vmatpush2.bf16.xpose.msra.mxu0 0
    %3947 = vmatprep.subr.bf16.mxu0 0
    %3948 = vmatpush2.bf16.xpose.msra.mxu0 0
    %3949 = vmatprep.subr.bf16.mxu0 0
    %3950 = vmatpush2.bf16.xpose.msra.mxu0 0
    %3951 = vmatprep.subr.bf16.mxu0 0
    %3952 = vmatpush2.bf16.xpose.msra.mxu0 0
    %3953 = vmatprep.subr.bf16.mxu0 0
    %3954 = vmatpush2.bf16.xpose.msra.mxu0 0
    %3955 = vmatprep.subr.bf16.mxu0 0
    %3956 = vmatpush2.bf16.xpose.msra.mxu0 0
    %3957 = vmatprep.mubr.bf16.mxu0 %v3457
    %3958 = vmatmul.mubr.bf16.gmra.mxu0 %v3456
    %v3959 = vpop.f32.mrf.mxu0
    %v3960 = vadd.f32 %v3920, %v3959
    %v3961 = vpop.f32.mrf.mxu0
    %v3962 = vpop.f32.mrf.mxu0
    %v3963 = vpop.f32.mrf.mxu0
    %3964 = vdwg.mxu0
    %3965 = vmatprep.subr.bf16.mxu0 0
    %3966 = vmatpush1.bf16.xpose.msra.mxu0 0
    %3967 = vmatprep.subr.bf16.mxu0 0
    %3968 = vmatpush1.bf16.xpose.msra.mxu0 0
    %3969 = vmatprep.subr.bf16.mxu0 0
    %3970 = vmatpush1.bf16.xpose.msra.mxu0 0
    %3971 = vmatprep.subr.bf16.mxu0 0
    %3972 = vmatpush1.bf16.xpose.msra.mxu0 0
    %3973 = vmatprep.subr.bf16.mxu0 0
    %3974 = vmatpush1.bf16.xpose.msra.mxu0 0
    %3975 = vmatprep.subr.bf16.mxu0 0
    %3976 = vmatpush1.bf16.xpose.msra.mxu0 0
    %3977 = vmatprep.subr.bf16.mxu0 0
    %3978 = vmatpush1.bf16.xpose.msra.mxu0 0
    %3979 = vmatprep.subr.bf16.mxu0 %v3538
    %3980 = vmatpush1.bf16.xpose.msra.mxu0 %v3537
    %3981 = vmatprep.subr.bf16.mxu0 0
    %3982 = vmatpush2.bf16.xpose.msra.mxu0 0
    %3983 = vmatprep.subr.bf16.mxu0 0
    %3984 = vmatpush2.bf16.xpose.msra.mxu0 0
    %3985 = vmatprep.subr.bf16.mxu0 0
    %3986 = vmatpush2.bf16.xpose.msra.mxu0 0
    %3987 = vmatprep.subr.bf16.mxu0 0
    %3988 = vmatpush2.bf16.xpose.msra.mxu0 0
    %3989 = vmatprep.subr.bf16.mxu0 0
    %3990 = vmatpush2.bf16.xpose.msra.mxu0 0
    %3991 = vmatprep.subr.bf16.mxu0 0
    %3992 = vmatpush2.bf16.xpose.msra.mxu0 0
    %3993 = vmatprep.subr.bf16.mxu0 0
    %3994 = vmatpush2.bf16.xpose.msra.mxu0 0
    %3995 = vmatprep.subr.bf16.mxu0 0
    %3996 = vmatpush2.bf16.xpose.msra.mxu0 0
    %3997 = vmatprep.mubr.bf16.mxu0 %v3459
    %3998 = vmatmul.mubr.bf16.gmra.mxu0 %v3458
    %v3999 = vpop.f32.mrf.mxu0
    %v4000 = vadd.f32 %v3960, %v3999
    %v4001 = vpop.f32.mrf.mxu0
    %v4002 = vpop.f32.mrf.mxu0
    %v4003 = vpop.f32.mrf.mxu0
    %4004 = vdwg.mxu0
    %4005 = vmatprep.subr.bf16.mxu0 0
    %4006 = vmatpush1.bf16.xpose.msra.mxu0 0
    %4007 = vmatprep.subr.bf16.mxu0 0
    %4008 = vmatpush1.bf16.xpose.msra.mxu0 0
    %4009 = vmatprep.subr.bf16.mxu0 0
    %4010 = vmatpush1.bf16.xpose.msra.mxu0 0
    %4011 = vmatprep.subr.bf16.mxu0 0
    %4012 = vmatpush1.bf16.xpose.msra.mxu0 0
    %4013 = vmatprep.subr.bf16.mxu0 0
    %4014 = vmatpush1.bf16.xpose.msra.mxu0 0
    %4015 = vmatprep.subr.bf16.mxu0 0
    %4016 = vmatpush1.bf16.xpose.msra.mxu0 0
    %4017 = vmatprep.subr.bf16.mxu0 0
    %4018 = vmatpush1.bf16.xpose.msra.mxu0 0
    %4019 = vmatprep.subr.bf16.mxu0 %v3540
    %4020 = vmatpush1.bf16.xpose.msra.mxu0 %v3539
    %4021 = vmatprep.subr.bf16.mxu0 0
    %4022 = vmatpush2.bf16.xpose.msra.mxu0 0
    %4023 = vmatprep.subr.bf16.mxu0 0
    %4024 = vmatpush2.bf16.xpose.msra.mxu0 0
    %4025 = vmatprep.subr.bf16.mxu0 0
    %4026 = vmatpush2.bf16.xpose.msra.mxu0 0
    %4027 = vmatprep.subr.bf16.mxu0 0
    %4028 = vmatpush2.bf16.xpose.msra.mxu0 0
    %4029 = vmatprep.subr.bf16.mxu0 0
    %4030 = vmatpush2.bf16.xpose.msra.mxu0 0
    %4031 = vmatprep.subr.bf16.mxu0 0
    %4032 = vmatpush2.bf16.xpose.msra.mxu0 0
    %4033 = vmatprep.subr.bf16.mxu0 0
    %4034 = vmatpush2.bf16.xpose.msra.mxu0 0
    %4035 = vmatprep.subr.bf16.mxu0 0
    %4036 = vmatpush2.bf16.xpose.msra.mxu0 0
    %4037 = vmatprep.mubr.bf16.mxu0 %v3461
    %4038 = vmatmul.mubr.bf16.gmra.mxu0 %v3460
    %v4039 = vpop.f32.mrf.mxu0
    %v4040 = vadd.f32 %v4000, %v4039
    %v4041 = vpop.f32.mrf.mxu0
    %v4042 = vpop.f32.mrf.mxu0
    %v4043 = vpop.f32.mrf.mxu0
    %4044 = vdwg.mxu0
    %4045 = vst.msk [vmem:[%s7] sm:$0xff] %vm3139, %v4040
    // Predicated region
    $region58: #{adapter_v1_forward.1} parent=1 // pred_check
      _
    $region59: #{adapter_v1_forward.1} parent=1 // pred_check_branch
      %4047 = sbr.rel (0) target = $region61
    $region60: #{adapter_v1_forward.1} parent=1 // pred_region
      _
    $region61: #{adapter_v1_forward.1} parent=1 // pred_fallthru
      _
    // Predicated region
    $region62: #{adapter_v1_forward.1} parent=1 // pred_check
      _
    $region63: #{adapter_v1_forward.1} parent=1 // pred_check_branch
      %4049 = sbr.rel (0) target = $region65
    $region64: #{adapter_v1_forward.1} parent=1 // pred_region
      _
    $region65: #{adapter_v1_forward.1} parent=1 // pred_fallthru
      _
    %4050 = vsyncpa [#allocation3], 1
    %4051 = vsyncpa [#allocation5], 1
    %4052 = vsyncpa [#allocation8], 1
    %4053 = vsyncpa [#allocation11], 1

</llo_original>
